<compile_context>
chip_gen: v5e
topology: v5e:2x2
jax: 0.10.0
libtpu: 0.0.40
codegen_flags: <defaults>
</compile_context>

<pallas_src>
import numpy as np
import jax
import jax.numpy as jnp
from jax import lax
from jax.experimental import pallas as pl
from jax.experimental.pallas import tpu as pltpu

PAD = 2        # Conv2d(padding=2)
KH = KW = 2    # kernel_size=2
SUB = 8        # f32 sublane tile
TAPS = ((0, 0), (0, 1), (1, 0), (1, 1))   # (kh, kw) order == weight reshape order


def _round_up(x, m):
    return (x + m - 1) // m * m


def _block_schedule(h, w, cin, cout):
    hp, wp = h + 2 * PAD, w + 2 * PAD        # padded input
    ho, wo = hp - KH + 1, wp - KW + 1        # conv output
    hq, wq = ho // 2, wo // 2                # pooled output (floor mode)
    hc, wc = 2 * hq, 2 * wq                  # conv rows/cols the pool actually uses
    wcp = _round_up(wc, SUB)                 # sublane-aligned slab width (slack cols = zeros)
    hbuf = hp
    wbuf = max(wp, wcp + KW - 1)             # padded-buffer width (slack cols stay zero)
    return dict(hin=h, win=w, cin=cin, cout=cout, hq=hq, wq=wq,
                hc=hc, wc=wc, wcp=wcp, hbuf=hbuf, wbuf=wbuf)


def make_backbone_kernel(sched, b_tile):
    nb = len(sched)

    def kernel(*refs):
        x_ref = refs[0]
        w_refs = [refs[1 + 2 * i] for i in range(nb)]
        b_refs = [refs[2 + 2 * i] for i in range(nb)]
        o_ref = refs[1 + 2 * nb]
        pad_refs = refs[2 + 2 * nb: 2 + 3 * nb]
        pool_refs = refs[2 + 3 * nb: 2 + 4 * nb]

        act = x_ref[...]                                    # (B, H0, W0, 1) f32

        for i, s in enumerate(sched):
            pad, pool = pad_refs[i], pool_refs[i]
            hin, win, cin, cout = s["hin"], s["win"], s["cin"], s["cout"]
            hq, wq, hc, wcp = s["hq"], s["wq"], s["hc"], s["wcp"]

            # zero-padded input lives in VMEM scratch (re-zeroed each step: safe
            # under megacore grid splitting, costs only a few vreg stores).
            pad[...] = jnp.zeros_like(pad)
            pad[:, PAD:PAD + hin, PAD:PAD + win, :] = act

            if cin == 1:
                # Block 1: 2x2 conv as 4 shifted broadcast MACs on the VPU.
                # slab (B,hc,wcp,1) * w_tap (1,cout) -> (B,hc,wcp,cout); no
                # width-1 lane concat, no under-filled K=4 matmul.
                y = None
                for t, (kh, kw) in enumerate(TAPS):
                    slab = pad[:, kh:kh + hc, kw:kw + wcp, :]        # f32
                    contrib = slab * w_refs[i][t]                    # (1,cout) f32
                    y = contrib if y is None else y + contrib
            else:
                # Blocks 2-3: per-tap accumulating matmuls, bf16 operands,
                # f32 accumulation.  (B,hc,wcp,cin)->(B*hc*wcp,cin) is a free
                # reshape because wcp % 8 == 0.
                acc = None
                for t, (kh, kw) in enumerate(TAPS):
                    slab = pad[:, kh:kh + hc, kw:kw + wcp, :].reshape(
                        b_tile * hc * wcp, cin).astype(jnp.bfloat16)
                    contrib = jnp.dot(slab, w_refs[i][t],            # (cin,cout) bf16
                                      preferred_element_type=jnp.float32)
                    acc = contrib if acc is None else acc + contrib
                y = acc.reshape(b_tile, hc, wcp, cout)

            y = jnp.maximum(y + b_refs[i][...], 0.0)                 # bias + ReLU, f32

            # 2x2 / stride-2 max-pool (floor mode, like MaxPool2d(2,2)):
            # H-pool via sublane-aligned unfold, W-pool via stride-2 ref loads.
            y = y.reshape(b_tile, hq, 2, wcp, cout)
            pool[...] = jnp.maximum(y[:, :, 0], y[:, :, 1])          # (B, hq, wcp, cout)
            act = jnp.maximum(
                pool[:, :, pl.ds(0, wq, stride=2), :],
                pool[:, :, pl.ds(1, wq, stride=2), :],
            )                                                        # (B, hq, wq, cout)

        o_ref[...] = act                                             # one bulk store per tile

    return kernel


def classical_backbone(x_nchw, params, *, batch_tile=1):
    """Forward pass matching ClassicalBackbone.forward.
    x_nchw: (N, 1, H, W) f32; params: list of (w_hwio (2,2,Cin,Cout), b (Cout,))."""
    n, c0, h0, w0 = x_nchw.shape
    assert c0 == 1 and n % batch_tile == 0
    x = jnp.transpose(x_nchw, (0, 2, 3, 1)).astype(jnp.float32)      # NHWC, C=1

    sched, flat = [], []
    in_specs = [pl.BlockSpec((batch_tile, h0, w0, 1), lambda nn: (nn, 0, 0, 0))]
    pad_scratch, pool_scratch = [], []
    h, w, cin = h0, w0, 1
    for wt, bs in params:
        kh, kw, ci, cout = wt.shape
        assert (kh, kw, ci) == (KH, KW, cin)
        s = _block_schedule(h, w, cin, cout)
        sched.append(s)
        # per-tap weights (KH*KW, cin, cout): f32 for the cin==1 VPU block,
        # bf16 for the MXU blocks (f32 accumulation in-kernel).
        wdt = jnp.float32 if cin == 1 else jnp.bfloat16
        wm = jnp.asarray(wt, jnp.float32).reshape(KH * KW, cin, cout).astype(wdt)
        bm = jnp.asarray(bs, jnp.float32).reshape(1, cout)
        flat += [wm, bm]
        in_specs += [pl.BlockSpec(wm.shape, lambda nn: (0, 0, 0)),
                     pl.BlockSpec(bm.shape, lambda nn: (0, 0))]
        pad_scratch.append(
            pltpu.VMEM((batch_tile, s["hbuf"], s["wbuf"], cin), jnp.float32))
        pool_scratch.append(
            pltpu.VMEM((batch_tile, s["hq"], s["wcp"], cout), jnp.float32))
        h, w, cin = s["hq"], s["wq"], cout

    hq, wq, cq = h, w, cin
    out = pl.pallas_call(
        make_backbone_kernel(sched, batch_tile),
        out_shape=jax.ShapeDtypeStruct((n, hq, wq, cq), jnp.float32),
        grid_spec=pltpu.PrefetchScalarGridSpec(
            num_scalar_prefetch=0,
            grid=(n // batch_tile,),                   # >=2 steps at batch_tile=1, n=2
            in_specs=in_specs,
            out_specs=pl.BlockSpec((batch_tile, hq, wq, cq),
                                   lambda nn: (nn, 0, 0, 0)),
            scratch_shapes=pad_scratch + pool_scratch,
        ),
        compiler_params=pltpu.CompilerParams(
            dimension_semantics=("parallel",)),        # feed both TCs on v7x
    )(x, *flat)

    return jnp.transpose(out, (0, 3, 1, 2))            # NHWC -> NCHW (tiny host-side op)


# ----------------------- pure-JAX reference (sanity check) -----------------------
def reference_backbone(x_nchw, params):
    x = jnp.transpose(x_nchw, (0, 2, 3, 1))
    for wt, bs in params:
        y = lax.conv_general_dilated(
            x, wt, window_strides=(1, 1), padding=[(PAD, PAD), (PAD, PAD)],
            dimension_numbers=("NHWC", "HWIO", "NHWC"),
            precision=lax.Precision.HIGHEST)
        y = jnp.maximum(y + bs, 0.0)
        y = lax.reduce_window(y, -jnp.inf, lax.max,
                              (1, 2, 2, 1), (1, 2, 2, 1), "VALID")
        x = y
    return jnp.transpose(x, (0, 3, 1, 2))


def init_conv(key, cin, cout, k=2):
    # deterministic synthetic init (PyTorch-like uniform bounds); HWIO layout
    kw_key, kb_key = jax.random.split(key)
    bound = 1.0 / float(np.sqrt(cin * k * k))
    wt = jax.random.uniform(kw_key, (k, k, cin, cout), jnp.float32, -bound, bound)
    bs = jax.random.uniform(kb_key, (cout,), jnp.float32, -bound, bound)
    return wt, bs


if __name__ == "__main__":
    key = jax.random.PRNGKey(0)
    kx, k1, k2, k3 = jax.random.split(key, 4)

    # Input shaped like the PyTorch module expects: (N, 1, H, W)
    x = jax.random.normal(kx, (2, 1, 16, 16), jnp.float32)

    params = [
        init_conv(k1, 1, 32),    # conv_block(1, 32)
        init_conv(k2, 32, 64),   # conv_block(32, 64)
        init_conv(k3, 64, 2),    # conv_block(64, out_channels=2)
    ]

    ref = jax.block_until_ready(reference_backbone(x, params))

    # batch_tile=1: grid=(2,) "parallel" -> both v7x TensorCores busy.
    out = jax.block_until_ready(classical_backbone(x, params, batch_tile=1))
    assert out.shape == (2, 2, 4, 4), out.shape
    np.testing.assert_allclose(np.asarray(out), np.asarray(ref), rtol=2e-2, atol=2e-2)

    # batch_tile=2: folds both images into the matmul M dimension (the big-batch path).
    out2 = jax.block_until_ready(classical_backbone(x, params, batch_tile=2))
    np.testing.assert_allclose(np.asarray(out2), np.asarray(ref), rtol=2e-2, atol=2e-2)

    print("KERNEL_OK")
</pallas_src>

<mosaic_0001>
module attributes {stable_mosaic.version = 11 : i64} {
  func.func @kernel(%arg0: i32, %arg1: memref<1x16x16x1xf32, #tpu.memory_space<vmem>>, %arg2: memref<4x1x32xf32, #tpu.memory_space<vmem>>, %arg3: memref<1x32xf32, #tpu.memory_space<vmem>>, %arg4: memref<4x32x64xbf16, #tpu.memory_space<vmem>>, %arg5: memref<1x64xf32, #tpu.memory_space<vmem>>, %arg6: memref<4x64x2xbf16, #tpu.memory_space<vmem>>, %arg7: memref<1x2xf32, #tpu.memory_space<vmem>>, %arg8: memref<1x4x4x2xf32, #tpu.memory_space<vmem>>, %arg9: memref<1x20x25x1xf32, #tpu.memory_space<vmem>>, %arg10: memref<1x13x17x32xf32, #tpu.memory_space<vmem>>, %arg11: memref<1x10x10x64xf32, #tpu.memory_space<vmem>>, %arg12: memref<1x9x24x32xf32, #tpu.memory_space<vmem>>, %arg13: memref<1x6x16x64xf32, #tpu.memory_space<vmem>>, %arg14: memref<1x4x8x2xf32, #tpu.memory_space<vmem>>) attributes {dimension_semantics = [#tpu.dimension_semantics<parallel>], iteration_bounds = array<i64: 2>, scalar_prefetch = 0 : i64, scratch_operands = 6 : i64, tpu.core_type = #tpu.core_type<tc>, window_params = [{transform_indices = @transform_0, window_bounds = array<i64: 1, 16, 16, 1>}, {pipeline_mode = #tpu.pipeline_mode<synchronous>, transform_indices = @transform_1, window_bounds = array<i64: 4, 1, 32>}, {pipeline_mode = #tpu.pipeline_mode<synchronous>, transform_indices = @transform_2, window_bounds = array<i64: 1, 32>}, {pipeline_mode = #tpu.pipeline_mode<synchronous>, transform_indices = @transform_3, window_bounds = array<i64: 4, 32, 64>}, {pipeline_mode = #tpu.pipeline_mode<synchronous>, transform_indices = @transform_4, window_bounds = array<i64: 1, 64>}, {pipeline_mode = #tpu.pipeline_mode<synchronous>, transform_indices = @transform_5, window_bounds = array<i64: 4, 64, 2>}, {pipeline_mode = #tpu.pipeline_mode<synchronous>, transform_indices = @transform_6, window_bounds = array<i64: 1, 2>}, {transform_indices = @transform_7, window_bounds = array<i64: 1, 4, 4, 2>}]} {
    %c0 = arith.constant 0 : index
    %c0_0 = arith.constant 0 : index
    %c0_1 = arith.constant 0 : index
    %c0_2 = arith.constant 0 : index
    %0 = vector.load %arg1[%c0, %c0_0, %c0_1, %c0_2] : memref<1x16x16x1xf32, #tpu.memory_space<vmem>>, vector<1x16x16x1xf32>
    %cst = arith.constant 0.000000e+00 : f32
    %1 = vector.broadcast %cst : f32 to vector<1x20x25x1xf32>
    %c0_3 = arith.constant 0 : index
    %c0_4 = arith.constant 0 : index
    %c0_5 = arith.constant 0 : index
    %c0_6 = arith.constant 0 : index
    %2 = vector.load %arg9[%c0_3, %c0_4, %c0_5, %c0_6] : memref<1x20x25x1xf32, #tpu.memory_space<vmem>>, vector<1x20x25x1xf32>
    tpu.vector_store %arg9[%c0_3, %c0_4, %c0_5, %c0_6], %1 {strides = array<i32>} : memref<1x20x25x1xf32, #tpu.memory_space<vmem>>, vector<1x20x25x1xf32>,
    %c0_7 = arith.constant 0 : index
    %c2 = arith.constant 2 : index
    %c2_8 = arith.constant 2 : index
    %c0_9 = arith.constant 0 : index
    %3 = vector.load %arg9[%c0_7, %c2, %c2_8, %c0_9] : memref<1x20x25x1xf32, #tpu.memory_space<vmem>>, vector<1x16x16x1xf32>
    tpu.vector_store %arg9[%c0_7, %c2, %c2_8, %c0_9], %0 {strides = array<i32>} : memref<1x20x25x1xf32, #tpu.memory_space<vmem>>, vector<1x16x16x1xf32>,
    %c0_10 = arith.constant 0 : index
    %c0_11 = arith.constant 0 : index
    %c0_12 = arith.constant 0 : index
    %c0_13 = arith.constant 0 : index
    %4 = vector.load %arg9[%c0_10, %c0_11, %c0_12, %c0_13] : memref<1x20x25x1xf32, #tpu.memory_space<vmem>>, vector<1x18x24x1xf32>
    %c0_14 = arith.constant 0 : index
    %c0_15 = arith.constant 0 : index
    %c0_16 = arith.constant 0 : index
    %5 = vector.load %arg2[%c0_14, %c0_15, %c0_16] : memref<4x1x32xf32, #tpu.memory_space<vmem>>, vector<1x1x32xf32>
    %6 = vector.shape_cast %5 : vector<1x1x32xf32> to vector<1x32xf32>
    %7 = vector.shape_cast %6 : vector<1x32xf32> to vector<1x1x1x32xf32>
    %8 = vector.broadcast %4 : vector<1x18x24x1xf32> to vector<1x18x24x32xf32>
    %9 = vector.broadcast %7 : vector<1x1x1x32xf32> to vector<1x18x24x32xf32>
    %10 = arith.mulf %8, %9 : vector<1x18x24x32xf32>
    %c0_17 = arith.constant 0 : index
    %c0_18 = arith.constant 0 : index
    %c1 = arith.constant 1 : index
    %c0_19 = arith.constant 0 : index
    %11 = vector.load %arg9[%c0_17, %c0_18, %c1, %c0_19] : memref<1x20x25x1xf32, #tpu.memory_space<vmem>>, vector<1x18x24x1xf32>
    %c1_20 = arith.constant 1 : index
    %c0_21 = arith.constant 0 : index
    %c0_22 = arith.constant 0 : index
    %12 = vector.load %arg2[%c1_20, %c0_21, %c0_22] : memref<4x1x32xf32, #tpu.memory_space<vmem>>, vector<1x1x32xf32>
    %13 = vector.shape_cast %12 : vector<1x1x32xf32> to vector<1x32xf32>
    %14 = vector.shape_cast %13 : vector<1x32xf32> to vector<1x1x1x32xf32>
    %15 = vector.broadcast %11 : vector<1x18x24x1xf32> to vector<1x18x24x32xf32>
    %16 = vector.broadcast %14 : vector<1x1x1x32xf32> to vector<1x18x24x32xf32>
    %17 = arith.mulf %15, %16 : vector<1x18x24x32xf32>
    %18 = arith.addf %10, %17 : vector<1x18x24x32xf32>
    %c0_23 = arith.constant 0 : index
    %c1_24 = arith.constant 1 : index
    %c0_25 = arith.constant 0 : index
    %c0_26 = arith.constant 0 : index
    %19 = vector.load %arg9[%c0_23, %c1_24, %c0_25, %c0_26] : memref<1x20x25x1xf32, #tpu.memory_space<vmem>>, vector<1x18x24x1xf32>
    %c2_27 = arith.constant 2 : index
    %c0_28 = arith.constant 0 : index
    %c0_29 = arith.constant 0 : index
    %20 = vector.load %arg2[%c2_27, %c0_28, %c0_29] : memref<4x1x32xf32, #tpu.memory_space<vmem>>, vector<1x1x32xf32>
    %21 = vector.shape_cast %20 : vector<1x1x32xf32> to vector<1x32xf32>
    %22 = vector.shape_cast %21 : vector<1x32xf32> to vector<1x1x1x32xf32>
    %23 = vector.broadcast %19 : vector<1x18x24x1xf32> to vector<1x18x24x32xf32>
    %24 = vector.broadcast %22 : vector<1x1x1x32xf32> to vector<1x18x24x32xf32>
    %25 = arith.mulf %23, %24 : vector<1x18x24x32xf32>
    %26 = arith.addf %18, %25 : vector<1x18x24x32xf32>
    %c0_30 = arith.constant 0 : index
    %c1_31 = arith.constant 1 : index
    %c1_32 = arith.constant 1 : index
    %c0_33 = arith.constant 0 : index
    %27 = vector.load %arg9[%c0_30, %c1_31, %c1_32, %c0_33] : memref<1x20x25x1xf32, #tpu.memory_space<vmem>>, vector<1x18x24x1xf32>
    %c3 = arith.constant 3 : index
    %c0_34 = arith.constant 0 : index
    %c0_35 = arith.constant 0 : index
    %28 = vector.load %arg2[%c3, %c0_34, %c0_35] : memref<4x1x32xf32, #tpu.memory_space<vmem>>, vector<1x1x32xf32>
    %29 = vector.shape_cast %28 : vector<1x1x32xf32> to vector<1x32xf32>
    %30 = vector.shape_cast %29 : vector<1x32xf32> to vector<1x1x1x32xf32>
    %31 = vector.broadcast %27 : vector<1x18x24x1xf32> to vector<1x18x24x32xf32>
    %32 = vector.broadcast %30 : vector<1x1x1x32xf32> to vector<1x18x24x32xf32>
    %33 = arith.mulf %31, %32 : vector<1x18x24x32xf32>
    %34 = arith.addf %26, %33 : vector<1x18x24x32xf32>
    %c0_36 = arith.constant 0 : index
    %c0_37 = arith.constant 0 : index
    %35 = vector.load %arg3[%c0_36, %c0_37] : memref<1x32xf32, #tpu.memory_space<vmem>>, vector<1x32xf32>
    %36 = vector.shape_cast %35 : vector<1x32xf32> to vector<1x1x1x32xf32>
    %37 = vector.broadcast %36 : vector<1x1x1x32xf32> to vector<1x18x24x32xf32>
    %38 = arith.addf %34, %37 : vector<1x18x24x32xf32>
    %cst_38 = arith.constant 0.000000e+00 : f32
    %39 = vector.broadcast %cst_38 : f32 to vector<1x18x24x32xf32>
    %40 = arith.maximumf %38, %39 : vector<1x18x24x32xf32>
    %41 = vector.shape_cast %40 : vector<1x18x24x32xf32> to vector<1x9x2x24x32xf32>
    %42 = vector.extract_strided_slice %41 {offsets = [0, 0, 0, 0, 0], sizes = [1, 9, 1, 24, 32], strides = [1, 1, 1, 1, 1]} : vector<1x9x2x24x32xf32> to vector<1x9x1x24x32xf32>
    %43 = vector.shape_cast %42 : vector<1x9x1x24x32xf32> to vector<1x9x24x32xf32>
    %44 = vector.extract_strided_slice %41 {offsets = [0, 0, 1, 0, 0], sizes = [1, 9, 1, 24, 32], strides = [1, 1, 1, 1, 1]} : vector<1x9x2x24x32xf32> to vector<1x9x1x24x32xf32>
    %45 = vector.shape_cast %44 : vector<1x9x1x24x32xf32> to vector<1x9x24x32xf32>
    %46 = arith.maximumf %43, %45 : vector<1x9x24x32xf32>
    %c0_39 = arith.constant 0 : index
    %c0_40 = arith.constant 0 : index
    %c0_41 = arith.constant 0 : index
    %c0_42 = arith.constant 0 : index
    %47 = vector.load %arg12[%c0_39, %c0_40, %c0_41, %c0_42] : memref<1x9x24x32xf32, #tpu.memory_space<vmem>>, vector<1x9x24x32xf32>
    tpu.vector_store %arg12[%c0_39, %c0_40, %c0_41, %c0_42], %46 {strides = array<i32>} : memref<1x9x24x32xf32, #tpu.memory_space<vmem>>, vector<1x9x24x32xf32>,
    %c0_43 = arith.constant 0 : index
    %c0_44 = arith.constant 0 : index
    %c0_45 = arith.constant 0 : index
    %c0_46 = arith.constant 0 : index
    %48 = tpu.strided_load %arg12[%c0_43, %c0_44, %c0_45, %c0_46] {strides = array<i32: 1, 1, 2, 1>} : memref<1x9x24x32xf32, #tpu.memory_space<vmem>>, vector<1x9x9x32xf32>
    %c0_47 = arith.constant 0 : index
    %c0_48 = arith.constant 0 : index
    %c1_49 = arith.constant 1 : index
    %c0_50 = arith.constant 0 : index
    %49 = tpu.strided_load %arg12[%c0_47, %c0_48, %c1_49, %c0_50] {strides = array<i32: 1, 1, 2, 1>} : memref<1x9x24x32xf32, #tpu.memory_space<vmem>>, vector<1x9x9x32xf32>
    %50 = arith.maximumf %48, %49 : vector<1x9x9x32xf32>
    %cst_51 = arith.constant 0.000000e+00 : f32
    %51 = vector.broadcast %cst_51 : f32 to vector<1x13x17x32xf32>
    %c0_52 = arith.constant 0 : index
    %c0_53 = arith.constant 0 : index
    %c0_54 = arith.constant 0 : index
    %c0_55 = arith.constant 0 : index
    %52 = vector.load %arg10[%c0_52, %c0_53, %c0_54, %c0_55] : memref<1x13x17x32xf32, #tpu.memory_space<vmem>>, vector<1x13x17x32xf32>
    tpu.vector_store %arg10[%c0_52, %c0_53, %c0_54, %c0_55], %51 {strides = array<i32>} : memref<1x13x17x32xf32, #tpu.memory_space<vmem>>, vector<1x13x17x32xf32>,
    %c0_56 = arith.constant 0 : index
    %c2_57 = arith.constant 2 : index
    %c2_58 = arith.constant 2 : index
    %c0_59 = arith.constant 0 : index
    %53 = vector.load %arg10[%c0_56, %c2_57, %c2_58, %c0_59] : memref<1x13x17x32xf32, #tpu.memory_space<vmem>>, vector<1x9x9x32xf32>
    tpu.vector_store %arg10[%c0_56, %c2_57, %c2_58, %c0_59], %50 {strides = array<i32>} : memref<1x13x17x32xf32, #tpu.memory_space<vmem>>, vector<1x9x9x32xf32>,
    %c0_60 = arith.constant 0 : index
    %c0_61 = arith.constant 0 : index
    %c0_62 = arith.constant 0 : index
    %c0_63 = arith.constant 0 : index
    %54 = vector.load %arg10[%c0_60, %c0_61, %c0_62, %c0_63] : memref<1x13x17x32xf32, #tpu.memory_space<vmem>>, vector<1x12x16x32xf32>
    %55 = vector.shape_cast %54 : vector<1x12x16x32xf32> to vector<192x32xf32>
    %56 = arith.truncf %55 : vector<192x32xf32> to vector<192x32xbf16>
    %c0_64 = arith.constant 0 : index
    %c0_65 = arith.constant 0 : index
    %c0_66 = arith.constant 0 : index
    %57 = vector.load %arg4[%c0_64, %c0_65, %c0_66] : memref<4x32x64xbf16, #tpu.memory_space<vmem>>, vector<1x32x64xbf16>
    %58 = vector.shape_cast %57 : vector<1x32x64xbf16> to vector<32x64xbf16>
    %cst_67 = arith.constant dense<0.000000e+00> : vector<192x64xf32>
    %59 = tpu.matmul %56, %58, %cst_67 {dimension_numbers = #tpu.dot_dimension_numbers<[1], [0], [0], [1], [0, 0, 1, 1], [], []>} : vector<192x32xbf16>, vector<32x64xbf16>, vector<192x64xf32> -> vector<192x64xf32>
    %c0_68 = arith.constant 0 : index
    %c0_69 = arith.constant 0 : index
    %c1_70 = arith.constant 1 : index
    %c0_71 = arith.constant 0 : index
    %60 = vector.load %arg10[%c0_68, %c0_69, %c1_70, %c0_71] : memref<1x13x17x32xf32, #tpu.memory_space<vmem>>, vector<1x12x16x32xf32>
    %61 = vector.shape_cast %60 : vector<1x12x16x32xf32> to vector<192x32xf32>
    %62 = arith.truncf %61 : vector<192x32xf32> to vector<192x32xbf16>
    %c1_72 = arith.constant 1 : index
    %c0_73 = arith.constant 0 : index
    %c0_74 = arith.constant 0 : index
    %63 = vector.load %arg4[%c1_72, %c0_73, %c0_74] : memref<4x32x64xbf16, #tpu.memory_space<vmem>>, vector<1x32x64xbf16>
    %64 = vector.shape_cast %63 : vector<1x32x64xbf16> to vector<32x64xbf16>
    %cst_75 = arith.constant dense<0.000000e+00> : vector<192x64xf32>
    %65 = tpu.matmul %62, %64, %cst_75 {dimension_numbers = #tpu.dot_dimension_numbers<[1], [0], [0], [1], [0, 0, 1, 1], [], []>} : vector<192x32xbf16>, vector<32x64xbf16>, vector<192x64xf32> -> vector<192x64xf32>
    %66 = arith.addf %59, %65 : vector<192x64xf32>
    %c0_76 = arith.constant 0 : index
    %c1_77 = arith.constant 1 : index
    %c0_78 = arith.constant 0 : index
    %c0_79 = arith.constant 0 : index
    %67 = vector.load %arg10[%c0_76, %c1_77, %c0_78, %c0_79] : memref<1x13x17x32xf32, #tpu.memory_space<vmem>>, vector<1x12x16x32xf32>
    %68 = vector.shape_cast %67 : vector<1x12x16x32xf32> to vector<192x32xf32>
    %69 = arith.truncf %68 : vector<192x32xf32> to vector<192x32xbf16>
    %c2_80 = arith.constant 2 : index
    %c0_81 = arith.constant 0 : index
    %c0_82 = arith.constant 0 : index
    %70 = vector.load %arg4[%c2_80, %c0_81, %c0_82] : memref<4x32x64xbf16, #tpu.memory_space<vmem>>, vector<1x32x64xbf16>
    %71 = vector.shape_cast %70 : vector<1x32x64xbf16> to vector<32x64xbf16>
    %cst_83 = arith.constant dense<0.000000e+00> : vector<192x64xf32>
    %72 = tpu.matmul %69, %71, %cst_83 {dimension_numbers = #tpu.dot_dimension_numbers<[1], [0], [0], [1], [0, 0, 1, 1], [], []>} : vector<192x32xbf16>, vector<32x64xbf16>, vector<192x64xf32> -> vector<192x64xf32>
    %73 = arith.addf %66, %72 : vector<192x64xf32>
    %c0_84 = arith.constant 0 : index
    %c1_85 = arith.constant 1 : index
    %c1_86 = arith.constant 1 : index
    %c0_87 = arith.constant 0 : index
    %74 = vector.load %arg10[%c0_84, %c1_85, %c1_86, %c0_87] : memref<1x13x17x32xf32, #tpu.memory_space<vmem>>, vector<1x12x16x32xf32>
    %75 = vector.shape_cast %74 : vector<1x12x16x32xf32> to vector<192x32xf32>
    %76 = arith.truncf %75 : vector<192x32xf32> to vector<192x32xbf16>
    %c3_88 = arith.constant 3 : index
    %c0_89 = arith.constant 0 : index
    %c0_90 = arith.constant 0 : index
    %77 = vector.load %arg4[%c3_88, %c0_89, %c0_90] : memref<4x32x64xbf16, #tpu.memory_space<vmem>>, vector<1x32x64xbf16>
    %78 = vector.shape_cast %77 : vector<1x32x64xbf16> to vector<32x64xbf16>
    %cst_91 = arith.constant dense<0.000000e+00> : vector<192x64xf32>
    %79 = tpu.matmul %76, %78, %cst_91 {dimension_numbers = #tpu.dot_dimension_numbers<[1], [0], [0], [1], [0, 0, 1, 1], [], []>} : vector<192x32xbf16>, vector<32x64xbf16>, vector<192x64xf32> -> vector<192x64xf32>
    %80 = arith.addf %73, %79 : vector<192x64xf32>
    %81 = vector.shape_cast %80 : vector<192x64xf32> to vector<1x12x16x64xf32>
    %c0_92 = arith.constant 0 : index
    %c0_93 = arith.constant 0 : index
    %82 = vector.load %arg5[%c0_92, %c0_93] : memref<1x64xf32, #tpu.memory_space<vmem>>, vector<1x64xf32>
    %83 = vector.shape_cast %82 : vector<1x64xf32> to vector<1x1x1x64xf32>
    %84 = vector.broadcast %83 : vector<1x1x1x64xf32> to vector<1x12x16x64xf32>
    %85 = arith.addf %81, %84 : vector<1x12x16x64xf32>
    %cst_94 = arith.constant 0.000000e+00 : f32
    %86 = vector.broadcast %cst_94 : f32 to vector<1x12x16x64xf32>
    %87 = arith.maximumf %85, %86 : vector<1x12x16x64xf32>
    %88 = vector.shape_cast %87 : vector<1x12x16x64xf32> to vector<1x6x2x16x64xf32>
    %89 = vector.extract_strided_slice %88 {offsets = [0, 0, 0, 0, 0], sizes = [1, 6, 1, 16, 64], strides = [1, 1, 1, 1, 1]} : vector<1x6x2x16x64xf32> to vector<1x6x1x16x64xf32>
    %90 = vector.shape_cast %89 : vector<1x6x1x16x64xf32> to vector<1x6x16x64xf32>
    %91 = vector.extract_strided_slice %88 {offsets = [0, 0, 1, 0, 0], sizes = [1, 6, 1, 16, 64], strides = [1, 1, 1, 1, 1]} : vector<1x6x2x16x64xf32> to vector<1x6x1x16x64xf32>
    %92 = vector.shape_cast %91 : vector<1x6x1x16x64xf32> to vector<1x6x16x64xf32>
    %93 = arith.maximumf %90, %92 : vector<1x6x16x64xf32>
    %c0_95 = arith.constant 0 : index
    %c0_96 = arith.constant 0 : index
    %c0_97 = arith.constant 0 : index
    %c0_98 = arith.constant 0 : index
    %94 = vector.load %arg13[%c0_95, %c0_96, %c0_97, %c0_98] : memref<1x6x16x64xf32, #tpu.memory_space<vmem>>, vector<1x6x16x64xf32>
    tpu.vector_store %arg13[%c0_95, %c0_96, %c0_97, %c0_98], %93 {strides = array<i32>} : memref<1x6x16x64xf32, #tpu.memory_space<vmem>>, vector<1x6x16x64xf32>,
    %c0_99 = arith.constant 0 : index
    %c0_100 = arith.constant 0 : index
    %c0_101 = arith.constant 0 : index
    %c0_102 = arith.constant 0 : index
    %95 = tpu.strided_load %arg13[%c0_99, %c0_100, %c0_101, %c0_102] {strides = array<i32: 1, 1, 2, 1>} : memref<1x6x16x64xf32, #tpu.memory_space<vmem>>, vector<1x6x6x64xf32>
    %c0_103 = arith.constant 0 : index
    %c0_104 = arith.constant 0 : index
    %c1_105 = arith.constant 1 : index
    %c0_106 = arith.constant 0 : index
    %96 = tpu.strided_load %arg13[%c0_103, %c0_104, %c1_105, %c0_106] {strides = array<i32: 1, 1, 2, 1>} : memref<1x6x16x64xf32, #tpu.memory_space<vmem>>, vector<1x6x6x64xf32>
    %97 = arith.maximumf %95, %96 : vector<1x6x6x64xf32>
    %cst_107 = arith.constant 0.000000e+00 : f32
    %98 = vector.broadcast %cst_107 : f32 to vector<1x10x10x64xf32>
    %c0_108 = arith.constant 0 : index
    %c0_109 = arith.constant 0 : index
    %c0_110 = arith.constant 0 : index
    %c0_111 = arith.constant 0 : index
    %99 = vector.load %arg11[%c0_108, %c0_109, %c0_110, %c0_111] : memref<1x10x10x64xf32, #tpu.memory_space<vmem>>, vector<1x10x10x64xf32>
    tpu.vector_store %arg11[%c0_108, %c0_109, %c0_110, %c0_111], %98 {strides = array<i32>} : memref<1x10x10x64xf32, #tpu.memory_space<vmem>>, vector<1x10x10x64xf32>,
    %c0_112 = arith.constant 0 : index
    %c2_113 = arith.constant 2 : index
    %c2_114 = arith.constant 2 : index
    %c0_115 = arith.constant 0 : index
    %100 = vector.load %arg11[%c0_112, %c2_113, %c2_114, %c0_115] : memref<1x10x10x64xf32, #tpu.memory_space<vmem>>, vector<1x6x6x64xf32>
    tpu.vector_store %arg11[%c0_112, %c2_113, %c2_114, %c0_115], %97 {strides = array<i32>} : memref<1x10x10x64xf32, #tpu.memory_space<vmem>>, vector<1x6x6x64xf32>,
    %c0_116 = arith.constant 0 : index
    %c0_117 = arith.constant 0 : index
    %c0_118 = arith.constant 0 : index
    %c0_119 = arith.constant 0 : index
    %101 = vector.load %arg11[%c0_116, %c0_117, %c0_118, %c0_119] : memref<1x10x10x64xf32, #tpu.memory_space<vmem>>, vector<1x8x8x64xf32>
    %102 = vector.shape_cast %101 : vector<1x8x8x64xf32> to vector<64x64xf32>
    %103 = arith.truncf %102 : vector<64x64xf32> to vector<64x64xbf16>
    %c0_120 = arith.constant 0 : index
    %c0_121 = arith.constant 0 : index
    %c0_122 = arith.constant 0 : index
    %104 = vector.load %arg6[%c0_120, %c0_121, %c0_122] : memref<4x64x2xbf16, #tpu.memory_space<vmem>>, vector<1x64x2xbf16>
    %105 = vector.shape_cast %104 : vector<1x64x2xbf16> to vector<64x2xbf16>
    %cst_123 = arith.constant dense<0.000000e+00> : vector<64x2xf32>
    %106 = tpu.matmul %103, %105, %cst_123 {dimension_numbers = #tpu.dot_dimension_numbers<[1], [0], [0], [1], [0, 0, 1, 1], [], []>} : vector<64x64xbf16>, vector<64x2xbf16>, vector<64x2xf32> -> vector<64x2xf32>
    %c0_124 = arith.constant 0 : index
    %c0_125 = arith.constant 0 : index
    %c1_126 = arith.constant 1 : index
    %c0_127 = arith.constant 0 : index
    %107 = vector.load %arg11[%c0_124, %c0_125, %c1_126, %c0_127] : memref<1x10x10x64xf32, #tpu.memory_space<vmem>>, vector<1x8x8x64xf32>
    %108 = vector.shape_cast %107 : vector<1x8x8x64xf32> to vector<64x64xf32>
    %109 = arith.truncf %108 : vector<64x64xf32> to vector<64x64xbf16>
    %c1_128 = arith.constant 1 : index
    %c0_129 = arith.constant 0 : index
    %c0_130 = arith.constant 0 : index
    %110 = vector.load %arg6[%c1_128, %c0_129, %c0_130] : memref<4x64x2xbf16, #tpu.memory_space<vmem>>, vector<1x64x2xbf16>
    %111 = vector.shape_cast %110 : vector<1x64x2xbf16> to vector<64x2xbf16>
    %cst_131 = arith.constant dense<0.000000e+00> : vector<64x2xf32>
    %112 = tpu.matmul %109, %111, %cst_131 {dimension_numbers = #tpu.dot_dimension_numbers<[1], [0], [0], [1], [0, 0, 1, 1], [], []>} : vector<64x64xbf16>, vector<64x2xbf16>, vector<64x2xf32> -> vector<64x2xf32>
    %113 = arith.addf %106, %112 : vector<64x2xf32>
    %c0_132 = arith.constant 0 : index
    %c1_133 = arith.constant 1 : index
    %c0_134 = arith.constant 0 : index
    %c0_135 = arith.constant 0 : index
    %114 = vector.load %arg11[%c0_132, %c1_133, %c0_134, %c0_135] : memref<1x10x10x64xf32, #tpu.memory_space<vmem>>, vector<1x8x8x64xf32>
    %115 = vector.shape_cast %114 : vector<1x8x8x64xf32> to vector<64x64xf32>
    %116 = arith.truncf %115 : vector<64x64xf32> to vector<64x64xbf16>
    %c2_136 = arith.constant 2 : index
    %c0_137 = arith.constant 0 : index
    %c0_138 = arith.constant 0 : index
    %117 = vector.load %arg6[%c2_136, %c0_137, %c0_138] : memref<4x64x2xbf16, #tpu.memory_space<vmem>>, vector<1x64x2xbf16>
    %118 = vector.shape_cast %117 : vector<1x64x2xbf16> to vector<64x2xbf16>
    %cst_139 = arith.constant dense<0.000000e+00> : vector<64x2xf32>
    %119 = tpu.matmul %116, %118, %cst_139 {dimension_numbers = #tpu.dot_dimension_numbers<[1], [0], [0], [1], [0, 0, 1, 1], [], []>} : vector<64x64xbf16>, vector<64x2xbf16>, vector<64x2xf32> -> vector<64x2xf32>
    %120 = arith.addf %113, %119 : vector<64x2xf32>
    %c0_140 = arith.constant 0 : index
    %c1_141 = arith.constant 1 : index
    %c1_142 = arith.constant 1 : index
    %c0_143 = arith.constant 0 : index
    %121 = vector.load %arg11[%c0_140, %c1_141, %c1_142, %c0_143] : memref<1x10x10x64xf32, #tpu.memory_space<vmem>>, vector<1x8x8x64xf32>
    %122 = vector.shape_cast %121 : vector<1x8x8x64xf32> to vector<64x64xf32>
    %123 = arith.truncf %122 : vector<64x64xf32> to vector<64x64xbf16>
    %c3_144 = arith.constant 3 : index
    %c0_145 = arith.constant 0 : index
    %c0_146 = arith.constant 0 : index
    %124 = vector.load %arg6[%c3_144, %c0_145, %c0_146] : memref<4x64x2xbf16, #tpu.memory_space<vmem>>, vector<1x64x2xbf16>
    %125 = vector.shape_cast %124 : vector<1x64x2xbf16> to vector<64x2xbf16>
    %cst_147 = arith.constant dense<0.000000e+00> : vector<64x2xf32>
    %126 = tpu.matmul %123, %125, %cst_147 {dimension_numbers = #tpu.dot_dimension_numbers<[1], [0], [0], [1], [0, 0, 1, 1], [], []>} : vector<64x64xbf16>, vector<64x2xbf16>, vector<64x2xf32> -> vector<64x2xf32>
    %127 = arith.addf %120, %126 : vector<64x2xf32>
    %128 = vector.shape_cast %127 : vector<64x2xf32> to vector<1x8x8x2xf32>
    %c0_148 = arith.constant 0 : index
    %c0_149 = arith.constant 0 : index
    %129 = vector.load %arg7[%c0_148, %c0_149] : memref<1x2xf32, #tpu.memory_space<vmem>>, vector<1x2xf32>
    %130 = vector.shape_cast %129 : vector<1x2xf32> to vector<1x1x1x2xf32>
    %131 = vector.broadcast %130 : vector<1x1x1x2xf32> to vector<1x8x8x2xf32>
    %132 = arith.addf %128, %131 : vector<1x8x8x2xf32>
    %cst_150 = arith.constant 0.000000e+00 : f32
    %133 = vector.broadcast %cst_150 : f32 to vector<1x8x8x2xf32>
    %134 = arith.maximumf %132, %133 : vector<1x8x8x2xf32>
    %135 = vector.shape_cast %134 : vector<1x8x8x2xf32> to vector<1x4x2x8x2xf32>
    %136 = vector.extract_strided_slice %135 {offsets = [0, 0, 0, 0, 0], sizes = [1, 4, 1, 8, 2], strides = [1, 1, 1, 1, 1]} : vector<1x4x2x8x2xf32> to vector<1x4x1x8x2xf32>
    %137 = vector.shape_cast %136 : vector<1x4x1x8x2xf32> to vector<1x4x8x2xf32>
    %138 = vector.extract_strided_slice %135 {offsets = [0, 0, 1, 0, 0], sizes = [1, 4, 1, 8, 2], strides = [1, 1, 1, 1, 1]} : vector<1x4x2x8x2xf32> to vector<1x4x1x8x2xf32>
    %139 = vector.shape_cast %138 : vector<1x4x1x8x2xf32> to vector<1x4x8x2xf32>
    %140 = arith.maximumf %137, %139 : vector<1x4x8x2xf32>
    %c0_151 = arith.constant 0 : index
    %c0_152 = arith.constant 0 : index
    %c0_153 = arith.constant 0 : index
    %c0_154 = arith.constant 0 : index
    %141 = vector.load %arg14[%c0_151, %c0_152, %c0_153, %c0_154] : memref<1x4x8x2xf32, #tpu.memory_space<vmem>>, vector<1x4x8x2xf32>
    tpu.vector_store %arg14[%c0_151, %c0_152, %c0_153, %c0_154], %140 {strides = array<i32>} : memref<1x4x8x2xf32, #tpu.memory_space<vmem>>, vector<1x4x8x2xf32>,
    %c0_155 = arith.constant 0 : index
    %c0_156 = arith.constant 0 : index
    %c0_157 = arith.constant 0 : index
    %c0_158 = arith.constant 0 : index
    %142 = tpu.strided_load %arg14[%c0_155, %c0_156, %c0_157, %c0_158] {strides = array<i32: 1, 1, 2, 1>} : memref<1x4x8x2xf32, #tpu.memory_space<vmem>>, vector<1x4x4x2xf32>
    %c0_159 = arith.constant 0 : index
    %c0_160 = arith.constant 0 : index
    %c1_161 = arith.constant 1 : index
    %c0_162 = arith.constant 0 : index
    %143 = tpu.strided_load %arg14[%c0_159, %c0_160, %c1_161, %c0_162] {strides = array<i32: 1, 1, 2, 1>} : memref<1x4x8x2xf32, #tpu.memory_space<vmem>>, vector<1x4x4x2xf32>
    %144 = arith.maximumf %142, %143 : vector<1x4x4x2xf32>
    %c0_163 = arith.constant 0 : index
    %c0_164 = arith.constant 0 : index
    %c0_165 = arith.constant 0 : index
    %c0_166 = arith.constant 0 : index
    %145 = vector.load %arg8[%c0_163, %c0_164, %c0_165, %c0_166] : memref<1x4x4x2xf32, #tpu.memory_space<vmem>>, vector<1x4x4x2xf32>
    tpu.vector_store %arg8[%c0_163, %c0_164, %c0_165, %c0_166], %144 {strides = array<i32>} : memref<1x4x4x2xf32, #tpu.memory_space<vmem>>, vector<1x4x4x2xf32>,
    return
  }
  func.func @transform_0(%arg0: i32) -> (i32, i32, i32, i32) {
    %c0_i32 = arith.constant 0 : i32
    %c0_i32_0 = arith.constant 0 : i32
    %c0_i32_1 = arith.constant 0 : i32
    %c0_i32_2 = arith.constant 0 : i32
    return %arg0, %c0_i32, %c0_i32_0, %c0_i32_1 : i32, i32, i32, i32
  }
  func.func @transform_1(%arg0: i32) -> (i32, i32, i32) {
    %c0_i32 = arith.constant 0 : i32
    %c0_i32_0 = arith.constant 0 : i32
    %c0_i32_1 = arith.constant 0 : i32
    %c0_i32_2 = arith.constant 0 : i32
    return %c0_i32, %c0_i32_0, %c0_i32_1 : i32, i32, i32
  }
  func.func @transform_2(%arg0: i32) -> (i32, i32) {
    %c0_i32 = arith.constant 0 : i32
    %c0_i32_0 = arith.constant 0 : i32
    %c0_i32_1 = arith.constant 0 : i32
    return %c0_i32, %c0_i32_0 : i32, i32
  }
  func.func @transform_3(%arg0: i32) -> (i32, i32, i32) {
    %c0_i32 = arith.constant 0 : i32
    %c0_i32_0 = arith.constant 0 : i32
    %c0_i32_1 = arith.constant 0 : i32
    %c0_i32_2 = arith.constant 0 : i32
    return %c0_i32, %c0_i32_0, %c0_i32_1 : i32, i32, i32
  }
  func.func @transform_4(%arg0: i32) -> (i32, i32) {
    %c0_i32 = arith.constant 0 : i32
    %c0_i32_0 = arith.constant 0 : i32
    %c0_i32_1 = arith.constant 0 : i32
    return %c0_i32, %c0_i32_0 : i32, i32
  }
  func.func @transform_5(%arg0: i32) -> (i32, i32, i32) {
    %c0_i32 = arith.constant 0 : i32
    %c0_i32_0 = arith.constant 0 : i32
    %c0_i32_1 = arith.constant 0 : i32
    %c0_i32_2 = arith.constant 0 : i32
    return %c0_i32, %c0_i32_0, %c0_i32_1 : i32, i32, i32
  }
  func.func @transform_6(%arg0: i32) -> (i32, i32) {
    %c0_i32 = arith.constant 0 : i32
    %c0_i32_0 = arith.constant 0 : i32
    %c0_i32_1 = arith.constant 0 : i32
    return %c0_i32, %c0_i32_0 : i32, i32
  }
  func.func @transform_7(%arg0: i32) -> (i32, i32, i32, i32) {
    %c0_i32 = arith.constant 0 : i32
    %c0_i32_0 = arith.constant 0 : i32
    %c0_i32_1 = arith.constant 0 : i32
    %c0_i32_2 = arith.constant 0 : i32
    return %arg0, %c0_i32, %c0_i32_0, %c0_i32_1 : i32, i32, i32, i32
  }
}

</mosaic_0001>

<llo_original>
// kernel: tpu_custom_call.1
$region0: #{tpu_custom_call.1}
  #allocation0 [shape = 'u32[]', space=smem, size = 0x4, offset = 0x4, fixed_abs, tag = 'smem constant byte address 0x4 - core index']
  #allocation1 [shape = 'u32[72,128]{1,0:T(1,128)}', space=vmem, size = 0x9000, scoped, tag = 'internal scratch']
  #allocation2 [shape = 'f32[1,20,25,1]{3,2,1,0:T(8,128)}', space=vmem, size = 0x50000, scoped, tag = 'scratch operand']
  #allocation3 [shape = 'f32[1,13,17,32]{3,2,1,0:T(8,128)}', space=vmem, size = 0x27000, scoped, tag = 'scratch operand']
  #allocation4 [shape = 'f32[1,10,10,64]{3,2,1,0:T(8,128)}', space=vmem, size = 0x14000, scoped, tag = 'scratch operand']
  #allocation5 [shape = 'f32[1,9,24,32]{3,2,1,0:T(8,128)}', space=vmem, size = 0x1b000, scoped, tag = 'scratch operand']
  #allocation6 [shape = 'f32[1,6,16,64]{3,2,1,0:T(8,128)}', space=vmem, size = 0xc000, scoped, tag = 'scratch operand']
  #allocation7 [shape = 'f32[1,4,8,2]{3,2,1,0:T(8,128)}', space=vmem, size = 0x4000, scoped, tag = 'scratch operand']
  %s0 = inlined_call_operand.vmem [shape: f32[2,16,16,1], index: 0, kind: input, shape index: {}]
  %s1 = inlined_call_operand.vmem [shape: f32[4,1,32], index: 1, kind: input, shape index: {}]
  %s2 = inlined_call_operand.vmem [shape: f32[1,32], index: 2, kind: input, shape index: {}]
  %s3 = inlined_call_operand.vmem [shape: bf16[4,32,64], index: 3, kind: input, shape index: {}]
  %s4 = inlined_call_operand.vmem [shape: f32[1,64], index: 4, kind: input, shape index: {}]
  %s5 = inlined_call_operand.vmem [shape: bf16[4,64,2], index: 5, kind: input, shape index: {}]
  %s6 = inlined_call_operand.vmem [shape: f32[1,2], index: 6, kind: input, shape index: {}]
  %s7 = inlined_call_operand.vmem [shape: f32[2,4,4,2], index: 7, kind: output, shape index: {}]
  %s8 = sld [smem:[#allocation0]]
  $region61: #{tpu_custom_call.1} parent=0
    _
  %s10 = ssub.s32 1, %s8
  %s11 = scalar_select 0, %s10, %s8
  loop: start=0, step=1, limit=4
  $region2: #{tpu_custom_call.1} parent=0 // loop_pre_header
    _
  $region3: #{tpu_custom_call.1} parent=0 // loop_header
    %s13 = sphi 0, %s17
    %p14 = scmp.ge.s32.totalorder %s13, 4
    %s23 = sphi 0, %s25
    %s26 = sphi 0, %s23
    %s27 = sphi 0, %s26
    %s43 = sphi 0, %s27
    %s47 = sphi 0, %s47
    %s49 = sphi 0, %s47
    %s50 = sphi 0, %s49
    %s64 = sphi 0, %s50
    %s68 = sphi 0, %s68
    %s70 = sphi 0, %s68
    %s71 = sphi 0, %s70
    %s85 = sphi 0, %s71
    %s89 = sphi 0, %s89
    %s91 = sphi 0, %s89
    %s92 = sphi 0, %s91
    %s106 = sphi 0, %s92
    %s110 = sphi 0, %s110
    %s112 = sphi 0, %s110
    %s113 = sphi 0, %s112
    %s127 = sphi 0, %s113
    %s131 = sphi 0, %s131
    %s133 = sphi 0, %s131
    %s134 = sphi 0, %s133
    %s148 = sphi 0, %s134
    %s152 = sphi 0, %s152
    %s154 = sphi 0, %s152
    %s155 = sphi 0, %s154
    %s169 = sphi 0, %s155
    %s175 = sphi 0, %s177
    %s178 = sphi 0, %s175
    %s179 = sphi 0, %s178
    %s195 = sphi 0, %s179
  $region4: #{tpu_custom_call.1} parent=0 // loop_header_branch
    %16 = sbr.rel (%p14) target = $region8
  $region5: #{tpu_custom_call.1} parent=0 // loop_body
    %s18 = ssub.s32 %s13, 1
    %s19 = ssub.s32 %s13, 2
    %s20 = sadd.s32 %s13, 1
    %s21 = ssub.s32 %s13, %s20
    %p22 = scmp.eq.s32.totalorder %s21, 0
    %s24 = sadd.s32 %s23, 1
    %s25 = scalar_select %p22, %s23, %s24
    %p28 = pneg %p22
    %p29 = scmp.eq.s32.totalorder %s13, 1
    %p30 = por %p28, %p29
    %p31 = scmp.ne.s32.totalorder %s23, %s26
    %p32 = scmp.eq.s32.totalorder %s13, 0
    %p33 = por %p31, %p32
    %p34 = scmp.ne.s32.totalorder %s23, %s26
    %p35 = scmp.eq.s32.totalorder %s18, 1
    %p36 = por %p34, %p35
    %p37 = scmp.ne.s32.totalorder %s26, %s27
    %p38 = scmp.eq.s32.totalorder %s18, 0
    %p39 = por %p37, %p38
    %p40 = scmp.ne.s32.totalorder %s26, %s27
    %p41 = scmp.eq.s32.totalorder %s19, 1
    %p42 = por %p40, %p41
    %p44 = scmp.ne.s32.totalorder %s27, %s43
    %p45 = scmp.eq.s32.totalorder %s19, 0
    %p46 = por %p44, %p45
    %s48 = sadd.s32 %s47, 1
    %p51 = scmp.eq.s32.totalorder %s13, 1
    %p52 = scmp.ne.s32.totalorder %s47, %s49
    %p53 = scmp.eq.s32.totalorder %s13, 0
    %p54 = por %p52, %p53
    %p55 = scmp.ne.s32.totalorder %s47, %s49
    %p56 = scmp.eq.s32.totalorder %s18, 1
    %p57 = por %p55, %p56
    %p58 = scmp.ne.s32.totalorder %s49, %s50
    %p59 = scmp.eq.s32.totalorder %s18, 0
    %p60 = por %p58, %p59
    %p61 = scmp.ne.s32.totalorder %s49, %s50
    %p62 = scmp.eq.s32.totalorder %s19, 1
    %p63 = por %p61, %p62
    %p65 = scmp.ne.s32.totalorder %s50, %s64
    %p66 = scmp.eq.s32.totalorder %s19, 0
    %p67 = por %p65, %p66
    %s69 = sadd.s32 %s68, 1
    %p72 = scmp.eq.s32.totalorder %s13, 1
    %p73 = scmp.ne.s32.totalorder %s68, %s70
    %p74 = scmp.eq.s32.totalorder %s13, 0
    %p75 = por %p73, %p74
    %p76 = scmp.ne.s32.totalorder %s68, %s70
    %p77 = scmp.eq.s32.totalorder %s18, 1
    %p78 = por %p76, %p77
    %p79 = scmp.ne.s32.totalorder %s70, %s71
    %p80 = scmp.eq.s32.totalorder %s18, 0
    %p81 = por %p79, %p80
    %p82 = scmp.ne.s32.totalorder %s70, %s71
    %p83 = scmp.eq.s32.totalorder %s19, 1
    %p84 = por %p82, %p83
    %p86 = scmp.ne.s32.totalorder %s71, %s85
    %p87 = scmp.eq.s32.totalorder %s19, 0
    %p88 = por %p86, %p87
    %s90 = sadd.s32 %s89, 1
    %p93 = scmp.eq.s32.totalorder %s13, 1
    %p94 = scmp.ne.s32.totalorder %s89, %s91
    %p95 = scmp.eq.s32.totalorder %s13, 0
    %p96 = por %p94, %p95
    %p97 = scmp.ne.s32.totalorder %s89, %s91
    %p98 = scmp.eq.s32.totalorder %s18, 1
    %p99 = por %p97, %p98
    %p100 = scmp.ne.s32.totalorder %s91, %s92
    %p101 = scmp.eq.s32.totalorder %s18, 0
    %p102 = por %p100, %p101
    %p103 = scmp.ne.s32.totalorder %s91, %s92
    %p104 = scmp.eq.s32.totalorder %s19, 1
    %p105 = por %p103, %p104
    %p107 = scmp.ne.s32.totalorder %s92, %s106
    %p108 = scmp.eq.s32.totalorder %s19, 0
    %p109 = por %p107, %p108
    %s111 = sadd.s32 %s110, 1
    %p114 = scmp.eq.s32.totalorder %s13, 1
    %p115 = scmp.ne.s32.totalorder %s110, %s112
    %p116 = scmp.eq.s32.totalorder %s13, 0
    %p117 = por %p115, %p116
    %p118 = scmp.ne.s32.totalorder %s110, %s112
    %p119 = scmp.eq.s32.totalorder %s18, 1
    %p120 = por %p118, %p119
    %p121 = scmp.ne.s32.totalorder %s112, %s113
    %p122 = scmp.eq.s32.totalorder %s18, 0
    %p123 = por %p121, %p122
    %p124 = scmp.ne.s32.totalorder %s112, %s113
    %p125 = scmp.eq.s32.totalorder %s19, 1
    %p126 = por %p124, %p125
    %p128 = scmp.ne.s32.totalorder %s113, %s127
    %p129 = scmp.eq.s32.totalorder %s19, 0
    %p130 = por %p128, %p129
    %s132 = sadd.s32 %s131, 1
    %p135 = scmp.eq.s32.totalorder %s13, 1
    %p136 = scmp.ne.s32.totalorder %s131, %s133
    %p137 = scmp.eq.s32.totalorder %s13, 0
    %p138 = por %p136, %p137
    %p139 = scmp.ne.s32.totalorder %s131, %s133
    %p140 = scmp.eq.s32.totalorder %s18, 1
    %p141 = por %p139, %p140
    %p142 = scmp.ne.s32.totalorder %s133, %s134
    %p143 = scmp.eq.s32.totalorder %s18, 0
    %p144 = por %p142, %p143
    %p145 = scmp.ne.s32.totalorder %s133, %s134
    %p146 = scmp.eq.s32.totalorder %s19, 1
    %p147 = por %p145, %p146
    %p149 = scmp.ne.s32.totalorder %s134, %s148
    %p150 = scmp.eq.s32.totalorder %s19, 0
    %p151 = por %p149, %p150
    %s153 = sadd.s32 %s152, 1
    %p156 = scmp.eq.s32.totalorder %s13, 1
    %p157 = scmp.ne.s32.totalorder %s152, %s154
    %p158 = scmp.eq.s32.totalorder %s13, 0
    %p159 = por %p157, %p158
    %p160 = scmp.ne.s32.totalorder %s152, %s154
    %p161 = scmp.eq.s32.totalorder %s18, 1
    %p162 = por %p160, %p161
    %p163 = scmp.ne.s32.totalorder %s154, %s155
    %p164 = scmp.eq.s32.totalorder %s18, 0
    %p165 = por %p163, %p164
    %p166 = scmp.ne.s32.totalorder %s154, %s155
    %p167 = scmp.eq.s32.totalorder %s19, 1
    %p168 = por %p166, %p167
    %p170 = scmp.ne.s32.totalorder %s155, %s169
    %p171 = scmp.eq.s32.totalorder %s19, 0
    %p172 = por %p170, %p171
    %s173 = ssub.s32 %s13, %s20
    %p174 = scmp.eq.s32.totalorder %s173, 0
    %s176 = sadd.s32 %s175, 1
    %s177 = scalar_select %p174, %s175, %s176
    %p180 = pneg %p174
    %p181 = scmp.eq.s32.totalorder %s13, 1
    %p182 = por %p180, %p181
    %p183 = scmp.ne.s32.totalorder %s175, %s178
    %p184 = scmp.eq.s32.totalorder %s13, 0
    %p185 = por %p183, %p184
    %p186 = scmp.ne.s32.totalorder %s175, %s178
    %p187 = scmp.eq.s32.totalorder %s18, 1
    %p188 = por %p186, %p187
    %p189 = scmp.ne.s32.totalorder %s178, %s179
    %p190 = scmp.eq.s32.totalorder %s18, 0
    %p191 = por %p189, %p190
    %p192 = scmp.ne.s32.totalorder %s178, %s179
    %p193 = scmp.eq.s32.totalorder %s19, 1
    %p194 = por %p192, %p193
    %p196 = scmp.ne.s32.totalorder %s179, %s195
    %p197 = scmp.eq.s32.totalorder %s19, 0
    %p198 = por %p196, %p197
    %p199 = scmp.le.s32.totalorder 1, %s13
    %p200 = scmp.lt.s32.totalorder %s13, 3
    %p201 = pnand %p199, %p200
    %p202 = pneg %p201
    // Predicated region
    $region9: #{tpu_custom_call.1} parent=5 // pred_check
      _
    $region10: #{tpu_custom_call.1} parent=5 // pred_check_branch
      %204 = sbr.rel (%p201) target = $region12
    $region11: #{tpu_custom_call.1} parent=5 // pred_region
      %s205 = ssub.s32 %s13, 1
      // Predicated region
      $region13: #{tpu_custom_call.1} parent=11 // pred_check
        %p206 = pneg %p60
      $region14: #{tpu_custom_call.1} parent=11 // pred_check_branch
        %208 = sbr.rel (%p206) target = $region16
      $region15: #{tpu_custom_call.1} parent=11 // pred_region
        _
      $region16: #{tpu_custom_call.1} parent=11 // pred_fallthru
        _
      // Predicated region
      $region17: #{tpu_custom_call.1} parent=11 // pred_check
        %p209 = pneg %p81
      $region18: #{tpu_custom_call.1} parent=11 // pred_check_branch
        %211 = sbr.rel (%p209) target = $region20
      $region19: #{tpu_custom_call.1} parent=11 // pred_region
        _
      $region20: #{tpu_custom_call.1} parent=11 // pred_fallthru
        _
      // Predicated region
      $region21: #{tpu_custom_call.1} parent=11 // pred_check
        %p212 = pneg %p102
      $region22: #{tpu_custom_call.1} parent=11 // pred_check_branch
        %214 = sbr.rel (%p212) target = $region24
      $region23: #{tpu_custom_call.1} parent=11 // pred_region
        _
      $region24: #{tpu_custom_call.1} parent=11 // pred_fallthru
        _
      // Predicated region
      $region25: #{tpu_custom_call.1} parent=11 // pred_check
        %p215 = pneg %p123
      $region26: #{tpu_custom_call.1} parent=11 // pred_check_branch
        %217 = sbr.rel (%p215) target = $region28
      $region27: #{tpu_custom_call.1} parent=11 // pred_region
        _
      $region28: #{tpu_custom_call.1} parent=11 // pred_fallthru
        _
      // Predicated region
      $region29: #{tpu_custom_call.1} parent=11 // pred_check
        %p218 = pneg %p144
      $region30: #{tpu_custom_call.1} parent=11 // pred_check_branch
        %220 = sbr.rel (%p218) target = $region32
      $region31: #{tpu_custom_call.1} parent=11 // pred_region
        _
      $region32: #{tpu_custom_call.1} parent=11 // pred_fallthru
        _
      // Predicated region
      $region33: #{tpu_custom_call.1} parent=11 // pred_check
        %p221 = pneg %p165
      $region34: #{tpu_custom_call.1} parent=11 // pred_check_branch
        %223 = sbr.rel (%p221) target = $region36
      $region35: #{tpu_custom_call.1} parent=11 // pred_region
        _
      $region36: #{tpu_custom_call.1} parent=11 // pred_fallthru
        _
    $region12: #{tpu_custom_call.1} parent=5 // pred_fallthru
      _
    %p224 = scmp.lt.s32.totalorder %s13, 2
    // Predicated region
    $region37: #{tpu_custom_call.1} parent=5 // pred_check
      %p225 = pneg %p224
    $region38: #{tpu_custom_call.1} parent=5 // pred_check_branch
      %227 = sbr.rel (%p225) target = $region40
    $region39: #{tpu_custom_call.1} parent=5 // pred_region
      // Predicated region
      $region41: #{tpu_custom_call.1} parent=39 // pred_check
        %p228 = pneg %p33
      $region42: #{tpu_custom_call.1} parent=39 // pred_check_branch
        %230 = sbr.rel (%p228) target = $region44
      $region43: #{tpu_custom_call.1} parent=39 // pred_region
        %p231 = scmp.lt.s32.totalorder %s13, 1
        %s232 = scalar_select %p231, %s13, 1
        %s233 = smul.addr %s232, 32
        %s234 = smul.addr %s233, 8
        %s235 = scalar_lea.vmem %s0, %s234
      $region44: #{tpu_custom_call.1} parent=39 // pred_fallthru
        _
    $region40: #{tpu_custom_call.1} parent=5 // pred_fallthru
      _
    %p236 = scmp.le.s32.totalorder 1, %s13
    %p237 = scmp.lt.s32.totalorder %s13, 3
    %p238 = pnand %p236, %p237
    %p239 = pneg %p238
    // Predicated region
    $region45: #{tpu_custom_call.1} parent=5 // pred_check
      _
    $region46: #{tpu_custom_call.1} parent=5 // pred_check_branch
      %241 = sbr.rel (%p238) target = $region48
    $region47: #{tpu_custom_call.1} parent=5 // pred_region
      %s242 = ssub.s32 %s13, 1
      %p243 = scmp.lt.s32.totalorder %s18, 1
      %s244 = scalar_select %p243, %s18, 1
      %s245 = smul.addr %s244, 32
      %s246 = smul.addr %s245, 8
      %s247 = scalar_lea.vmem %s0, %s246
      %p248 = pneg %p39
      %p249 = pneg %p36
      %p250 = pneg %p60
      %p251 = pneg %p57
      %p252 = pneg %p81
      %p253 = pneg %p78
      %p254 = pneg %p102
      %p255 = pneg %p99
      %p256 = pneg %p123
      %p257 = pneg %p120
      %p258 = pneg %p144
      %p259 = pneg %p141
      %p260 = pneg %p165
      %p261 = pneg %p162
      %p262 = pneg %p191
      %p263 = pneg %p188
      %p264 = scmp.lt.s32.totalorder %s18, 1
      %s265 = scalar_select %p264, %s18, 1
      %s266 = smul.addr %s265, 4
      %s267 = smul.addr %s266, 4
      %s268 = scalar_lea.vmem %s7, %s267
      %p269 = scmp.lt.s32.totalorder %s18, 1
      %s270 = scalar_select %p269, %s18, 1
      %s271 = smul.addr %s270, 32
      %s272 = smul.addr %s271, 8
      %s273 = scalar_lea.vmem %s0, %s272
      %p274 = scmp.lt.s32.totalorder %s18, 1
      %s275 = scalar_select %p274, %s18, 1
      %s276 = smul.addr %s275, 4
      %s277 = smul.addr %s276, 4
      %s278 = scalar_lea.vmem %s7, %s277
      %v280 = vld [vmem:[%s273] sm:$0xff]
      %v281 = vld [vmem:[%s273 + $0x8] sm:$0xff]
      %v282 = vld [vmem:[%s273 + $0x10] sm:$0xff]
      %v283 = vld [vmem:[%s273 + $0x18] sm:$0xff]
      %v284 = vld [vmem:[%s273 + $0x20] sm:$0xff]
      %v285 = vld [vmem:[%s273 + $0x28] sm:$0xff]
      %v286 = vld [vmem:[%s273 + $0x30] sm:$0xff]
      %v287 = vld [vmem:[%s273 + $0x38] sm:$0xff]
      %v288 = vld [vmem:[%s273 + $0x40] sm:$0xff]
      %v289 = vld [vmem:[%s273 + $0x48] sm:$0xff]
      %v290 = vld [vmem:[%s273 + $0x50] sm:$0xff]
      %v291 = vld [vmem:[%s273 + $0x58] sm:$0xff]
      %v292 = vld [vmem:[%s273 + $0x60] sm:$0xff]
      %v293 = vld [vmem:[%s273 + $0x68] sm:$0xff]
      %v294 = vld [vmem:[%s273 + $0x70] sm:$0xff]
      %v295 = vld [vmem:[%s273 + $0x78] sm:$0xff]
      %v296 = vld [vmem:[%s273 + $0x80] sm:$0xff]
      %v297 = vld [vmem:[%s273 + $0x88] sm:$0xff]
      %v298 = vld [vmem:[%s273 + $0x90] sm:$0xff]
      %v299 = vld [vmem:[%s273 + $0x98] sm:$0xff]
      %v300 = vld [vmem:[%s273 + $0xa0] sm:$0xff]
      %v301 = vld [vmem:[%s273 + $0xa8] sm:$0xff]
      %v302 = vld [vmem:[%s273 + $0xb0] sm:$0xff]
      %v303 = vld [vmem:[%s273 + $0xb8] sm:$0xff]
      %v304 = vld [vmem:[%s273 + $0xc0] sm:$0xff]
      %v305 = vld [vmem:[%s273 + $0xc8] sm:$0xff]
      %v306 = vld [vmem:[%s273 + $0xd0] sm:$0xff]
      %v307 = vld [vmem:[%s273 + $0xd8] sm:$0xff]
      %v308 = vld [vmem:[%s273 + $0xe0] sm:$0xff]
      %v309 = vld [vmem:[%s273 + $0xe8] sm:$0xff]
      %v310 = vld [vmem:[%s273 + $0xf0] sm:$0xff]
      %v311 = vld [vmem:[%s273 + $0xf8] sm:$0xff]
      %vm312 = vcmask 7168
      %313 = vst.msk [vmem:[#allocation2] sm:$0xff] %vm312, 0.0
      %314 = vst.msk [vmem:[#allocation2 + $0x8] sm:$0xff] %vm312, 0.0
      %315 = vst.msk [vmem:[#allocation2 + $0x10] sm:$0xff] %vm312, 0.0
      %vm316 = vcmask 0
      %317 = vst.msk [vmem:[#allocation2 + $0x18] sm:$0x1] %vm316, 0.0
      %318 = vst.msk [vmem:[#allocation2 + $0x20] sm:$0xff] %vm312, 0.0
      %319 = vst.msk [vmem:[#allocation2 + $0x28] sm:$0xff] %vm312, 0.0
      %320 = vst.msk [vmem:[#allocation2 + $0x30] sm:$0xff] %vm312, 0.0
      %321 = vst.msk [vmem:[#allocation2 + $0x38] sm:$0x1] %vm316, 0.0
      %322 = vst.msk [vmem:[#allocation2 + $0x40] sm:$0xff] %vm312, 0.0
      %323 = vst.msk [vmem:[#allocation2 + $0x48] sm:$0xff] %vm312, 0.0
      %324 = vst.msk [vmem:[#allocation2 + $0x50] sm:$0xff] %vm312, 0.0
      %325 = vst.msk [vmem:[#allocation2 + $0x58] sm:$0x1] %vm316, 0.0
      %326 = vst.msk [vmem:[#allocation2 + $0x60] sm:$0xff] %vm312, 0.0
      %327 = vst.msk [vmem:[#allocation2 + $0x68] sm:$0xff] %vm312, 0.0
      %328 = vst.msk [vmem:[#allocation2 + $0x70] sm:$0xff] %vm312, 0.0
      %329 = vst.msk [vmem:[#allocation2 + $0x78] sm:$0x1] %vm316, 0.0
      %330 = vst.msk [vmem:[#allocation2 + $0x80] sm:$0xff] %vm312, 0.0
      %331 = vst.msk [vmem:[#allocation2 + $0x88] sm:$0xff] %vm312, 0.0
      %332 = vst.msk [vmem:[#allocation2 + $0x90] sm:$0xff] %vm312, 0.0
      %333 = vst.msk [vmem:[#allocation2 + $0x98] sm:$0x1] %vm316, 0.0
      %334 = vst.msk [vmem:[#allocation2 + $0xa0] sm:$0xff] %vm312, 0.0
      %335 = vst.msk [vmem:[#allocation2 + $0xa8] sm:$0xff] %vm312, 0.0
      %336 = vst.msk [vmem:[#allocation2 + $0xb0] sm:$0xff] %vm312, 0.0
      %337 = vst.msk [vmem:[#allocation2 + $0xb8] sm:$0x1] %vm316, 0.0
      %338 = vst.msk [vmem:[#allocation2 + $0xc0] sm:$0xff] %vm312, 0.0
      %339 = vst.msk [vmem:[#allocation2 + $0xc8] sm:$0xff] %vm312, 0.0
      %340 = vst.msk [vmem:[#allocation2 + $0xd0] sm:$0xff] %vm312, 0.0
      %341 = vst.msk [vmem:[#allocation2 + $0xd8] sm:$0x1] %vm316, 0.0
      %342 = vst.msk [vmem:[#allocation2 + $0xe0] sm:$0xff] %vm312, 0.0
      %343 = vst.msk [vmem:[#allocation2 + $0xe8] sm:$0xff] %vm312, 0.0
      %344 = vst.msk [vmem:[#allocation2 + $0xf0] sm:$0xff] %vm312, 0.0
      %345 = vst.msk [vmem:[#allocation2 + $0xf8] sm:$0x1] %vm316, 0.0
      %346 = vst.msk [vmem:[#allocation2 + $0x100] sm:$0xff] %vm312, 0.0
      %347 = vst.msk [vmem:[#allocation2 + $0x108] sm:$0xff] %vm312, 0.0
      %348 = vst.msk [vmem:[#allocation2 + $0x110] sm:$0xff] %vm312, 0.0
      %349 = vst.msk [vmem:[#allocation2 + $0x118] sm:$0x1] %vm316, 0.0
      %350 = vst.msk [vmem:[#allocation2 + $0x120] sm:$0xff] %vm312, 0.0
      %351 = vst.msk [vmem:[#allocation2 + $0x128] sm:$0xff] %vm312, 0.0
      %352 = vst.msk [vmem:[#allocation2 + $0x130] sm:$0xff] %vm312, 0.0
      %353 = vst.msk [vmem:[#allocation2 + $0x138] sm:$0x1] %vm316, 0.0
      %354 = vst.msk [vmem:[#allocation2 + $0x140] sm:$0xff] %vm312, 0.0
      %355 = vst.msk [vmem:[#allocation2 + $0x148] sm:$0xff] %vm312, 0.0
      %356 = vst.msk [vmem:[#allocation2 + $0x150] sm:$0xff] %vm312, 0.0
      %357 = vst.msk [vmem:[#allocation2 + $0x158] sm:$0x1] %vm316, 0.0
      %358 = vst.msk [vmem:[#allocation2 + $0x160] sm:$0xff] %vm312, 0.0
      %359 = vst.msk [vmem:[#allocation2 + $0x168] sm:$0xff] %vm312, 0.0
      %360 = vst.msk [vmem:[#allocation2 + $0x170] sm:$0xff] %vm312, 0.0
      %361 = vst.msk [vmem:[#allocation2 + $0x178] sm:$0x1] %vm316, 0.0
      %362 = vst.msk [vmem:[#allocation2 + $0x180] sm:$0xff] %vm312, 0.0
      %363 = vst.msk [vmem:[#allocation2 + $0x188] sm:$0xff] %vm312, 0.0
      %364 = vst.msk [vmem:[#allocation2 + $0x190] sm:$0xff] %vm312, 0.0
      %365 = vst.msk [vmem:[#allocation2 + $0x198] sm:$0x1] %vm316, 0.0
      %366 = vst.msk [vmem:[#allocation2 + $0x1a0] sm:$0xff] %vm312, 0.0
      %367 = vst.msk [vmem:[#allocation2 + $0x1a8] sm:$0xff] %vm312, 0.0
      %368 = vst.msk [vmem:[#allocation2 + $0x1b0] sm:$0xff] %vm312, 0.0
      %369 = vst.msk [vmem:[#allocation2 + $0x1b8] sm:$0x1] %vm316, 0.0
      %370 = vst.msk [vmem:[#allocation2 + $0x1c0] sm:$0xff] %vm312, 0.0
      %371 = vst.msk [vmem:[#allocation2 + $0x1c8] sm:$0xff] %vm312, 0.0
      %372 = vst.msk [vmem:[#allocation2 + $0x1d0] sm:$0xff] %vm312, 0.0
      %373 = vst.msk [vmem:[#allocation2 + $0x1d8] sm:$0x1] %vm316, 0.0
      %374 = vst.msk [vmem:[#allocation2 + $0x1e0] sm:$0xff] %vm312, 0.0
      %375 = vst.msk [vmem:[#allocation2 + $0x1e8] sm:$0xff] %vm312, 0.0
      %376 = vst.msk [vmem:[#allocation2 + $0x1f0] sm:$0xff] %vm312, 0.0
      %377 = vst.msk [vmem:[#allocation2 + $0x1f8] sm:$0x1] %vm316, 0.0
      %378 = vst.msk [vmem:[#allocation2 + $0x200] sm:$0xff] %vm312, 0.0
      %379 = vst.msk [vmem:[#allocation2 + $0x208] sm:$0xff] %vm312, 0.0
      %380 = vst.msk [vmem:[#allocation2 + $0x210] sm:$0xff] %vm312, 0.0
      %381 = vst.msk [vmem:[#allocation2 + $0x218] sm:$0x1] %vm316, 0.0
      %382 = vst.msk [vmem:[#allocation2 + $0x220] sm:$0xff] %vm312, 0.0
      %383 = vst.msk [vmem:[#allocation2 + $0x228] sm:$0xff] %vm312, 0.0
      %384 = vst.msk [vmem:[#allocation2 + $0x230] sm:$0xff] %vm312, 0.0
      %385 = vst.msk [vmem:[#allocation2 + $0x238] sm:$0x1] %vm316, 0.0
      %386 = vst.msk [vmem:[#allocation2 + $0x240] sm:$0xff] %vm312, 0.0
      %387 = vst.msk [vmem:[#allocation2 + $0x248] sm:$0xff] %vm312, 0.0
      %388 = vst.msk [vmem:[#allocation2 + $0x250] sm:$0xff] %vm312, 0.0
      %389 = vst.msk [vmem:[#allocation2 + $0x258] sm:$0x1] %vm316, 0.0
      %390 = vst.msk [vmem:[#allocation2 + $0x260] sm:$0xff] %vm312, 0.0
      %391 = vst.msk [vmem:[#allocation2 + $0x268] sm:$0xff] %vm312, 0.0
      %392 = vst.msk [vmem:[#allocation2 + $0x270] sm:$0xff] %vm312, 0.0
      %393 = vst.msk [vmem:[#allocation2 + $0x278] sm:$0x1] %vm316, 0.0
      %s394 = scalar_lea.vmem [#allocation2], 64
      %395 = vst.msk [vmem:[%s394 + $0x2] sm:$0xff] %vm312, %v280
      %396 = vst.msk [vmem:[%s394 + $0xa] sm:$0xff] %vm312, %v281
      %397 = vst.msk [vmem:[%s394 + $0x22] sm:$0xff] %vm312, %v282
      %398 = vst.msk [vmem:[%s394 + $0x2a] sm:$0xff] %vm312, %v283
      %399 = vst.msk [vmem:[%s394 + $0x42] sm:$0xff] %vm312, %v284
      %400 = vst.msk [vmem:[%s394 + $0x4a] sm:$0xff] %vm312, %v285
      %401 = vst.msk [vmem:[%s394 + $0x62] sm:$0xff] %vm312, %v286
      %402 = vst.msk [vmem:[%s394 + $0x6a] sm:$0xff] %vm312, %v287
      %403 = vst.msk [vmem:[%s394 + $0x82] sm:$0xff] %vm312, %v288
      %404 = vst.msk [vmem:[%s394 + $0x8a] sm:$0xff] %vm312, %v289
      %405 = vst.msk [vmem:[%s394 + $0xa2] sm:$0xff] %vm312, %v290
      %406 = vst.msk [vmem:[%s394 + $0xaa] sm:$0xff] %vm312, %v291
      %407 = vst.msk [vmem:[%s394 + $0xc2] sm:$0xff] %vm312, %v292
      %408 = vst.msk [vmem:[%s394 + $0xca] sm:$0xff] %vm312, %v293
      %409 = vst.msk [vmem:[%s394 + $0xe2] sm:$0xff] %vm312, %v294
      %410 = vst.msk [vmem:[%s394 + $0xea] sm:$0xff] %vm312, %v295
      %411 = vst.msk [vmem:[%s394 + $0x102] sm:$0xff] %vm312, %v296
      %412 = vst.msk [vmem:[%s394 + $0x10a] sm:$0xff] %vm312, %v297
      %413 = vst.msk [vmem:[%s394 + $0x122] sm:$0xff] %vm312, %v298
      %414 = vst.msk [vmem:[%s394 + $0x12a] sm:$0xff] %vm312, %v299
      %415 = vst.msk [vmem:[%s394 + $0x142] sm:$0xff] %vm312, %v300
      %416 = vst.msk [vmem:[%s394 + $0x14a] sm:$0xff] %vm312, %v301
      %417 = vst.msk [vmem:[%s394 + $0x162] sm:$0xff] %vm312, %v302
      %418 = vst.msk [vmem:[%s394 + $0x16a] sm:$0xff] %vm312, %v303
      %419 = vst.msk [vmem:[%s394 + $0x182] sm:$0xff] %vm312, %v304
      %420 = vst.msk [vmem:[%s394 + $0x18a] sm:$0xff] %vm312, %v305
      %421 = vst.msk [vmem:[%s394 + $0x1a2] sm:$0xff] %vm312, %v306
      %422 = vst.msk [vmem:[%s394 + $0x1aa] sm:$0xff] %vm312, %v307
      %423 = vst.msk [vmem:[%s394 + $0x1c2] sm:$0xff] %vm312, %v308
      %424 = vst.msk [vmem:[%s394 + $0x1ca] sm:$0xff] %vm312, %v309
      %425 = vst.msk [vmem:[%s394 + $0x1e2] sm:$0xff] %vm312, %v310
      %426 = vst.msk [vmem:[%s394 + $0x1ea] sm:$0xff] %vm312, %v311
      %v427 = vld [vmem:[#allocation2] sm:$0xff]
      %v428 = vld [vmem:[#allocation2 + $0x8] sm:$0xff]
      %v429 = vld [vmem:[#allocation2 + $0x10] sm:$0xff]
      %v430 = vld [vmem:[#allocation2 + $0x20] sm:$0xff]
      %v431 = vld [vmem:[#allocation2 + $0x28] sm:$0xff]
      %v432 = vld [vmem:[#allocation2 + $0x30] sm:$0xff]
      %v433 = vld [vmem:[#allocation2 + $0x40] sm:$0xff]
      %v434 = vld [vmem:[#allocation2 + $0x48] sm:$0xff]
      %v435 = vld [vmem:[#allocation2 + $0x50] sm:$0xff]
      %v436 = vld [vmem:[#allocation2 + $0x60] sm:$0xff]
      %v437 = vld [vmem:[#allocation2 + $0x68] sm:$0xff]
      %v438 = vld [vmem:[#allocation2 + $0x70] sm:$0xff]
      %v439 = vld [vmem:[#allocation2 + $0x80] sm:$0xff]
      %v440 = vld [vmem:[#allocation2 + $0x88] sm:$0xff]
      %v441 = vld [vmem:[#allocation2 + $0x90] sm:$0xff]
      %v442 = vld [vmem:[#allocation2 + $0xa0] sm:$0xff]
      %v443 = vld [vmem:[#allocation2 + $0xa8] sm:$0xff]
      %v444 = vld [vmem:[#allocation2 + $0xb0] sm:$0xff]
      %v445 = vld [vmem:[#allocation2 + $0xc0] sm:$0xff]
      %v446 = vld [vmem:[#allocation2 + $0xc8] sm:$0xff]
      %v447 = vld [vmem:[#allocation2 + $0xd0] sm:$0xff]
      %v448 = vld [vmem:[#allocation2 + $0xe0] sm:$0xff]
      %v449 = vld [vmem:[#allocation2 + $0xe8] sm:$0xff]
      %v450 = vld [vmem:[#allocation2 + $0xf0] sm:$0xff]
      %v451 = vld [vmem:[#allocation2 + $0x100] sm:$0xff]
      %v452 = vld [vmem:[#allocation2 + $0x108] sm:$0xff]
      %v453 = vld [vmem:[#allocation2 + $0x110] sm:$0xff]
      %v454 = vld [vmem:[#allocation2 + $0x120] sm:$0xff]
      %v455 = vld [vmem:[#allocation2 + $0x128] sm:$0xff]
      %v456 = vld [vmem:[#allocation2 + $0x130] sm:$0xff]
      %v457 = vld [vmem:[#allocation2 + $0x140] sm:$0xff]
      %v458 = vld [vmem:[#allocation2 + $0x148] sm:$0xff]
      %v459 = vld [vmem:[#allocation2 + $0x150] sm:$0xff]
      %v460 = vld [vmem:[#allocation2 + $0x160] sm:$0xff]
      %v461 = vld [vmem:[#allocation2 + $0x168] sm:$0xff]
      %v462 = vld [vmem:[#allocation2 + $0x170] sm:$0xff]
      %v463 = vld [vmem:[#allocation2 + $0x180] sm:$0xff]
      %v464 = vld [vmem:[#allocation2 + $0x188] sm:$0xff]
      %v465 = vld [vmem:[#allocation2 + $0x190] sm:$0xff]
      %v466 = vld [vmem:[#allocation2 + $0x1a0] sm:$0xff]
      %v467 = vld [vmem:[#allocation2 + $0x1a8] sm:$0xff]
      %v468 = vld [vmem:[#allocation2 + $0x1b0] sm:$0xff]
      %v469 = vld [vmem:[#allocation2 + $0x1c0] sm:$0xff]
      %v470 = vld [vmem:[#allocation2 + $0x1c8] sm:$0xff]
      %v471 = vld [vmem:[#allocation2 + $0x1d0] sm:$0xff]
      %v472 = vld [vmem:[#allocation2 + $0x1e0] sm:$0xff]
      %v473 = vld [vmem:[#allocation2 + $0x1e8] sm:$0xff]
      %v474 = vld [vmem:[#allocation2 + $0x1f0] sm:$0xff]
      %v475 = vld [vmem:[#allocation2 + $0x200] sm:$0xff]
      %v476 = vld [vmem:[#allocation2 + $0x208] sm:$0xff]
      %v477 = vld [vmem:[#allocation2 + $0x210] sm:$0xff]
      %v478 = vld [vmem:[#allocation2 + $0x220] sm:$0xff]
      %v479 = vld [vmem:[#allocation2 + $0x228] sm:$0xff]
      %v480 = vld [vmem:[#allocation2 + $0x230] sm:$0xff]
      %v481 = vld [vmem:[%s1] sm:$0x1]
      %483 = vset.pattern.permute.xlu0 0
      %484 = vperm.xlu0 %483, %v427
      %v485 = vpop.permute.xlu0 %484
      %488 = vset.pattern.permute.xlu0 0
      %489 = vperm.xlu0 %488, %v428
      %v490 = vpop.permute.xlu0 %489
      %493 = vset.pattern.permute.xlu0 0
      %494 = vperm.xlu0 %493, %v429
      %v495 = vpop.permute.xlu0 %494
      %498 = vset.pattern.permute.xlu0 0
      %499 = vperm.xlu0 %498, %v430
      %v500 = vpop.permute.xlu0 %499
      %503 = vset.pattern.permute.xlu0 0
      %504 = vperm.xlu0 %503, %v431
      %v505 = vpop.permute.xlu0 %504
      %508 = vset.pattern.permute.xlu0 0
      %509 = vperm.xlu0 %508, %v432
      %v510 = vpop.permute.xlu0 %509
      %513 = vset.pattern.permute.xlu0 0
      %514 = vperm.xlu0 %513, %v433
      %v515 = vpop.permute.xlu0 %514
      %518 = vset.pattern.permute.xlu0 0
      %519 = vperm.xlu0 %518, %v434
      %v520 = vpop.permute.xlu0 %519
      %523 = vset.pattern.permute.xlu0 0
      %524 = vperm.xlu0 %523, %v435
      %v525 = vpop.permute.xlu0 %524
      %528 = vset.pattern.permute.xlu0 0
      %529 = vperm.xlu0 %528, %v436
      %v530 = vpop.permute.xlu0 %529
      %533 = vset.pattern.permute.xlu0 0
      %534 = vperm.xlu0 %533, %v437
      %v535 = vpop.permute.xlu0 %534
      %538 = vset.pattern.permute.xlu0 0
      %539 = vperm.xlu0 %538, %v438
      %v540 = vpop.permute.xlu0 %539
      %543 = vset.pattern.permute.xlu0 0
      %544 = vperm.xlu0 %543, %v439
      %v545 = vpop.permute.xlu0 %544
      %548 = vset.pattern.permute.xlu0 0
      %549 = vperm.xlu0 %548, %v440
      %v550 = vpop.permute.xlu0 %549
      %553 = vset.pattern.permute.xlu0 0
      %554 = vperm.xlu0 %553, %v441
      %v555 = vpop.permute.xlu0 %554
      %558 = vset.pattern.permute.xlu0 0
      %559 = vperm.xlu0 %558, %v442
      %v560 = vpop.permute.xlu0 %559
      %563 = vset.pattern.permute.xlu0 0
      %564 = vperm.xlu0 %563, %v443
      %v565 = vpop.permute.xlu0 %564
      %568 = vset.pattern.permute.xlu0 0
      %569 = vperm.xlu0 %568, %v444
      %v570 = vpop.permute.xlu0 %569
      %573 = vset.pattern.permute.xlu0 0
      %574 = vperm.xlu0 %573, %v445
      %v575 = vpop.permute.xlu0 %574
      %578 = vset.pattern.permute.xlu0 0
      %579 = vperm.xlu0 %578, %v446
      %v580 = vpop.permute.xlu0 %579
      %583 = vset.pattern.permute.xlu0 0
      %584 = vperm.xlu0 %583, %v447
      %v585 = vpop.permute.xlu0 %584
      %588 = vset.pattern.permute.xlu0 0
      %589 = vperm.xlu0 %588, %v448
      %v590 = vpop.permute.xlu0 %589
      %593 = vset.pattern.permute.xlu0 0
      %594 = vperm.xlu0 %593, %v449
      %v595 = vpop.permute.xlu0 %594
      %598 = vset.pattern.permute.xlu0 0
      %599 = vperm.xlu0 %598, %v450
      %v600 = vpop.permute.xlu0 %599
      %603 = vset.pattern.permute.xlu0 0
      %604 = vperm.xlu0 %603, %v451
      %v605 = vpop.permute.xlu0 %604
      %608 = vset.pattern.permute.xlu0 0
      %609 = vperm.xlu0 %608, %v452
      %v610 = vpop.permute.xlu0 %609
      %613 = vset.pattern.permute.xlu0 0
      %614 = vperm.xlu0 %613, %v453
      %v615 = vpop.permute.xlu0 %614
      %618 = vset.pattern.permute.xlu0 0
      %619 = vperm.xlu0 %618, %v454
      %v620 = vpop.permute.xlu0 %619
      %623 = vset.pattern.permute.xlu0 0
      %624 = vperm.xlu0 %623, %v455
      %v625 = vpop.permute.xlu0 %624
      %628 = vset.pattern.permute.xlu0 0
      %629 = vperm.xlu0 %628, %v456
      %v630 = vpop.permute.xlu0 %629
      %633 = vset.pattern.permute.xlu0 0
      %634 = vperm.xlu0 %633, %v457
      %v635 = vpop.permute.xlu0 %634
      %638 = vset.pattern.permute.xlu0 0
      %639 = vperm.xlu0 %638, %v458
      %v640 = vpop.permute.xlu0 %639
      %643 = vset.pattern.permute.xlu0 0
      %644 = vperm.xlu0 %643, %v459
      %v645 = vpop.permute.xlu0 %644
      %648 = vset.pattern.permute.xlu0 0
      %649 = vperm.xlu0 %648, %v460
      %v650 = vpop.permute.xlu0 %649
      %653 = vset.pattern.permute.xlu0 0
      %654 = vperm.xlu0 %653, %v461
      %v655 = vpop.permute.xlu0 %654
      %658 = vset.pattern.permute.xlu0 0
      %659 = vperm.xlu0 %658, %v462
      %v660 = vpop.permute.xlu0 %659
      %663 = vset.pattern.permute.xlu0 0
      %664 = vperm.xlu0 %663, %v463
      %v665 = vpop.permute.xlu0 %664
      %668 = vset.pattern.permute.xlu0 0
      %669 = vperm.xlu0 %668, %v464
      %v670 = vpop.permute.xlu0 %669
      %673 = vset.pattern.permute.xlu0 0
      %674 = vperm.xlu0 %673, %v465
      %v675 = vpop.permute.xlu0 %674
      %678 = vset.pattern.permute.xlu0 0
      %679 = vperm.xlu0 %678, %v466
      %v680 = vpop.permute.xlu0 %679
      %683 = vset.pattern.permute.xlu0 0
      %684 = vperm.xlu0 %683, %v467
      %v685 = vpop.permute.xlu0 %684
      %688 = vset.pattern.permute.xlu0 0
      %689 = vperm.xlu0 %688, %v468
      %v690 = vpop.permute.xlu0 %689
      %693 = vset.pattern.permute.xlu0 0
      %694 = vperm.xlu0 %693, %v469
      %v695 = vpop.permute.xlu0 %694
      %698 = vset.pattern.permute.xlu0 0
      %699 = vperm.xlu0 %698, %v470
      %v700 = vpop.permute.xlu0 %699
      %703 = vset.pattern.permute.xlu0 0
      %704 = vperm.xlu0 %703, %v471
      %v705 = vpop.permute.xlu0 %704
      %708 = vset.pattern.permute.xlu0 0
      %709 = vperm.xlu0 %708, %v472
      %v710 = vpop.permute.xlu0 %709
      %713 = vset.pattern.permute.xlu0 0
      %714 = vperm.xlu0 %713, %v473
      %v715 = vpop.permute.xlu0 %714
      %718 = vset.pattern.permute.xlu0 0
      %719 = vperm.xlu0 %718, %v474
      %v720 = vpop.permute.xlu0 %719
      %723 = vset.pattern.permute.xlu0 0
      %724 = vperm.xlu0 %723, %v475
      %v725 = vpop.permute.xlu0 %724
      %728 = vset.pattern.permute.xlu0 0
      %729 = vperm.xlu0 %728, %v476
      %v730 = vpop.permute.xlu0 %729
      %733 = vset.pattern.permute.xlu0 0
      %734 = vperm.xlu0 %733, %v477
      %v735 = vpop.permute.xlu0 %734
      %738 = vset.pattern.permute.xlu0 0
      %739 = vperm.xlu0 %738, %v478
      %v740 = vpop.permute.xlu0 %739
      %743 = vset.pattern.permute.xlu0 0
      %744 = vperm.xlu0 %743, %v479
      %v745 = vpop.permute.xlu0 %744
      %748 = vset.pattern.permute.xlu0 0
      %749 = vperm.xlu0 %748, %v480
      %v750 = vpop.permute.xlu0 %749
      %v753 = vperm.slane %v481, 0
      %v755 = vmul.f32 %v485, %v753
      %v756 = vmul.f32 %v490, %v753
      %v757 = vmul.f32 %v495, %v753
      %v758 = vmul.f32 %v500, %v753
      %v759 = vmul.f32 %v505, %v753
      %v760 = vmul.f32 %v510, %v753
      %v761 = vmul.f32 %v515, %v753
      %v762 = vmul.f32 %v520, %v753
      %v763 = vmul.f32 %v525, %v753
      %v764 = vmul.f32 %v530, %v753
      %v765 = vmul.f32 %v535, %v753
      %v766 = vmul.f32 %v540, %v753
      %v767 = vmul.f32 %v545, %v753
      %v768 = vmul.f32 %v550, %v753
      %v769 = vmul.f32 %v555, %v753
      %v770 = vmul.f32 %v560, %v753
      %v771 = vmul.f32 %v565, %v753
      %v772 = vmul.f32 %v570, %v753
      %v773 = vmul.f32 %v575, %v753
      %v774 = vmul.f32 %v580, %v753
      %v775 = vmul.f32 %v585, %v753
      %v776 = vmul.f32 %v590, %v753
      %v777 = vmul.f32 %v595, %v753
      %v778 = vmul.f32 %v600, %v753
      %v779 = vmul.f32 %v605, %v753
      %v780 = vmul.f32 %v610, %v753
      %v781 = vmul.f32 %v615, %v753
      %v782 = vmul.f32 %v620, %v753
      %v783 = vmul.f32 %v625, %v753
      %v784 = vmul.f32 %v630, %v753
      %v785 = vmul.f32 %v635, %v753
      %v786 = vmul.f32 %v640, %v753
      %v787 = vmul.f32 %v645, %v753
      %v788 = vmul.f32 %v650, %v753
      %v789 = vmul.f32 %v655, %v753
      %v790 = vmul.f32 %v660, %v753
      %v791 = vmul.f32 %v665, %v753
      %v792 = vmul.f32 %v670, %v753
      %v793 = vmul.f32 %v675, %v753
      %v794 = vmul.f32 %v680, %v753
      %v795 = vmul.f32 %v685, %v753
      %v796 = vmul.f32 %v690, %v753
      %v797 = vmul.f32 %v695, %v753
      %v798 = vmul.f32 %v700, %v753
      %v799 = vmul.f32 %v705, %v753
      %v800 = vmul.f32 %v710, %v753
      %v801 = vmul.f32 %v715, %v753
      %v802 = vmul.f32 %v720, %v753
      %v803 = vmul.f32 %v725, %v753
      %v804 = vmul.f32 %v730, %v753
      %v805 = vmul.f32 %v735, %v753
      %v806 = vmul.f32 %v740, %v753
      %v807 = vmul.f32 %v745, %v753
      %v808 = vmul.f32 %v750, %v753
      %v809 = vld [vmem:[#allocation2 + $0x1] sm:$0xff]
      %v810 = vld [vmem:[#allocation2 + $0x9] sm:$0xff]
      %v811 = vld [vmem:[#allocation2 + $0x11] sm:$0xff]
      %v812 = vld [vmem:[#allocation2 + $0x21] sm:$0xff]
      %v813 = vld [vmem:[#allocation2 + $0x29] sm:$0xff]
      %v814 = vld [vmem:[#allocation2 + $0x31] sm:$0xff]
      %v815 = vld [vmem:[#allocation2 + $0x41] sm:$0xff]
      %v816 = vld [vmem:[#allocation2 + $0x49] sm:$0xff]
      %v817 = vld [vmem:[#allocation2 + $0x51] sm:$0xff]
      %v818 = vld [vmem:[#allocation2 + $0x61] sm:$0xff]
      %v819 = vld [vmem:[#allocation2 + $0x69] sm:$0xff]
      %v820 = vld [vmem:[#allocation2 + $0x71] sm:$0xff]
      %v821 = vld [vmem:[#allocation2 + $0x81] sm:$0xff]
      %v822 = vld [vmem:[#allocation2 + $0x89] sm:$0xff]
      %v823 = vld [vmem:[#allocation2 + $0x91] sm:$0xff]
      %v824 = vld [vmem:[#allocation2 + $0xa1] sm:$0xff]
      %v825 = vld [vmem:[#allocation2 + $0xa9] sm:$0xff]
      %v826 = vld [vmem:[#allocation2 + $0xb1] sm:$0xff]
      %v827 = vld [vmem:[#allocation2 + $0xc1] sm:$0xff]
      %v828 = vld [vmem:[#allocation2 + $0xc9] sm:$0xff]
      %v829 = vld [vmem:[#allocation2 + $0xd1] sm:$0xff]
      %v830 = vld [vmem:[#allocation2 + $0xe1] sm:$0xff]
      %v831 = vld [vmem:[#allocation2 + $0xe9] sm:$0xff]
      %v832 = vld [vmem:[#allocation2 + $0xf1] sm:$0xff]
      %v833 = vld [vmem:[#allocation2 + $0x101] sm:$0xff]
      %v834 = vld [vmem:[#allocation2 + $0x109] sm:$0xff]
      %v835 = vld [vmem:[#allocation2 + $0x111] sm:$0xff]
      %v836 = vld [vmem:[#allocation2 + $0x121] sm:$0xff]
      %v837 = vld [vmem:[#allocation2 + $0x129] sm:$0xff]
      %v838 = vld [vmem:[#allocation2 + $0x131] sm:$0xff]
      %v839 = vld [vmem:[#allocation2 + $0x141] sm:$0xff]
      %v840 = vld [vmem:[#allocation2 + $0x149] sm:$0xff]
      %v841 = vld [vmem:[#allocation2 + $0x151] sm:$0xff]
      %v842 = vld [vmem:[#allocation2 + $0x161] sm:$0xff]
      %v843 = vld [vmem:[#allocation2 + $0x169] sm:$0xff]
      %v844 = vld [vmem:[#allocation2 + $0x171] sm:$0xff]
      %v845 = vld [vmem:[#allocation2 + $0x181] sm:$0xff]
      %v846 = vld [vmem:[#allocation2 + $0x189] sm:$0xff]
      %v847 = vld [vmem:[#allocation2 + $0x191] sm:$0xff]
      %v848 = vld [vmem:[#allocation2 + $0x1a1] sm:$0xff]
      %v849 = vld [vmem:[#allocation2 + $0x1a9] sm:$0xff]
      %v850 = vld [vmem:[#allocation2 + $0x1b1] sm:$0xff]
      %v851 = vld [vmem:[#allocation2 + $0x1c1] sm:$0xff]
      %v852 = vld [vmem:[#allocation2 + $0x1c9] sm:$0xff]
      %v853 = vld [vmem:[#allocation2 + $0x1d1] sm:$0xff]
      %v854 = vld [vmem:[#allocation2 + $0x1e1] sm:$0xff]
      %v855 = vld [vmem:[#allocation2 + $0x1e9] sm:$0xff]
      %v856 = vld [vmem:[#allocation2 + $0x1f1] sm:$0xff]
      %v857 = vld [vmem:[#allocation2 + $0x201] sm:$0xff]
      %v858 = vld [vmem:[#allocation2 + $0x209] sm:$0xff]
      %v859 = vld [vmem:[#allocation2 + $0x211] sm:$0xff]
      %v860 = vld [vmem:[#allocation2 + $0x221] sm:$0xff]
      %v861 = vld [vmem:[#allocation2 + $0x229] sm:$0xff]
      %v862 = vld [vmem:[#allocation2 + $0x231] sm:$0xff]
      %s863 = scalar_lea.vmem %s1, 1
      %v864 = vld [vmem:[%s863] sm:$0x1]
      %866 = vset.pattern.permute.xlu0 0
      %867 = vperm.xlu0 %866, %v809
      %v868 = vpop.permute.xlu0 %867
      %871 = vset.pattern.permute.xlu0 0
      %872 = vperm.xlu0 %871, %v810
      %v873 = vpop.permute.xlu0 %872
      %876 = vset.pattern.permute.xlu0 0
      %877 = vperm.xlu0 %876, %v811
      %v878 = vpop.permute.xlu0 %877
      %881 = vset.pattern.permute.xlu0 0
      %882 = vperm.xlu0 %881, %v812
      %v883 = vpop.permute.xlu0 %882
      %886 = vset.pattern.permute.xlu0 0
      %887 = vperm.xlu0 %886, %v813
      %v888 = vpop.permute.xlu0 %887
      %891 = vset.pattern.permute.xlu0 0
      %892 = vperm.xlu0 %891, %v814
      %v893 = vpop.permute.xlu0 %892
      %896 = vset.pattern.permute.xlu0 0
      %897 = vperm.xlu0 %896, %v815
      %v898 = vpop.permute.xlu0 %897
      %901 = vset.pattern.permute.xlu0 0
      %902 = vperm.xlu0 %901, %v816
      %v903 = vpop.permute.xlu0 %902
      %906 = vset.pattern.permute.xlu0 0
      %907 = vperm.xlu0 %906, %v817
      %v908 = vpop.permute.xlu0 %907
      %911 = vset.pattern.permute.xlu0 0
      %912 = vperm.xlu0 %911, %v818
      %v913 = vpop.permute.xlu0 %912
      %916 = vset.pattern.permute.xlu0 0
      %917 = vperm.xlu0 %916, %v819
      %v918 = vpop.permute.xlu0 %917
      %921 = vset.pattern.permute.xlu0 0
      %922 = vperm.xlu0 %921, %v820
      %v923 = vpop.permute.xlu0 %922
      %926 = vset.pattern.permute.xlu0 0
      %927 = vperm.xlu0 %926, %v821
      %v928 = vpop.permute.xlu0 %927
      %931 = vset.pattern.permute.xlu0 0
      %932 = vperm.xlu0 %931, %v822
      %v933 = vpop.permute.xlu0 %932
      %936 = vset.pattern.permute.xlu0 0
      %937 = vperm.xlu0 %936, %v823
      %v938 = vpop.permute.xlu0 %937
      %941 = vset.pattern.permute.xlu0 0
      %942 = vperm.xlu0 %941, %v824
      %v943 = vpop.permute.xlu0 %942
      %946 = vset.pattern.permute.xlu0 0
      %947 = vperm.xlu0 %946, %v825
      %v948 = vpop.permute.xlu0 %947
      %951 = vset.pattern.permute.xlu0 0
      %952 = vperm.xlu0 %951, %v826
      %v953 = vpop.permute.xlu0 %952
      %956 = vset.pattern.permute.xlu0 0
      %957 = vperm.xlu0 %956, %v827
      %v958 = vpop.permute.xlu0 %957
      %961 = vset.pattern.permute.xlu0 0
      %962 = vperm.xlu0 %961, %v828
      %v963 = vpop.permute.xlu0 %962
      %966 = vset.pattern.permute.xlu0 0
      %967 = vperm.xlu0 %966, %v829
      %v968 = vpop.permute.xlu0 %967
      %971 = vset.pattern.permute.xlu0 0
      %972 = vperm.xlu0 %971, %v830
      %v973 = vpop.permute.xlu0 %972
      %976 = vset.pattern.permute.xlu0 0
      %977 = vperm.xlu0 %976, %v831
      %v978 = vpop.permute.xlu0 %977
      %981 = vset.pattern.permute.xlu0 0
      %982 = vperm.xlu0 %981, %v832
      %v983 = vpop.permute.xlu0 %982
      %986 = vset.pattern.permute.xlu0 0
      %987 = vperm.xlu0 %986, %v833
      %v988 = vpop.permute.xlu0 %987
      %991 = vset.pattern.permute.xlu0 0
      %992 = vperm.xlu0 %991, %v834
      %v993 = vpop.permute.xlu0 %992
      %996 = vset.pattern.permute.xlu0 0
      %997 = vperm.xlu0 %996, %v835
      %v998 = vpop.permute.xlu0 %997
      %1001 = vset.pattern.permute.xlu0 0
      %1002 = vperm.xlu0 %1001, %v836
      %v1003 = vpop.permute.xlu0 %1002
      %1006 = vset.pattern.permute.xlu0 0
      %1007 = vperm.xlu0 %1006, %v837
      %v1008 = vpop.permute.xlu0 %1007
      %1011 = vset.pattern.permute.xlu0 0
      %1012 = vperm.xlu0 %1011, %v838
      %v1013 = vpop.permute.xlu0 %1012
      %1016 = vset.pattern.permute.xlu0 0
      %1017 = vperm.xlu0 %1016, %v839
      %v1018 = vpop.permute.xlu0 %1017
      %1021 = vset.pattern.permute.xlu0 0
      %1022 = vperm.xlu0 %1021, %v840
      %v1023 = vpop.permute.xlu0 %1022
      %1026 = vset.pattern.permute.xlu0 0
      %1027 = vperm.xlu0 %1026, %v841
      %v1028 = vpop.permute.xlu0 %1027
      %1031 = vset.pattern.permute.xlu0 0
      %1032 = vperm.xlu0 %1031, %v842
      %v1033 = vpop.permute.xlu0 %1032
      %1036 = vset.pattern.permute.xlu0 0
      %1037 = vperm.xlu0 %1036, %v843
      %v1038 = vpop.permute.xlu0 %1037
      %1041 = vset.pattern.permute.xlu0 0
      %1042 = vperm.xlu0 %1041, %v844
      %v1043 = vpop.permute.xlu0 %1042
      %1046 = vset.pattern.permute.xlu0 0
      %1047 = vperm.xlu0 %1046, %v845
      %v1048 = vpop.permute.xlu0 %1047
      %1051 = vset.pattern.permute.xlu0 0
      %1052 = vperm.xlu0 %1051, %v846
      %v1053 = vpop.permute.xlu0 %1052
      %1056 = vset.pattern.permute.xlu0 0
      %1057 = vperm.xlu0 %1056, %v847
      %v1058 = vpop.permute.xlu0 %1057
      %1061 = vset.pattern.permute.xlu0 0
      %1062 = vperm.xlu0 %1061, %v848
      %v1063 = vpop.permute.xlu0 %1062
      %1066 = vset.pattern.permute.xlu0 0
      %1067 = vperm.xlu0 %1066, %v849
      %v1068 = vpop.permute.xlu0 %1067
      %1071 = vset.pattern.permute.xlu0 0
      %1072 = vperm.xlu0 %1071, %v850
      %v1073 = vpop.permute.xlu0 %1072
      %1076 = vset.pattern.permute.xlu0 0
      %1077 = vperm.xlu0 %1076, %v851
      %v1078 = vpop.permute.xlu0 %1077
      %1081 = vset.pattern.permute.xlu0 0
      %1082 = vperm.xlu0 %1081, %v852
      %v1083 = vpop.permute.xlu0 %1082
      %1086 = vset.pattern.permute.xlu0 0
      %1087 = vperm.xlu0 %1086, %v853
      %v1088 = vpop.permute.xlu0 %1087
      %1091 = vset.pattern.permute.xlu0 0
      %1092 = vperm.xlu0 %1091, %v854
      %v1093 = vpop.permute.xlu0 %1092
      %1096 = vset.pattern.permute.xlu0 0
      %1097 = vperm.xlu0 %1096, %v855
      %v1098 = vpop.permute.xlu0 %1097
      %1101 = vset.pattern.permute.xlu0 0
      %1102 = vperm.xlu0 %1101, %v856
      %v1103 = vpop.permute.xlu0 %1102
      %1106 = vset.pattern.permute.xlu0 0
      %1107 = vperm.xlu0 %1106, %v857
      %v1108 = vpop.permute.xlu0 %1107
      %1111 = vset.pattern.permute.xlu0 0
      %1112 = vperm.xlu0 %1111, %v858
      %v1113 = vpop.permute.xlu0 %1112
      %1116 = vset.pattern.permute.xlu0 0
      %1117 = vperm.xlu0 %1116, %v859
      %v1118 = vpop.permute.xlu0 %1117
      %1121 = vset.pattern.permute.xlu0 0
      %1122 = vperm.xlu0 %1121, %v860
      %v1123 = vpop.permute.xlu0 %1122
      %1126 = vset.pattern.permute.xlu0 0
      %1127 = vperm.xlu0 %1126, %v861
      %v1128 = vpop.permute.xlu0 %1127
      %1131 = vset.pattern.permute.xlu0 0
      %1132 = vperm.xlu0 %1131, %v862
      %v1133 = vpop.permute.xlu0 %1132
      %v1136 = vperm.slane %v864, 0
      %v1138 = vmul.f32 %v868, %v1136
      %v1139 = vmul.f32 %v873, %v1136
      %v1140 = vmul.f32 %v878, %v1136
      %v1141 = vmul.f32 %v883, %v1136
      %v1142 = vmul.f32 %v888, %v1136
      %v1143 = vmul.f32 %v893, %v1136
      %v1144 = vmul.f32 %v898, %v1136
      %v1145 = vmul.f32 %v903, %v1136
      %v1146 = vmul.f32 %v908, %v1136
      %v1147 = vmul.f32 %v913, %v1136
      %v1148 = vmul.f32 %v918, %v1136
      %v1149 = vmul.f32 %v923, %v1136
      %v1150 = vmul.f32 %v928, %v1136
      %v1151 = vmul.f32 %v933, %v1136
      %v1152 = vmul.f32 %v938, %v1136
      %v1153 = vmul.f32 %v943, %v1136
      %v1154 = vmul.f32 %v948, %v1136
      %v1155 = vmul.f32 %v953, %v1136
      %v1156 = vmul.f32 %v958, %v1136
      %v1157 = vmul.f32 %v963, %v1136
      %v1158 = vmul.f32 %v968, %v1136
      %v1159 = vmul.f32 %v973, %v1136
      %v1160 = vmul.f32 %v978, %v1136
      %v1161 = vmul.f32 %v983, %v1136
      %v1162 = vmul.f32 %v988, %v1136
      %v1163 = vmul.f32 %v993, %v1136
      %v1164 = vmul.f32 %v998, %v1136
      %v1165 = vmul.f32 %v1003, %v1136
      %v1166 = vmul.f32 %v1008, %v1136
      %v1167 = vmul.f32 %v1013, %v1136
      %v1168 = vmul.f32 %v1018, %v1136
      %v1169 = vmul.f32 %v1023, %v1136
      %v1170 = vmul.f32 %v1028, %v1136
      %v1171 = vmul.f32 %v1033, %v1136
      %v1172 = vmul.f32 %v1038, %v1136
      %v1173 = vmul.f32 %v1043, %v1136
      %v1174 = vmul.f32 %v1048, %v1136
      %v1175 = vmul.f32 %v1053, %v1136
      %v1176 = vmul.f32 %v1058, %v1136
      %v1177 = vmul.f32 %v1063, %v1136
      %v1178 = vmul.f32 %v1068, %v1136
      %v1179 = vmul.f32 %v1073, %v1136
      %v1180 = vmul.f32 %v1078, %v1136
      %v1181 = vmul.f32 %v1083, %v1136
      %v1182 = vmul.f32 %v1088, %v1136
      %v1183 = vmul.f32 %v1093, %v1136
      %v1184 = vmul.f32 %v1098, %v1136
      %v1185 = vmul.f32 %v1103, %v1136
      %v1186 = vmul.f32 %v1108, %v1136
      %v1187 = vmul.f32 %v1113, %v1136
      %v1188 = vmul.f32 %v1118, %v1136
      %v1189 = vmul.f32 %v1123, %v1136
      %v1190 = vmul.f32 %v1128, %v1136
      %v1191 = vmul.f32 %v1133, %v1136
      %v1192 = vadd.f32 %v755, %v1138
      %v1193 = vadd.f32 %v756, %v1139
      %v1194 = vadd.f32 %v757, %v1140
      %v1195 = vadd.f32 %v758, %v1141
      %v1196 = vadd.f32 %v759, %v1142
      %v1197 = vadd.f32 %v760, %v1143
      %v1198 = vadd.f32 %v761, %v1144
      %v1199 = vadd.f32 %v762, %v1145
      %v1200 = vadd.f32 %v763, %v1146
      %v1201 = vadd.f32 %v764, %v1147
      %v1202 = vadd.f32 %v765, %v1148
      %v1203 = vadd.f32 %v766, %v1149
      %v1204 = vadd.f32 %v767, %v1150
      %v1205 = vadd.f32 %v768, %v1151
      %v1206 = vadd.f32 %v769, %v1152
      %v1207 = vadd.f32 %v770, %v1153
      %v1208 = vadd.f32 %v771, %v1154
      %v1209 = vadd.f32 %v772, %v1155
      %v1210 = vadd.f32 %v773, %v1156
      %v1211 = vadd.f32 %v774, %v1157
      %v1212 = vadd.f32 %v775, %v1158
      %v1213 = vadd.f32 %v776, %v1159
      %v1214 = vadd.f32 %v777, %v1160
      %v1215 = vadd.f32 %v778, %v1161
      %v1216 = vadd.f32 %v779, %v1162
      %v1217 = vadd.f32 %v780, %v1163
      %v1218 = vadd.f32 %v781, %v1164
      %v1219 = vadd.f32 %v782, %v1165
      %v1220 = vadd.f32 %v783, %v1166
      %v1221 = vadd.f32 %v784, %v1167
      %v1222 = vadd.f32 %v785, %v1168
      %v1223 = vadd.f32 %v786, %v1169
      %v1224 = vadd.f32 %v787, %v1170
      %v1225 = vadd.f32 %v788, %v1171
      %v1226 = vadd.f32 %v789, %v1172
      %v1227 = vadd.f32 %v790, %v1173
      %v1228 = vadd.f32 %v791, %v1174
      %v1229 = vadd.f32 %v792, %v1175
      %v1230 = vadd.f32 %v793, %v1176
      %v1231 = vadd.f32 %v794, %v1177
      %v1232 = vadd.f32 %v795, %v1178
      %v1233 = vadd.f32 %v796, %v1179
      %v1234 = vadd.f32 %v797, %v1180
      %v1235 = vadd.f32 %v798, %v1181
      %v1236 = vadd.f32 %v799, %v1182
      %v1237 = vadd.f32 %v800, %v1183
      %v1238 = vadd.f32 %v801, %v1184
      %v1239 = vadd.f32 %v802, %v1185
      %v1240 = vadd.f32 %v803, %v1186
      %v1241 = vadd.f32 %v804, %v1187
      %v1242 = vadd.f32 %v805, %v1188
      %v1243 = vadd.f32 %v806, %v1189
      %v1244 = vadd.f32 %v807, %v1190
      %v1245 = vadd.f32 %v808, %v1191
      %s1246 = scalar_lea.vmem [#allocation2], 32
      %v1247 = vld [vmem:[%s1246] sm:$0xff]
      %v1248 = vld [vmem:[%s1246 + $0x8] sm:$0xff]
      %v1249 = vld [vmem:[%s1246 + $0x10] sm:$0xff]
      %v1250 = vld [vmem:[%s1246 + $0x20] sm:$0xff]
      %v1251 = vld [vmem:[%s1246 + $0x28] sm:$0xff]
      %v1252 = vld [vmem:[%s1246 + $0x30] sm:$0xff]
      %v1253 = vld [vmem:[%s1246 + $0x40] sm:$0xff]
      %v1254 = vld [vmem:[%s1246 + $0x48] sm:$0xff]
      %v1255 = vld [vmem:[%s1246 + $0x50] sm:$0xff]
      %v1256 = vld [vmem:[%s1246 + $0x60] sm:$0xff]
      %v1257 = vld [vmem:[%s1246 + $0x68] sm:$0xff]
      %v1258 = vld [vmem:[%s1246 + $0x70] sm:$0xff]
      %v1259 = vld [vmem:[%s1246 + $0x80] sm:$0xff]
      %v1260 = vld [vmem:[%s1246 + $0x88] sm:$0xff]
      %v1261 = vld [vmem:[%s1246 + $0x90] sm:$0xff]
      %v1262 = vld [vmem:[%s1246 + $0xa0] sm:$0xff]
      %v1263 = vld [vmem:[%s1246 + $0xa8] sm:$0xff]
      %v1264 = vld [vmem:[%s1246 + $0xb0] sm:$0xff]
      %v1265 = vld [vmem:[%s1246 + $0xc0] sm:$0xff]
      %v1266 = vld [vmem:[%s1246 + $0xc8] sm:$0xff]
      %v1267 = vld [vmem:[%s1246 + $0xd0] sm:$0xff]
      %v1268 = vld [vmem:[%s1246 + $0xe0] sm:$0xff]
      %v1269 = vld [vmem:[%s1246 + $0xe8] sm:$0xff]
      %v1270 = vld [vmem:[%s1246 + $0xf0] sm:$0xff]
      %v1271 = vld [vmem:[%s1246 + $0x100] sm:$0xff]
      %v1272 = vld [vmem:[%s1246 + $0x108] sm:$0xff]
      %v1273 = vld [vmem:[%s1246 + $0x110] sm:$0xff]
      %v1274 = vld [vmem:[%s1246 + $0x120] sm:$0xff]
      %v1275 = vld [vmem:[%s1246 + $0x128] sm:$0xff]
      %v1276 = vld [vmem:[%s1246 + $0x130] sm:$0xff]
      %v1277 = vld [vmem:[%s1246 + $0x140] sm:$0xff]
      %v1278 = vld [vmem:[%s1246 + $0x148] sm:$0xff]
      %v1279 = vld [vmem:[%s1246 + $0x150] sm:$0xff]
      %v1280 = vld [vmem:[%s1246 + $0x160] sm:$0xff]
      %v1281 = vld [vmem:[%s1246 + $0x168] sm:$0xff]
      %v1282 = vld [vmem:[%s1246 + $0x170] sm:$0xff]
      %v1283 = vld [vmem:[%s1246 + $0x180] sm:$0xff]
      %v1284 = vld [vmem:[%s1246 + $0x188] sm:$0xff]
      %v1285 = vld [vmem:[%s1246 + $0x190] sm:$0xff]
      %v1286 = vld [vmem:[%s1246 + $0x1a0] sm:$0xff]
      %v1287 = vld [vmem:[%s1246 + $0x1a8] sm:$0xff]
      %v1288 = vld [vmem:[%s1246 + $0x1b0] sm:$0xff]
      %v1289 = vld [vmem:[%s1246 + $0x1c0] sm:$0xff]
      %v1290 = vld [vmem:[%s1246 + $0x1c8] sm:$0xff]
      %v1291 = vld [vmem:[%s1246 + $0x1d0] sm:$0xff]
      %v1292 = vld [vmem:[%s1246 + $0x1e0] sm:$0xff]
      %v1293 = vld [vmem:[%s1246 + $0x1e8] sm:$0xff]
      %v1294 = vld [vmem:[%s1246 + $0x1f0] sm:$0xff]
      %v1295 = vld [vmem:[%s1246 + $0x200] sm:$0xff]
      %v1296 = vld [vmem:[%s1246 + $0x208] sm:$0xff]
      %v1297 = vld [vmem:[%s1246 + $0x210] sm:$0xff]
      %v1298 = vld [vmem:[%s1246 + $0x220] sm:$0xff]
      %v1299 = vld [vmem:[%s1246 + $0x228] sm:$0xff]
      %v1300 = vld [vmem:[%s1246 + $0x230] sm:$0xff]
      %s1301 = scalar_lea.vmem %s1, 2
      %v1302 = vld [vmem:[%s1301] sm:$0x1]
      %1304 = vset.pattern.permute.xlu0 0
      %1305 = vperm.xlu0 %1304, %v1247
      %v1306 = vpop.permute.xlu0 %1305
      %1309 = vset.pattern.permute.xlu0 0
      %1310 = vperm.xlu0 %1309, %v1248
      %v1311 = vpop.permute.xlu0 %1310
      %1314 = vset.pattern.permute.xlu0 0
      %1315 = vperm.xlu0 %1314, %v1249
      %v1316 = vpop.permute.xlu0 %1315
      %1319 = vset.pattern.permute.xlu0 0
      %1320 = vperm.xlu0 %1319, %v1250
      %v1321 = vpop.permute.xlu0 %1320
      %1324 = vset.pattern.permute.xlu0 0
      %1325 = vperm.xlu0 %1324, %v1251
      %v1326 = vpop.permute.xlu0 %1325
      %1329 = vset.pattern.permute.xlu0 0
      %1330 = vperm.xlu0 %1329, %v1252
      %v1331 = vpop.permute.xlu0 %1330
      %1334 = vset.pattern.permute.xlu0 0
      %1335 = vperm.xlu0 %1334, %v1253
      %v1336 = vpop.permute.xlu0 %1335
      %1339 = vset.pattern.permute.xlu0 0
      %1340 = vperm.xlu0 %1339, %v1254
      %v1341 = vpop.permute.xlu0 %1340
      %1344 = vset.pattern.permute.xlu0 0
      %1345 = vperm.xlu0 %1344, %v1255
      %v1346 = vpop.permute.xlu0 %1345
      %1349 = vset.pattern.permute.xlu0 0
      %1350 = vperm.xlu0 %1349, %v1256
      %v1351 = vpop.permute.xlu0 %1350
      %1354 = vset.pattern.permute.xlu0 0
      %1355 = vperm.xlu0 %1354, %v1257
      %v1356 = vpop.permute.xlu0 %1355
      %1359 = vset.pattern.permute.xlu0 0
      %1360 = vperm.xlu0 %1359, %v1258
      %v1361 = vpop.permute.xlu0 %1360
      %1364 = vset.pattern.permute.xlu0 0
      %1365 = vperm.xlu0 %1364, %v1259
      %v1366 = vpop.permute.xlu0 %1365
      %1369 = vset.pattern.permute.xlu0 0
      %1370 = vperm.xlu0 %1369, %v1260
      %v1371 = vpop.permute.xlu0 %1370
      %1374 = vset.pattern.permute.xlu0 0
      %1375 = vperm.xlu0 %1374, %v1261
      %v1376 = vpop.permute.xlu0 %1375
      %1379 = vset.pattern.permute.xlu0 0
      %1380 = vperm.xlu0 %1379, %v1262
      %v1381 = vpop.permute.xlu0 %1380
      %1384 = vset.pattern.permute.xlu0 0
      %1385 = vperm.xlu0 %1384, %v1263
      %v1386 = vpop.permute.xlu0 %1385
      %1389 = vset.pattern.permute.xlu0 0
      %1390 = vperm.xlu0 %1389, %v1264
      %v1391 = vpop.permute.xlu0 %1390
      %1394 = vset.pattern.permute.xlu0 0
      %1395 = vperm.xlu0 %1394, %v1265
      %v1396 = vpop.permute.xlu0 %1395
      %1399 = vset.pattern.permute.xlu0 0
      %1400 = vperm.xlu0 %1399, %v1266
      %v1401 = vpop.permute.xlu0 %1400
      %1404 = vset.pattern.permute.xlu0 0
      %1405 = vperm.xlu0 %1404, %v1267
      %v1406 = vpop.permute.xlu0 %1405
      %1409 = vset.pattern.permute.xlu0 0
      %1410 = vperm.xlu0 %1409, %v1268
      %v1411 = vpop.permute.xlu0 %1410
      %1414 = vset.pattern.permute.xlu0 0
      %1415 = vperm.xlu0 %1414, %v1269
      %v1416 = vpop.permute.xlu0 %1415
      %1419 = vset.pattern.permute.xlu0 0
      %1420 = vperm.xlu0 %1419, %v1270
      %v1421 = vpop.permute.xlu0 %1420
      %1424 = vset.pattern.permute.xlu0 0
      %1425 = vperm.xlu0 %1424, %v1271
      %v1426 = vpop.permute.xlu0 %1425
      %1429 = vset.pattern.permute.xlu0 0
      %1430 = vperm.xlu0 %1429, %v1272
      %v1431 = vpop.permute.xlu0 %1430
      %1434 = vset.pattern.permute.xlu0 0
      %1435 = vperm.xlu0 %1434, %v1273
      %v1436 = vpop.permute.xlu0 %1435
      %1439 = vset.pattern.permute.xlu0 0
      %1440 = vperm.xlu0 %1439, %v1274
      %v1441 = vpop.permute.xlu0 %1440
      %1444 = vset.pattern.permute.xlu0 0
      %1445 = vperm.xlu0 %1444, %v1275
      %v1446 = vpop.permute.xlu0 %1445
      %1449 = vset.pattern.permute.xlu0 0
      %1450 = vperm.xlu0 %1449, %v1276
      %v1451 = vpop.permute.xlu0 %1450
      %1454 = vset.pattern.permute.xlu0 0
      %1455 = vperm.xlu0 %1454, %v1277
      %v1456 = vpop.permute.xlu0 %1455
      %1459 = vset.pattern.permute.xlu0 0
      %1460 = vperm.xlu0 %1459, %v1278
      %v1461 = vpop.permute.xlu0 %1460
      %1464 = vset.pattern.permute.xlu0 0
      %1465 = vperm.xlu0 %1464, %v1279
      %v1466 = vpop.permute.xlu0 %1465
      %1469 = vset.pattern.permute.xlu0 0
      %1470 = vperm.xlu0 %1469, %v1280
      %v1471 = vpop.permute.xlu0 %1470
      %1474 = vset.pattern.permute.xlu0 0
      %1475 = vperm.xlu0 %1474, %v1281
      %v1476 = vpop.permute.xlu0 %1475
      %1479 = vset.pattern.permute.xlu0 0
      %1480 = vperm.xlu0 %1479, %v1282
      %v1481 = vpop.permute.xlu0 %1480
      %1484 = vset.pattern.permute.xlu0 0
      %1485 = vperm.xlu0 %1484, %v1283
      %v1486 = vpop.permute.xlu0 %1485
      %1489 = vset.pattern.permute.xlu0 0
      %1490 = vperm.xlu0 %1489, %v1284
      %v1491 = vpop.permute.xlu0 %1490
      %1494 = vset.pattern.permute.xlu0 0
      %1495 = vperm.xlu0 %1494, %v1285
      %v1496 = vpop.permute.xlu0 %1495
      %1499 = vset.pattern.permute.xlu0 0
      %1500 = vperm.xlu0 %1499, %v1286
      %v1501 = vpop.permute.xlu0 %1500
      %1504 = vset.pattern.permute.xlu0 0
      %1505 = vperm.xlu0 %1504, %v1287
      %v1506 = vpop.permute.xlu0 %1505
      %1509 = vset.pattern.permute.xlu0 0
      %1510 = vperm.xlu0 %1509, %v1288
      %v1511 = vpop.permute.xlu0 %1510
      %1514 = vset.pattern.permute.xlu0 0
      %1515 = vperm.xlu0 %1514, %v1289
      %v1516 = vpop.permute.xlu0 %1515
      %1519 = vset.pattern.permute.xlu0 0
      %1520 = vperm.xlu0 %1519, %v1290
      %v1521 = vpop.permute.xlu0 %1520
      %1524 = vset.pattern.permute.xlu0 0
      %1525 = vperm.xlu0 %1524, %v1291
      %v1526 = vpop.permute.xlu0 %1525
      %1529 = vset.pattern.permute.xlu0 0
      %1530 = vperm.xlu0 %1529, %v1292
      %v1531 = vpop.permute.xlu0 %1530
      %1534 = vset.pattern.permute.xlu0 0
      %1535 = vperm.xlu0 %1534, %v1293
      %v1536 = vpop.permute.xlu0 %1535
      %1539 = vset.pattern.permute.xlu0 0
      %1540 = vperm.xlu0 %1539, %v1294
      %v1541 = vpop.permute.xlu0 %1540
      %1544 = vset.pattern.permute.xlu0 0
      %1545 = vperm.xlu0 %1544, %v1295
      %v1546 = vpop.permute.xlu0 %1545
      %1549 = vset.pattern.permute.xlu0 0
      %1550 = vperm.xlu0 %1549, %v1296
      %v1551 = vpop.permute.xlu0 %1550
      %1554 = vset.pattern.permute.xlu0 0
      %1555 = vperm.xlu0 %1554, %v1297
      %v1556 = vpop.permute.xlu0 %1555
      %1559 = vset.pattern.permute.xlu0 0
      %1560 = vperm.xlu0 %1559, %v1298
      %v1561 = vpop.permute.xlu0 %1560
      %1564 = vset.pattern.permute.xlu0 0
      %1565 = vperm.xlu0 %1564, %v1299
      %v1566 = vpop.permute.xlu0 %1565
      %1569 = vset.pattern.permute.xlu0 0
      %1570 = vperm.xlu0 %1569, %v1300
      %v1571 = vpop.permute.xlu0 %1570
      %v1574 = vperm.slane %v1302, 0
      %v1576 = vmul.f32 %v1306, %v1574
      %v1577 = vmul.f32 %v1311, %v1574
      %v1578 = vmul.f32 %v1316, %v1574
      %v1579 = vmul.f32 %v1321, %v1574
      %v1580 = vmul.f32 %v1326, %v1574
      %v1581 = vmul.f32 %v1331, %v1574
      %v1582 = vmul.f32 %v1336, %v1574
      %v1583 = vmul.f32 %v1341, %v1574
      %v1584 = vmul.f32 %v1346, %v1574
      %v1585 = vmul.f32 %v1351, %v1574
      %v1586 = vmul.f32 %v1356, %v1574
      %v1587 = vmul.f32 %v1361, %v1574
      %v1588 = vmul.f32 %v1366, %v1574
      %v1589 = vmul.f32 %v1371, %v1574
      %v1590 = vmul.f32 %v1376, %v1574
      %v1591 = vmul.f32 %v1381, %v1574
      %v1592 = vmul.f32 %v1386, %v1574
      %v1593 = vmul.f32 %v1391, %v1574
      %v1594 = vmul.f32 %v1396, %v1574
      %v1595 = vmul.f32 %v1401, %v1574
      %v1596 = vmul.f32 %v1406, %v1574
      %v1597 = vmul.f32 %v1411, %v1574
      %v1598 = vmul.f32 %v1416, %v1574
      %v1599 = vmul.f32 %v1421, %v1574
      %v1600 = vmul.f32 %v1426, %v1574
      %v1601 = vmul.f32 %v1431, %v1574
      %v1602 = vmul.f32 %v1436, %v1574
      %v1603 = vmul.f32 %v1441, %v1574
      %v1604 = vmul.f32 %v1446, %v1574
      %v1605 = vmul.f32 %v1451, %v1574
      %v1606 = vmul.f32 %v1456, %v1574
      %v1607 = vmul.f32 %v1461, %v1574
      %v1608 = vmul.f32 %v1466, %v1574
      %v1609 = vmul.f32 %v1471, %v1574
      %v1610 = vmul.f32 %v1476, %v1574
      %v1611 = vmul.f32 %v1481, %v1574
      %v1612 = vmul.f32 %v1486, %v1574
      %v1613 = vmul.f32 %v1491, %v1574
      %v1614 = vmul.f32 %v1496, %v1574
      %v1615 = vmul.f32 %v1501, %v1574
      %v1616 = vmul.f32 %v1506, %v1574
      %v1617 = vmul.f32 %v1511, %v1574
      %v1618 = vmul.f32 %v1516, %v1574
      %v1619 = vmul.f32 %v1521, %v1574
      %v1620 = vmul.f32 %v1526, %v1574
      %v1621 = vmul.f32 %v1531, %v1574
      %v1622 = vmul.f32 %v1536, %v1574
      %v1623 = vmul.f32 %v1541, %v1574
      %v1624 = vmul.f32 %v1546, %v1574
      %v1625 = vmul.f32 %v1551, %v1574
      %v1626 = vmul.f32 %v1556, %v1574
      %v1627 = vmul.f32 %v1561, %v1574
      %v1628 = vmul.f32 %v1566, %v1574
      %v1629 = vmul.f32 %v1571, %v1574
      %v1630 = vadd.f32 %v1192, %v1576
      %v1631 = vadd.f32 %v1193, %v1577
      %v1632 = vadd.f32 %v1194, %v1578
      %v1633 = vadd.f32 %v1195, %v1579
      %v1634 = vadd.f32 %v1196, %v1580
      %v1635 = vadd.f32 %v1197, %v1581
      %v1636 = vadd.f32 %v1198, %v1582
      %v1637 = vadd.f32 %v1199, %v1583
      %v1638 = vadd.f32 %v1200, %v1584
      %v1639 = vadd.f32 %v1201, %v1585
      %v1640 = vadd.f32 %v1202, %v1586
      %v1641 = vadd.f32 %v1203, %v1587
      %v1642 = vadd.f32 %v1204, %v1588
      %v1643 = vadd.f32 %v1205, %v1589
      %v1644 = vadd.f32 %v1206, %v1590
      %v1645 = vadd.f32 %v1207, %v1591
      %v1646 = vadd.f32 %v1208, %v1592
      %v1647 = vadd.f32 %v1209, %v1593
      %v1648 = vadd.f32 %v1210, %v1594
      %v1649 = vadd.f32 %v1211, %v1595
      %v1650 = vadd.f32 %v1212, %v1596
      %v1651 = vadd.f32 %v1213, %v1597
      %v1652 = vadd.f32 %v1214, %v1598
      %v1653 = vadd.f32 %v1215, %v1599
      %v1654 = vadd.f32 %v1216, %v1600
      %v1655 = vadd.f32 %v1217, %v1601
      %v1656 = vadd.f32 %v1218, %v1602
      %v1657 = vadd.f32 %v1219, %v1603
      %v1658 = vadd.f32 %v1220, %v1604
      %v1659 = vadd.f32 %v1221, %v1605
      %v1660 = vadd.f32 %v1222, %v1606
      %v1661 = vadd.f32 %v1223, %v1607
      %v1662 = vadd.f32 %v1224, %v1608
      %v1663 = vadd.f32 %v1225, %v1609
      %v1664 = vadd.f32 %v1226, %v1610
      %v1665 = vadd.f32 %v1227, %v1611
      %v1666 = vadd.f32 %v1228, %v1612
      %v1667 = vadd.f32 %v1229, %v1613
      %v1668 = vadd.f32 %v1230, %v1614
      %v1669 = vadd.f32 %v1231, %v1615
      %v1670 = vadd.f32 %v1232, %v1616
      %v1671 = vadd.f32 %v1233, %v1617
      %v1672 = vadd.f32 %v1234, %v1618
      %v1673 = vadd.f32 %v1235, %v1619
      %v1674 = vadd.f32 %v1236, %v1620
      %v1675 = vadd.f32 %v1237, %v1621
      %v1676 = vadd.f32 %v1238, %v1622
      %v1677 = vadd.f32 %v1239, %v1623
      %v1678 = vadd.f32 %v1240, %v1624
      %v1679 = vadd.f32 %v1241, %v1625
      %v1680 = vadd.f32 %v1242, %v1626
      %v1681 = vadd.f32 %v1243, %v1627
      %v1682 = vadd.f32 %v1244, %v1628
      %v1683 = vadd.f32 %v1245, %v1629
      %v1684 = vld [vmem:[%s1246 + $0x1] sm:$0xff]
      %v1685 = vld [vmem:[%s1246 + $0x9] sm:$0xff]
      %v1686 = vld [vmem:[%s1246 + $0x11] sm:$0xff]
      %v1687 = vld [vmem:[%s1246 + $0x21] sm:$0xff]
      %v1688 = vld [vmem:[%s1246 + $0x29] sm:$0xff]
      %v1689 = vld [vmem:[%s1246 + $0x31] sm:$0xff]
      %v1690 = vld [vmem:[%s1246 + $0x41] sm:$0xff]
      %v1691 = vld [vmem:[%s1246 + $0x49] sm:$0xff]
      %v1692 = vld [vmem:[%s1246 + $0x51] sm:$0xff]
      %v1693 = vld [vmem:[%s1246 + $0x61] sm:$0xff]
      %v1694 = vld [vmem:[%s1246 + $0x69] sm:$0xff]
      %v1695 = vld [vmem:[%s1246 + $0x71] sm:$0xff]
      %v1696 = vld [vmem:[%s1246 + $0x81] sm:$0xff]
      %v1697 = vld [vmem:[%s1246 + $0x89] sm:$0xff]
      %v1698 = vld [vmem:[%s1246 + $0x91] sm:$0xff]
      %v1699 = vld [vmem:[%s1246 + $0xa1] sm:$0xff]
      %v1700 = vld [vmem:[%s1246 + $0xa9] sm:$0xff]
      %v1701 = vld [vmem:[%s1246 + $0xb1] sm:$0xff]
      %v1702 = vld [vmem:[%s1246 + $0xc1] sm:$0xff]
      %v1703 = vld [vmem:[%s1246 + $0xc9] sm:$0xff]
      %v1704 = vld [vmem:[%s1246 + $0xd1] sm:$0xff]
      %v1705 = vld [vmem:[%s1246 + $0xe1] sm:$0xff]
      %v1706 = vld [vmem:[%s1246 + $0xe9] sm:$0xff]
      %v1707 = vld [vmem:[%s1246 + $0xf1] sm:$0xff]
      %v1708 = vld [vmem:[%s1246 + $0x101] sm:$0xff]
      %v1709 = vld [vmem:[%s1246 + $0x109] sm:$0xff]
      %v1710 = vld [vmem:[%s1246 + $0x111] sm:$0xff]
      %v1711 = vld [vmem:[%s1246 + $0x121] sm:$0xff]
      %v1712 = vld [vmem:[%s1246 + $0x129] sm:$0xff]
      %v1713 = vld [vmem:[%s1246 + $0x131] sm:$0xff]
      %v1714 = vld [vmem:[%s1246 + $0x141] sm:$0xff]
      %v1715 = vld [vmem:[%s1246 + $0x149] sm:$0xff]
      %v1716 = vld [vmem:[%s1246 + $0x151] sm:$0xff]
      %v1717 = vld [vmem:[%s1246 + $0x161] sm:$0xff]
      %v1718 = vld [vmem:[%s1246 + $0x169] sm:$0xff]
      %v1719 = vld [vmem:[%s1246 + $0x171] sm:$0xff]
      %v1720 = vld [vmem:[%s1246 + $0x181] sm:$0xff]
      %v1721 = vld [vmem:[%s1246 + $0x189] sm:$0xff]
      %v1722 = vld [vmem:[%s1246 + $0x191] sm:$0xff]
      %v1723 = vld [vmem:[%s1246 + $0x1a1] sm:$0xff]
      %v1724 = vld [vmem:[%s1246 + $0x1a9] sm:$0xff]
      %v1725 = vld [vmem:[%s1246 + $0x1b1] sm:$0xff]
      %v1726 = vld [vmem:[%s1246 + $0x1c1] sm:$0xff]
      %v1727 = vld [vmem:[%s1246 + $0x1c9] sm:$0xff]
      %v1728 = vld [vmem:[%s1246 + $0x1d1] sm:$0xff]
      %v1729 = vld [vmem:[%s1246 + $0x1e1] sm:$0xff]
      %v1730 = vld [vmem:[%s1246 + $0x1e9] sm:$0xff]
      %v1731 = vld [vmem:[%s1246 + $0x1f1] sm:$0xff]
      %v1732 = vld [vmem:[%s1246 + $0x201] sm:$0xff]
      %v1733 = vld [vmem:[%s1246 + $0x209] sm:$0xff]
      %v1734 = vld [vmem:[%s1246 + $0x211] sm:$0xff]
      %v1735 = vld [vmem:[%s1246 + $0x221] sm:$0xff]
      %v1736 = vld [vmem:[%s1246 + $0x229] sm:$0xff]
      %v1737 = vld [vmem:[%s1246 + $0x231] sm:$0xff]
      %s1738 = scalar_lea.vmem %s1, 3
      %v1739 = vld [vmem:[%s1738] sm:$0x1]
      %1741 = vset.pattern.permute.xlu0 0
      %1742 = vperm.xlu0 %1741, %v1684
      %v1743 = vpop.permute.xlu0 %1742
      %1746 = vset.pattern.permute.xlu0 0
      %1747 = vperm.xlu0 %1746, %v1685
      %v1748 = vpop.permute.xlu0 %1747
      %1751 = vset.pattern.permute.xlu0 0
      %1752 = vperm.xlu0 %1751, %v1686
      %v1753 = vpop.permute.xlu0 %1752
      %1756 = vset.pattern.permute.xlu0 0
      %1757 = vperm.xlu0 %1756, %v1687
      %v1758 = vpop.permute.xlu0 %1757
      %1761 = vset.pattern.permute.xlu0 0
      %1762 = vperm.xlu0 %1761, %v1688
      %v1763 = vpop.permute.xlu0 %1762
      %1766 = vset.pattern.permute.xlu0 0
      %1767 = vperm.xlu0 %1766, %v1689
      %v1768 = vpop.permute.xlu0 %1767
      %1771 = vset.pattern.permute.xlu0 0
      %1772 = vperm.xlu0 %1771, %v1690
      %v1773 = vpop.permute.xlu0 %1772
      %1776 = vset.pattern.permute.xlu0 0
      %1777 = vperm.xlu0 %1776, %v1691
      %v1778 = vpop.permute.xlu0 %1777
      %1781 = vset.pattern.permute.xlu0 0
      %1782 = vperm.xlu0 %1781, %v1692
      %v1783 = vpop.permute.xlu0 %1782
      %1786 = vset.pattern.permute.xlu0 0
      %1787 = vperm.xlu0 %1786, %v1693
      %v1788 = vpop.permute.xlu0 %1787
      %1791 = vset.pattern.permute.xlu0 0
      %1792 = vperm.xlu0 %1791, %v1694
      %v1793 = vpop.permute.xlu0 %1792
      %1796 = vset.pattern.permute.xlu0 0
      %1797 = vperm.xlu0 %1796, %v1695
      %v1798 = vpop.permute.xlu0 %1797
      %1801 = vset.pattern.permute.xlu0 0
      %1802 = vperm.xlu0 %1801, %v1696
      %v1803 = vpop.permute.xlu0 %1802
      %1806 = vset.pattern.permute.xlu0 0
      %1807 = vperm.xlu0 %1806, %v1697
      %v1808 = vpop.permute.xlu0 %1807
      %1811 = vset.pattern.permute.xlu0 0
      %1812 = vperm.xlu0 %1811, %v1698
      %v1813 = vpop.permute.xlu0 %1812
      %1816 = vset.pattern.permute.xlu0 0
      %1817 = vperm.xlu0 %1816, %v1699
      %v1818 = vpop.permute.xlu0 %1817
      %1821 = vset.pattern.permute.xlu0 0
      %1822 = vperm.xlu0 %1821, %v1700
      %v1823 = vpop.permute.xlu0 %1822
      %1826 = vset.pattern.permute.xlu0 0
      %1827 = vperm.xlu0 %1826, %v1701
      %v1828 = vpop.permute.xlu0 %1827
      %1831 = vset.pattern.permute.xlu0 0
      %1832 = vperm.xlu0 %1831, %v1702
      %v1833 = vpop.permute.xlu0 %1832
      %1836 = vset.pattern.permute.xlu0 0
      %1837 = vperm.xlu0 %1836, %v1703
      %v1838 = vpop.permute.xlu0 %1837
      %1841 = vset.pattern.permute.xlu0 0
      %1842 = vperm.xlu0 %1841, %v1704
      %v1843 = vpop.permute.xlu0 %1842
      %1846 = vset.pattern.permute.xlu0 0
      %1847 = vperm.xlu0 %1846, %v1705
      %v1848 = vpop.permute.xlu0 %1847
      %1851 = vset.pattern.permute.xlu0 0
      %1852 = vperm.xlu0 %1851, %v1706
      %v1853 = vpop.permute.xlu0 %1852
      %1856 = vset.pattern.permute.xlu0 0
      %1857 = vperm.xlu0 %1856, %v1707
      %v1858 = vpop.permute.xlu0 %1857
      %1861 = vset.pattern.permute.xlu0 0
      %1862 = vperm.xlu0 %1861, %v1708
      %v1863 = vpop.permute.xlu0 %1862
      %1866 = vset.pattern.permute.xlu0 0
      %1867 = vperm.xlu0 %1866, %v1709
      %v1868 = vpop.permute.xlu0 %1867
      %1871 = vset.pattern.permute.xlu0 0
      %1872 = vperm.xlu0 %1871, %v1710
      %v1873 = vpop.permute.xlu0 %1872
      %1876 = vset.pattern.permute.xlu0 0
      %1877 = vperm.xlu0 %1876, %v1711
      %v1878 = vpop.permute.xlu0 %1877
      %1881 = vset.pattern.permute.xlu0 0
      %1882 = vperm.xlu0 %1881, %v1712
      %v1883 = vpop.permute.xlu0 %1882
      %1886 = vset.pattern.permute.xlu0 0
      %1887 = vperm.xlu0 %1886, %v1713
      %v1888 = vpop.permute.xlu0 %1887
      %1891 = vset.pattern.permute.xlu0 0
      %1892 = vperm.xlu0 %1891, %v1714
      %v1893 = vpop.permute.xlu0 %1892
      %1896 = vset.pattern.permute.xlu0 0
      %1897 = vperm.xlu0 %1896, %v1715
      %v1898 = vpop.permute.xlu0 %1897
      %1901 = vset.pattern.permute.xlu0 0
      %1902 = vperm.xlu0 %1901, %v1716
      %v1903 = vpop.permute.xlu0 %1902
      %1906 = vset.pattern.permute.xlu0 0
      %1907 = vperm.xlu0 %1906, %v1717
      %v1908 = vpop.permute.xlu0 %1907
      %1911 = vset.pattern.permute.xlu0 0
      %1912 = vperm.xlu0 %1911, %v1718
      %v1913 = vpop.permute.xlu0 %1912
      %1916 = vset.pattern.permute.xlu0 0
      %1917 = vperm.xlu0 %1916, %v1719
      %v1918 = vpop.permute.xlu0 %1917
      %1921 = vset.pattern.permute.xlu0 0
      %1922 = vperm.xlu0 %1921, %v1720
      %v1923 = vpop.permute.xlu0 %1922
      %1926 = vset.pattern.permute.xlu0 0
      %1927 = vperm.xlu0 %1926, %v1721
      %v1928 = vpop.permute.xlu0 %1927
      %1931 = vset.pattern.permute.xlu0 0
      %1932 = vperm.xlu0 %1931, %v1722
      %v1933 = vpop.permute.xlu0 %1932
      %1936 = vset.pattern.permute.xlu0 0
      %1937 = vperm.xlu0 %1936, %v1723
      %v1938 = vpop.permute.xlu0 %1937
      %1941 = vset.pattern.permute.xlu0 0
      %1942 = vperm.xlu0 %1941, %v1724
      %v1943 = vpop.permute.xlu0 %1942
      %1946 = vset.pattern.permute.xlu0 0
      %1947 = vperm.xlu0 %1946, %v1725
      %v1948 = vpop.permute.xlu0 %1947
      %1951 = vset.pattern.permute.xlu0 0
      %1952 = vperm.xlu0 %1951, %v1726
      %v1953 = vpop.permute.xlu0 %1952
      %1956 = vset.pattern.permute.xlu0 0
      %1957 = vperm.xlu0 %1956, %v1727
      %v1958 = vpop.permute.xlu0 %1957
      %1961 = vset.pattern.permute.xlu0 0
      %1962 = vperm.xlu0 %1961, %v1728
      %v1963 = vpop.permute.xlu0 %1962
      %1966 = vset.pattern.permute.xlu0 0
      %1967 = vperm.xlu0 %1966, %v1729
      %v1968 = vpop.permute.xlu0 %1967
      %1971 = vset.pattern.permute.xlu0 0
      %1972 = vperm.xlu0 %1971, %v1730
      %v1973 = vpop.permute.xlu0 %1972
      %1976 = vset.pattern.permute.xlu0 0
      %1977 = vperm.xlu0 %1976, %v1731
      %v1978 = vpop.permute.xlu0 %1977
      %1981 = vset.pattern.permute.xlu0 0
      %1982 = vperm.xlu0 %1981, %v1732
      %v1983 = vpop.permute.xlu0 %1982
      %1986 = vset.pattern.permute.xlu0 0
      %1987 = vperm.xlu0 %1986, %v1733
      %v1988 = vpop.permute.xlu0 %1987
      %1991 = vset.pattern.permute.xlu0 0
      %1992 = vperm.xlu0 %1991, %v1734
      %v1993 = vpop.permute.xlu0 %1992
      %1996 = vset.pattern.permute.xlu0 0
      %1997 = vperm.xlu0 %1996, %v1735
      %v1998 = vpop.permute.xlu0 %1997
      %2001 = vset.pattern.permute.xlu0 0
      %2002 = vperm.xlu0 %2001, %v1736
      %v2003 = vpop.permute.xlu0 %2002
      %2006 = vset.pattern.permute.xlu0 0
      %2007 = vperm.xlu0 %2006, %v1737
      %v2008 = vpop.permute.xlu0 %2007
      %v2011 = vperm.slane %v1739, 0
      %v2013 = vmul.f32 %v1743, %v2011
      %v2014 = vmul.f32 %v1748, %v2011
      %v2015 = vmul.f32 %v1753, %v2011
      %v2016 = vmul.f32 %v1758, %v2011
      %v2017 = vmul.f32 %v1763, %v2011
      %v2018 = vmul.f32 %v1768, %v2011
      %v2019 = vmul.f32 %v1773, %v2011
      %v2020 = vmul.f32 %v1778, %v2011
      %v2021 = vmul.f32 %v1783, %v2011
      %v2022 = vmul.f32 %v1788, %v2011
      %v2023 = vmul.f32 %v1793, %v2011
      %v2024 = vmul.f32 %v1798, %v2011
      %v2025 = vmul.f32 %v1803, %v2011
      %v2026 = vmul.f32 %v1808, %v2011
      %v2027 = vmul.f32 %v1813, %v2011
      %v2028 = vmul.f32 %v1818, %v2011
      %v2029 = vmul.f32 %v1823, %v2011
      %v2030 = vmul.f32 %v1828, %v2011
      %v2031 = vmul.f32 %v1833, %v2011
      %v2032 = vmul.f32 %v1838, %v2011
      %v2033 = vmul.f32 %v1843, %v2011
      %v2034 = vmul.f32 %v1848, %v2011
      %v2035 = vmul.f32 %v1853, %v2011
      %v2036 = vmul.f32 %v1858, %v2011
      %v2037 = vmul.f32 %v1863, %v2011
      %v2038 = vmul.f32 %v1868, %v2011
      %v2039 = vmul.f32 %v1873, %v2011
      %v2040 = vmul.f32 %v1878, %v2011
      %v2041 = vmul.f32 %v1883, %v2011
      %v2042 = vmul.f32 %v1888, %v2011
      %v2043 = vmul.f32 %v1893, %v2011
      %v2044 = vmul.f32 %v1898, %v2011
      %v2045 = vmul.f32 %v1903, %v2011
      %v2046 = vmul.f32 %v1908, %v2011
      %v2047 = vmul.f32 %v1913, %v2011
      %v2048 = vmul.f32 %v1918, %v2011
      %v2049 = vmul.f32 %v1923, %v2011
      %v2050 = vmul.f32 %v1928, %v2011
      %v2051 = vmul.f32 %v1933, %v2011
      %v2052 = vmul.f32 %v1938, %v2011
      %v2053 = vmul.f32 %v1943, %v2011
      %v2054 = vmul.f32 %v1948, %v2011
      %v2055 = vmul.f32 %v1953, %v2011
      %v2056 = vmul.f32 %v1958, %v2011
      %v2057 = vmul.f32 %v1963, %v2011
      %v2058 = vmul.f32 %v1968, %v2011
      %v2059 = vmul.f32 %v1973, %v2011
      %v2060 = vmul.f32 %v1978, %v2011
      %v2061 = vmul.f32 %v1983, %v2011
      %v2062 = vmul.f32 %v1988, %v2011
      %v2063 = vmul.f32 %v1993, %v2011
      %v2064 = vmul.f32 %v1998, %v2011
      %v2065 = vmul.f32 %v2003, %v2011
      %v2066 = vmul.f32 %v2008, %v2011
      %v2067 = vadd.f32 %v1630, %v2013
      %v2068 = vadd.f32 %v1631, %v2014
      %v2069 = vadd.f32 %v1632, %v2015
      %v2070 = vadd.f32 %v1633, %v2016
      %v2071 = vadd.f32 %v1634, %v2017
      %v2072 = vadd.f32 %v1635, %v2018
      %v2073 = vadd.f32 %v1636, %v2019
      %v2074 = vadd.f32 %v1637, %v2020
      %v2075 = vadd.f32 %v1638, %v2021
      %v2076 = vadd.f32 %v1639, %v2022
      %v2077 = vadd.f32 %v1640, %v2023
      %v2078 = vadd.f32 %v1641, %v2024
      %v2079 = vadd.f32 %v1642, %v2025
      %v2080 = vadd.f32 %v1643, %v2026
      %v2081 = vadd.f32 %v1644, %v2027
      %v2082 = vadd.f32 %v1645, %v2028
      %v2083 = vadd.f32 %v1646, %v2029
      %v2084 = vadd.f32 %v1647, %v2030
      %v2085 = vadd.f32 %v1648, %v2031
      %v2086 = vadd.f32 %v1649, %v2032
      %v2087 = vadd.f32 %v1650, %v2033
      %v2088 = vadd.f32 %v1651, %v2034
      %v2089 = vadd.f32 %v1652, %v2035
      %v2090 = vadd.f32 %v1653, %v2036
      %v2091 = vadd.f32 %v1654, %v2037
      %v2092 = vadd.f32 %v1655, %v2038
      %v2093 = vadd.f32 %v1656, %v2039
      %v2094 = vadd.f32 %v1657, %v2040
      %v2095 = vadd.f32 %v1658, %v2041
      %v2096 = vadd.f32 %v1659, %v2042
      %v2097 = vadd.f32 %v1660, %v2043
      %v2098 = vadd.f32 %v1661, %v2044
      %v2099 = vadd.f32 %v1662, %v2045
      %v2100 = vadd.f32 %v1663, %v2046
      %v2101 = vadd.f32 %v1664, %v2047
      %v2102 = vadd.f32 %v1665, %v2048
      %v2103 = vadd.f32 %v1666, %v2049
      %v2104 = vadd.f32 %v1667, %v2050
      %v2105 = vadd.f32 %v1668, %v2051
      %v2106 = vadd.f32 %v1669, %v2052
      %v2107 = vadd.f32 %v1670, %v2053
      %v2108 = vadd.f32 %v1671, %v2054
      %v2109 = vadd.f32 %v1672, %v2055
      %v2110 = vadd.f32 %v1673, %v2056
      %v2111 = vadd.f32 %v1674, %v2057
      %v2112 = vadd.f32 %v1675, %v2058
      %v2113 = vadd.f32 %v1676, %v2059
      %v2114 = vadd.f32 %v1677, %v2060
      %v2115 = vadd.f32 %v1678, %v2061
      %v2116 = vadd.f32 %v1679, %v2062
      %v2117 = vadd.f32 %v1680, %v2063
      %v2118 = vadd.f32 %v1681, %v2064
      %v2119 = vadd.f32 %v1682, %v2065
      %v2120 = vadd.f32 %v1683, %v2066
      %v2121 = vld [vmem:[%s2] sm:$0x1]
      %v2123 = vperm.slane %v2121, 0
      %v2125 = vadd.f32 %v2067, %v2123
      %v2126 = vadd.f32 %v2068, %v2123
      %v2127 = vadd.f32 %v2069, %v2123
      %v2128 = vadd.f32 %v2070, %v2123
      %v2129 = vadd.f32 %v2071, %v2123
      %v2130 = vadd.f32 %v2072, %v2123
      %v2131 = vadd.f32 %v2073, %v2123
      %v2132 = vadd.f32 %v2074, %v2123
      %v2133 = vadd.f32 %v2075, %v2123
      %v2134 = vadd.f32 %v2076, %v2123
      %v2135 = vadd.f32 %v2077, %v2123
      %v2136 = vadd.f32 %v2078, %v2123
      %v2137 = vadd.f32 %v2079, %v2123
      %v2138 = vadd.f32 %v2080, %v2123
      %v2139 = vadd.f32 %v2081, %v2123
      %v2140 = vadd.f32 %v2082, %v2123
      %v2141 = vadd.f32 %v2083, %v2123
      %v2142 = vadd.f32 %v2084, %v2123
      %v2143 = vadd.f32 %v2085, %v2123
      %v2144 = vadd.f32 %v2086, %v2123
      %v2145 = vadd.f32 %v2087, %v2123
      %v2146 = vadd.f32 %v2088, %v2123
      %v2147 = vadd.f32 %v2089, %v2123
      %v2148 = vadd.f32 %v2090, %v2123
      %v2149 = vadd.f32 %v2091, %v2123
      %v2150 = vadd.f32 %v2092, %v2123
      %v2151 = vadd.f32 %v2093, %v2123
      %v2152 = vadd.f32 %v2094, %v2123
      %v2153 = vadd.f32 %v2095, %v2123
      %v2154 = vadd.f32 %v2096, %v2123
      %v2155 = vadd.f32 %v2097, %v2123
      %v2156 = vadd.f32 %v2098, %v2123
      %v2157 = vadd.f32 %v2099, %v2123
      %v2158 = vadd.f32 %v2100, %v2123
      %v2159 = vadd.f32 %v2101, %v2123
      %v2160 = vadd.f32 %v2102, %v2123
      %v2161 = vadd.f32 %v2103, %v2123
      %v2162 = vadd.f32 %v2104, %v2123
      %v2163 = vadd.f32 %v2105, %v2123
      %v2164 = vadd.f32 %v2106, %v2123
      %v2165 = vadd.f32 %v2107, %v2123
      %v2166 = vadd.f32 %v2108, %v2123
      %v2167 = vadd.f32 %v2109, %v2123
      %v2168 = vadd.f32 %v2110, %v2123
      %v2169 = vadd.f32 %v2111, %v2123
      %v2170 = vadd.f32 %v2112, %v2123
      %v2171 = vadd.f32 %v2113, %v2123
      %v2172 = vadd.f32 %v2114, %v2123
      %v2173 = vadd.f32 %v2115, %v2123
      %v2174 = vadd.f32 %v2116, %v2123
      %v2175 = vadd.f32 %v2117, %v2123
      %v2176 = vadd.f32 %v2118, %v2123
      %v2177 = vadd.f32 %v2119, %v2123
      %v2178 = vadd.f32 %v2120, %v2123
      %v2179 = vmax.f32 %v2125, 0.0
      %v2180 = vmax.f32 %v2126, 0.0
      %v2181 = vmax.f32 %v2127, 0.0
      %v2182 = vmax.f32 %v2128, 0.0
      %v2183 = vmax.f32 %v2129, 0.0
      %v2184 = vmax.f32 %v2130, 0.0
      %v2185 = vmax.f32 %v2131, 0.0
      %v2186 = vmax.f32 %v2132, 0.0
      %v2187 = vmax.f32 %v2133, 0.0
      %v2188 = vmax.f32 %v2134, 0.0
      %v2189 = vmax.f32 %v2135, 0.0
      %v2190 = vmax.f32 %v2136, 0.0
      %v2191 = vmax.f32 %v2137, 0.0
      %v2192 = vmax.f32 %v2138, 0.0
      %v2193 = vmax.f32 %v2139, 0.0
      %v2194 = vmax.f32 %v2140, 0.0
      %v2195 = vmax.f32 %v2141, 0.0
      %v2196 = vmax.f32 %v2142, 0.0
      %v2197 = vmax.f32 %v2143, 0.0
      %v2198 = vmax.f32 %v2144, 0.0
      %v2199 = vmax.f32 %v2145, 0.0
      %v2200 = vmax.f32 %v2146, 0.0
      %v2201 = vmax.f32 %v2147, 0.0
      %v2202 = vmax.f32 %v2148, 0.0
      %v2203 = vmax.f32 %v2149, 0.0
      %v2204 = vmax.f32 %v2150, 0.0
      %v2205 = vmax.f32 %v2151, 0.0
      %v2206 = vmax.f32 %v2152, 0.0
      %v2207 = vmax.f32 %v2153, 0.0
      %v2208 = vmax.f32 %v2154, 0.0
      %v2209 = vmax.f32 %v2155, 0.0
      %v2210 = vmax.f32 %v2156, 0.0
      %v2211 = vmax.f32 %v2157, 0.0
      %v2212 = vmax.f32 %v2158, 0.0
      %v2213 = vmax.f32 %v2159, 0.0
      %v2214 = vmax.f32 %v2160, 0.0
      %v2215 = vmax.f32 %v2161, 0.0
      %v2216 = vmax.f32 %v2162, 0.0
      %v2217 = vmax.f32 %v2163, 0.0
      %v2218 = vmax.f32 %v2164, 0.0
      %v2219 = vmax.f32 %v2165, 0.0
      %v2220 = vmax.f32 %v2166, 0.0
      %v2221 = vmax.f32 %v2167, 0.0
      %v2222 = vmax.f32 %v2168, 0.0
      %v2223 = vmax.f32 %v2169, 0.0
      %v2224 = vmax.f32 %v2170, 0.0
      %v2225 = vmax.f32 %v2171, 0.0
      %v2226 = vmax.f32 %v2172, 0.0
      %v2227 = vmax.f32 %v2173, 0.0
      %v2228 = vmax.f32 %v2174, 0.0
      %v2229 = vmax.f32 %v2175, 0.0
      %v2230 = vmax.f32 %v2176, 0.0
      %v2231 = vmax.f32 %v2177, 0.0
      %v2232 = vmax.f32 %v2178, 0.0
      %v2233 = vmax.f32 %v2179, %v2182
      %v2234 = vmax.f32 %v2180, %v2183
      %v2235 = vmax.f32 %v2181, %v2184
      %v2236 = vmax.f32 %v2185, %v2188
      %v2237 = vmax.f32 %v2186, %v2189
      %v2238 = vmax.f32 %v2187, %v2190
      %v2239 = vmax.f32 %v2191, %v2194
      %v2240 = vmax.f32 %v2192, %v2195
      %v2241 = vmax.f32 %v2193, %v2196
      %v2242 = vmax.f32 %v2197, %v2200
      %v2243 = vmax.f32 %v2198, %v2201
      %v2244 = vmax.f32 %v2199, %v2202
      %v2245 = vmax.f32 %v2203, %v2206
      %v2246 = vmax.f32 %v2204, %v2207
      %v2247 = vmax.f32 %v2205, %v2208
      %v2248 = vmax.f32 %v2209, %v2212
      %v2249 = vmax.f32 %v2210, %v2213
      %v2250 = vmax.f32 %v2211, %v2214
      %v2251 = vmax.f32 %v2215, %v2218
      %v2252 = vmax.f32 %v2216, %v2219
      %v2253 = vmax.f32 %v2217, %v2220
      %v2254 = vmax.f32 %v2221, %v2224
      %v2255 = vmax.f32 %v2222, %v2225
      %v2256 = vmax.f32 %v2223, %v2226
      %v2257 = vmax.f32 %v2227, %v2230
      %v2258 = vmax.f32 %v2228, %v2231
      %v2259 = vmax.f32 %v2229, %v2232
      %vm2260 = vcmask 261120
      %2261 = vst.msk [vmem:[#allocation5] sm:$0xff] %vm2260, %v2233
      %2262 = vst.msk [vmem:[#allocation5 + $0x8] sm:$0xff] %vm2260, %v2234
      %2263 = vst.msk [vmem:[#allocation5 + $0x10] sm:$0xff] %vm2260, %v2235
      %2264 = vst.msk [vmem:[#allocation5 + $0x18] sm:$0xff] %vm2260, %v2236
      %2265 = vst.msk [vmem:[#allocation5 + $0x20] sm:$0xff] %vm2260, %v2237
      %2266 = vst.msk [vmem:[#allocation5 + $0x28] sm:$0xff] %vm2260, %v2238
      %2267 = vst.msk [vmem:[#allocation5 + $0x30] sm:$0xff] %vm2260, %v2239
      %2268 = vst.msk [vmem:[#allocation5 + $0x38] sm:$0xff] %vm2260, %v2240
      %2269 = vst.msk [vmem:[#allocation5 + $0x40] sm:$0xff] %vm2260, %v2241
      %2270 = vst.msk [vmem:[#allocation5 + $0x48] sm:$0xff] %vm2260, %v2242
      %2271 = vst.msk [vmem:[#allocation5 + $0x50] sm:$0xff] %vm2260, %v2243
      %2272 = vst.msk [vmem:[#allocation5 + $0x58] sm:$0xff] %vm2260, %v2244
      %2273 = vst.msk [vmem:[#allocation5 + $0x60] sm:$0xff] %vm2260, %v2245
      %2274 = vst.msk [vmem:[#allocation5 + $0x68] sm:$0xff] %vm2260, %v2246
      %2275 = vst.msk [vmem:[#allocation5 + $0x70] sm:$0xff] %vm2260, %v2247
      %2276 = vst.msk [vmem:[#allocation5 + $0x78] sm:$0xff] %vm2260, %v2248
      %2277 = vst.msk [vmem:[#allocation5 + $0x80] sm:$0xff] %vm2260, %v2249
      %2278 = vst.msk [vmem:[#allocation5 + $0x88] sm:$0xff] %vm2260, %v2250
      %2279 = vst.msk [vmem:[#allocation5 + $0x90] sm:$0xff] %vm2260, %v2251
      %2280 = vst.msk [vmem:[#allocation5 + $0x98] sm:$0xff] %vm2260, %v2252
      %2281 = vst.msk [vmem:[#allocation5 + $0xa0] sm:$0xff] %vm2260, %v2253
      %2282 = vst.msk [vmem:[#allocation5 + $0xa8] sm:$0xff] %vm2260, %v2254
      %2283 = vst.msk [vmem:[#allocation5 + $0xb0] sm:$0xff] %vm2260, %v2255
      %2284 = vst.msk [vmem:[#allocation5 + $0xb8] sm:$0xff] %vm2260, %v2256
      %2285 = vst.msk [vmem:[#allocation5 + $0xc0] sm:$0xff] %vm2260, %v2257
      %2286 = vst.msk [vmem:[#allocation5 + $0xc8] sm:$0xff] %vm2260, %v2258
      %2287 = vst.msk [vmem:[#allocation5 + $0xd0] sm:$0xff] %vm2260, %v2259
      %v2288 = vld [vmem:[#allocation5] ss:$2 sm:$0xff]
      %s2289 = scalar_lea.vmem [#allocation5], 16
      %v2290 = vld [vmem:[%s2289] ss:$2 sm:$0x1]
      %s2291 = scalar_lea.vmem [#allocation5], 24
      %v2292 = vld [vmem:[%s2291] ss:$2 sm:$0xff]
      %s2293 = scalar_lea.vmem [#allocation5], 40
      %v2294 = vld [vmem:[%s2293] ss:$2 sm:$0x1]
      %s2295 = scalar_lea.vmem [#allocation5], 48
      %v2296 = vld [vmem:[%s2295] ss:$2 sm:$0xff]
      %s2297 = scalar_lea.vmem [#allocation5], 64
      %v2298 = vld [vmem:[%s2297] ss:$2 sm:$0x1]
      %s2299 = scalar_lea.vmem [#allocation5], 72
      %v2300 = vld [vmem:[%s2299] ss:$2 sm:$0xff]
      %s2301 = scalar_lea.vmem [#allocation5], 88
      %v2302 = vld [vmem:[%s2301] ss:$2 sm:$0x1]
      %s2303 = scalar_lea.vmem [#allocation5], 96
      %v2304 = vld [vmem:[%s2303] ss:$2 sm:$0xff]
      %s2305 = scalar_lea.vmem [#allocation5], 112
      %v2306 = vld [vmem:[%s2305] ss:$2 sm:$0x1]
      %s2307 = scalar_lea.vmem [#allocation5], 120
      %v2308 = vld [vmem:[%s2307] ss:$2 sm:$0xff]
      %s2309 = scalar_lea.vmem [#allocation5], 136
      %v2310 = vld [vmem:[%s2309] ss:$2 sm:$0x1]
      %s2311 = scalar_lea.vmem [#allocation5], 144
      %v2312 = vld [vmem:[%s2311] ss:$2 sm:$0xff]
      %s2313 = scalar_lea.vmem [#allocation5], 160
      %v2314 = vld [vmem:[%s2313] ss:$2 sm:$0x1]
      %s2315 = scalar_lea.vmem [#allocation5], 168
      %v2316 = vld [vmem:[%s2315] ss:$2 sm:$0xff]
      %s2317 = scalar_lea.vmem [#allocation5], 184
      %v2318 = vld [vmem:[%s2317] ss:$2 sm:$0x1]
      %s2319 = scalar_lea.vmem [#allocation5], 192
      %v2320 = vld [vmem:[%s2319] ss:$2 sm:$0xff]
      %s2321 = scalar_lea.vmem [#allocation5], 208
      %v2322 = vld [vmem:[%s2321] ss:$2 sm:$0x1]
      %s2323 = scalar_lea.vmem [#allocation5], 1
      %v2324 = vld [vmem:[%s2323] ss:$2 sm:$0xff]
      %s2325 = scalar_lea.vmem [#allocation5], 17
      %v2326 = vld [vmem:[%s2325] ss:$2 sm:$0x1]
      %s2327 = scalar_lea.vmem [#allocation5], 25
      %v2328 = vld [vmem:[%s2327] ss:$2 sm:$0xff]
      %s2329 = scalar_lea.vmem [#allocation5], 41
      %v2330 = vld [vmem:[%s2329] ss:$2 sm:$0x1]
      %s2331 = scalar_lea.vmem [#allocation5], 49
      %v2332 = vld [vmem:[%s2331] ss:$2 sm:$0xff]
      %s2333 = scalar_lea.vmem [#allocation5], 65
      %v2334 = vld [vmem:[%s2333] ss:$2 sm:$0x1]
      %s2335 = scalar_lea.vmem [#allocation5], 73
      %v2336 = vld [vmem:[%s2335] ss:$2 sm:$0xff]
      %s2337 = scalar_lea.vmem [#allocation5], 89
      %v2338 = vld [vmem:[%s2337] ss:$2 sm:$0x1]
      %s2339 = scalar_lea.vmem [#allocation5], 97
      %v2340 = vld [vmem:[%s2339] ss:$2 sm:$0xff]
      %s2341 = scalar_lea.vmem [#allocation5], 113
      %v2342 = vld [vmem:[%s2341] ss:$2 sm:$0x1]
      %s2343 = scalar_lea.vmem [#allocation5], 121
      %v2344 = vld [vmem:[%s2343] ss:$2 sm:$0xff]
      %s2345 = scalar_lea.vmem [#allocation5], 137
      %v2346 = vld [vmem:[%s2345] ss:$2 sm:$0x1]
      %s2347 = scalar_lea.vmem [#allocation5], 145
      %v2348 = vld [vmem:[%s2347] ss:$2 sm:$0xff]
      %s2349 = scalar_lea.vmem [#allocation5], 161
      %v2350 = vld [vmem:[%s2349] ss:$2 sm:$0x1]
      %s2351 = scalar_lea.vmem [#allocation5], 169
      %v2352 = vld [vmem:[%s2351] ss:$2 sm:$0xff]
      %s2353 = scalar_lea.vmem [#allocation5], 185
      %v2354 = vld [vmem:[%s2353] ss:$2 sm:$0x1]
      %s2355 = scalar_lea.vmem [#allocation5], 193
      %v2356 = vld [vmem:[%s2355] ss:$2 sm:$0xff]
      %s2357 = scalar_lea.vmem [#allocation5], 209
      %v2358 = vld [vmem:[%s2357] ss:$2 sm:$0x1]
      %v2359 = vmax.f32 %v2288, %v2324
      %v2360 = vmax.f32 %v2290, %v2326
      %v2361 = vmax.f32 %v2292, %v2328
      %v2362 = vmax.f32 %v2294, %v2330
      %v2363 = vmax.f32 %v2296, %v2332
      %v2364 = vmax.f32 %v2298, %v2334
      %v2365 = vmax.f32 %v2300, %v2336
      %v2366 = vmax.f32 %v2302, %v2338
      %v2367 = vmax.f32 %v2304, %v2340
      %v2368 = vmax.f32 %v2306, %v2342
      %v2369 = vmax.f32 %v2308, %v2344
      %v2370 = vmax.f32 %v2310, %v2346
      %v2371 = vmax.f32 %v2312, %v2348
      %v2372 = vmax.f32 %v2314, %v2350
      %v2373 = vmax.f32 %v2316, %v2352
      %v2374 = vmax.f32 %v2318, %v2354
      %v2375 = vmax.f32 %v2320, %v2356
      %v2376 = vmax.f32 %v2322, %v2358
      %2377 = vst.msk [vmem:[#allocation3] sm:$0xff] %vm2260, 0.0
      %2378 = vst.msk [vmem:[#allocation3 + $0x8] sm:$0xff] %vm2260, 0.0
      %vm2379 = vcmask 253952
      %2380 = vst.msk [vmem:[#allocation3 + $0x10] sm:$0x1] %vm2379, 0.0
      %2381 = vst.msk [vmem:[#allocation3 + $0x18] sm:$0xff] %vm2260, 0.0
      %2382 = vst.msk [vmem:[#allocation3 + $0x20] sm:$0xff] %vm2260, 0.0
      %2383 = vst.msk [vmem:[#allocation3 + $0x28] sm:$0x1] %vm2379, 0.0
      %2384 = vst.msk [vmem:[#allocation3 + $0x30] sm:$0xff] %vm2260, 0.0
      %2385 = vst.msk [vmem:[#allocation3 + $0x38] sm:$0xff] %vm2260, 0.0
      %2386 = vst.msk [vmem:[#allocation3 + $0x40] sm:$0x1] %vm2379, 0.0
      %2387 = vst.msk [vmem:[#allocation3 + $0x48] sm:$0xff] %vm2260, 0.0
      %2388 = vst.msk [vmem:[#allocation3 + $0x50] sm:$0xff] %vm2260, 0.0
      %2389 = vst.msk [vmem:[#allocation3 + $0x58] sm:$0x1] %vm2379, 0.0
      %2390 = vst.msk [vmem:[#allocation3 + $0x60] sm:$0xff] %vm2260, 0.0
      %2391 = vst.msk [vmem:[#allocation3 + $0x68] sm:$0xff] %vm2260, 0.0
      %2392 = vst.msk [vmem:[#allocation3 + $0x70] sm:$0x1] %vm2379, 0.0
      %2393 = vst.msk [vmem:[#allocation3 + $0x78] sm:$0xff] %vm2260, 0.0
      %2394 = vst.msk [vmem:[#allocation3 + $0x80] sm:$0xff] %vm2260, 0.0
      %2395 = vst.msk [vmem:[#allocation3 + $0x88] sm:$0x1] %vm2379, 0.0
      %2396 = vst.msk [vmem:[#allocation3 + $0x90] sm:$0xff] %vm2260, 0.0
      %2397 = vst.msk [vmem:[#allocation3 + $0x98] sm:$0xff] %vm2260, 0.0
      %2398 = vst.msk [vmem:[#allocation3 + $0xa0] sm:$0x1] %vm2379, 0.0
      %2399 = vst.msk [vmem:[#allocation3 + $0xa8] sm:$0xff] %vm2260, 0.0
      %2400 = vst.msk [vmem:[#allocation3 + $0xb0] sm:$0xff] %vm2260, 0.0
      %2401 = vst.msk [vmem:[#allocation3 + $0xb8] sm:$0x1] %vm2379, 0.0
      %2402 = vst.msk [vmem:[#allocation3 + $0xc0] sm:$0xff] %vm2260, 0.0
      %2403 = vst.msk [vmem:[#allocation3 + $0xc8] sm:$0xff] %vm2260, 0.0
      %2404 = vst.msk [vmem:[#allocation3 + $0xd0] sm:$0x1] %vm2379, 0.0
      %2405 = vst.msk [vmem:[#allocation3 + $0xd8] sm:$0xff] %vm2260, 0.0
      %2406 = vst.msk [vmem:[#allocation3 + $0xe0] sm:$0xff] %vm2260, 0.0
      %2407 = vst.msk [vmem:[#allocation3 + $0xe8] sm:$0x1] %vm2379, 0.0
      %2408 = vst.msk [vmem:[#allocation3 + $0xf0] sm:$0xff] %vm2260, 0.0
      %2409 = vst.msk [vmem:[#allocation3 + $0xf8] sm:$0xff] %vm2260, 0.0
      %2410 = vst.msk [vmem:[#allocation3 + $0x100] sm:$0x1] %vm2379, 0.0
      %2411 = vst.msk [vmem:[#allocation3 + $0x108] sm:$0xff] %vm2260, 0.0
      %2412 = vst.msk [vmem:[#allocation3 + $0x110] sm:$0xff] %vm2260, 0.0
      %2413 = vst.msk [vmem:[#allocation3 + $0x118] sm:$0x1] %vm2379, 0.0
      %2414 = vst.msk [vmem:[#allocation3 + $0x120] sm:$0xff] %vm2260, 0.0
      %2415 = vst.msk [vmem:[#allocation3 + $0x128] sm:$0xff] %vm2260, 0.0
      %2416 = vst.msk [vmem:[#allocation3 + $0x130] sm:$0x1] %vm2379, 0.0
      %s2417 = scalar_lea.vmem [#allocation3], 48
      %2418 = vst.msk [vmem:[%s2417 + $0x2] sm:$0xff] %vm2260, %v2359
      %2419 = vst.msk [vmem:[%s2417 + $0xa] sm:$0x1] %vm2379, %v2360
      %2420 = vst.msk [vmem:[%s2417 + $0x1a] sm:$0xff] %vm2260, %v2361
      %2421 = vst.msk [vmem:[%s2417 + $0x22] sm:$0x1] %vm2379, %v2362
      %2422 = vst.msk [vmem:[%s2417 + $0x32] sm:$0xff] %vm2260, %v2363
      %2423 = vst.msk [vmem:[%s2417 + $0x3a] sm:$0x1] %vm2379, %v2364
      %2424 = vst.msk [vmem:[%s2417 + $0x4a] sm:$0xff] %vm2260, %v2365
      %2425 = vst.msk [vmem:[%s2417 + $0x52] sm:$0x1] %vm2379, %v2366
      %2426 = vst.msk [vmem:[%s2417 + $0x62] sm:$0xff] %vm2260, %v2367
      %2427 = vst.msk [vmem:[%s2417 + $0x6a] sm:$0x1] %vm2379, %v2368
      %2428 = vst.msk [vmem:[%s2417 + $0x7a] sm:$0xff] %vm2260, %v2369
      %2429 = vst.msk [vmem:[%s2417 + $0x82] sm:$0x1] %vm2379, %v2370
      %2430 = vst.msk [vmem:[%s2417 + $0x92] sm:$0xff] %vm2260, %v2371
      %2431 = vst.msk [vmem:[%s2417 + $0x9a] sm:$0x1] %vm2379, %v2372
      %2432 = vst.msk [vmem:[%s2417 + $0xaa] sm:$0xff] %vm2260, %v2373
      %2433 = vst.msk [vmem:[%s2417 + $0xb2] sm:$0x1] %vm2379, %v2374
      %2434 = vst.msk [vmem:[%s2417 + $0xc2] sm:$0xff] %vm2260, %v2375
      %2435 = vst.msk [vmem:[%s2417 + $0xca] sm:$0x1] %vm2379, %v2376
      %v2436 = vld [vmem:[#allocation3] sm:$0xff]
      %v2437 = vld [vmem:[#allocation3 + $0x8] sm:$0xff]
      %v2438 = vld [vmem:[#allocation3 + $0x18] sm:$0xff]
      %v2439 = vld [vmem:[#allocation3 + $0x20] sm:$0xff]
      %v2440 = vld [vmem:[#allocation3 + $0x30] sm:$0xff]
      %v2441 = vld [vmem:[#allocation3 + $0x38] sm:$0xff]
      %v2442 = vld [vmem:[#allocation3 + $0x48] sm:$0xff]
      %v2443 = vld [vmem:[#allocation3 + $0x50] sm:$0xff]
      %v2444 = vld [vmem:[#allocation3 + $0x60] sm:$0xff]
      %v2445 = vld [vmem:[#allocation3 + $0x68] sm:$0xff]
      %v2446 = vld [vmem:[#allocation3 + $0x78] sm:$0xff]
      %v2447 = vld [vmem:[#allocation3 + $0x80] sm:$0xff]
      %v2448 = vld [vmem:[#allocation3 + $0x90] sm:$0xff]
      %v2449 = vld [vmem:[#allocation3 + $0x98] sm:$0xff]
      %v2450 = vld [vmem:[#allocation3 + $0xa8] sm:$0xff]
      %v2451 = vld [vmem:[#allocation3 + $0xb0] sm:$0xff]
      %v2452 = vld [vmem:[#allocation3 + $0xc0] sm:$0xff]
      %v2453 = vld [vmem:[#allocation3 + $0xc8] sm:$0xff]
      %v2454 = vld [vmem:[#allocation3 + $0xd8] sm:$0xff]
      %v2455 = vld [vmem:[#allocation3 + $0xe0] sm:$0xff]
      %v2456 = vld [vmem:[#allocation3 + $0xf0] sm:$0xff]
      %v2457 = vld [vmem:[#allocation3 + $0xf8] sm:$0xff]
      %v2458 = vld [vmem:[#allocation3 + $0x108] sm:$0xff]
      %v2459 = vld [vmem:[#allocation3 + $0x110] sm:$0xff]
      %v2460 = vpack.c.bf16 %v2437, %v2436
      %v2461 = vpack.c.bf16 %v2439, %v2438
      %v2462 = vpack.c.bf16 %v2441, %v2440
      %v2463 = vpack.c.bf16 %v2443, %v2442
      %v2464 = vpack.c.bf16 %v2445, %v2444
      %v2465 = vpack.c.bf16 %v2447, %v2446
      %v2466 = vpack.c.bf16 %v2449, %v2448
      %v2467 = vpack.c.bf16 %v2451, %v2450
      %v2468 = vpack.c.bf16 %v2453, %v2452
      %v2469 = vpack.c.bf16 %v2455, %v2454
      %v2470 = vpack.c.bf16 %v2457, %v2456
      %v2471 = vpack.c.bf16 %v2459, %v2458
      %v2472 = vld [vmem:[%s3] sm:$0xf]
      %v2473 = vld [vmem:[%s3 + $0x4] sm:$0xf]
      %v2474 = vld [vmem:[%s3 + $0x8] sm:$0xf]
      %v2475 = vld [vmem:[%s3 + $0xc] sm:$0xf]
      %v2476 = vld [vmem:[#allocation3 + $0x1] sm:$0xff]
      %v2477 = vld [vmem:[#allocation3 + $0x9] sm:$0xff]
      %v2478 = vld [vmem:[#allocation3 + $0x19] sm:$0xff]
      %v2479 = vld [vmem:[#allocation3 + $0x21] sm:$0xff]
      %v2480 = vld [vmem:[#allocation3 + $0x31] sm:$0xff]
      %v2481 = vld [vmem:[#allocation3 + $0x39] sm:$0xff]
      %v2482 = vld [vmem:[#allocation3 + $0x49] sm:$0xff]
      %v2483 = vld [vmem:[#allocation3 + $0x51] sm:$0xff]
      %v2484 = vld [vmem:[#allocation3 + $0x61] sm:$0xff]
      %v2485 = vld [vmem:[#allocation3 + $0x69] sm:$0xff]
      %v2486 = vld [vmem:[#allocation3 + $0x79] sm:$0xff]
      %v2487 = vld [vmem:[#allocation3 + $0x81] sm:$0xff]
      %v2488 = vld [vmem:[#allocation3 + $0x91] sm:$0xff]
      %v2489 = vld [vmem:[#allocation3 + $0x99] sm:$0xff]
      %v2490 = vld [vmem:[#allocation3 + $0xa9] sm:$0xff]
      %v2491 = vld [vmem:[#allocation3 + $0xb1] sm:$0xff]
      %v2492 = vld [vmem:[#allocation3 + $0xc1] sm:$0xff]
      %v2493 = vld [vmem:[#allocation3 + $0xc9] sm:$0xff]
      %v2494 = vld [vmem:[#allocation3 + $0xd9] sm:$0xff]
      %v2495 = vld [vmem:[#allocation3 + $0xe1] sm:$0xff]
      %v2496 = vld [vmem:[#allocation3 + $0xf1] sm:$0xff]
      %v2497 = vld [vmem:[#allocation3 + $0xf9] sm:$0xff]
      %v2498 = vld [vmem:[#allocation3 + $0x109] sm:$0xff]
      %v2499 = vld [vmem:[#allocation3 + $0x111] sm:$0xff]
      %v2500 = vpack.c.bf16 %v2477, %v2476
      %v2501 = vpack.c.bf16 %v2479, %v2478
      %v2502 = vpack.c.bf16 %v2481, %v2480
      %v2503 = vpack.c.bf16 %v2483, %v2482
      %v2504 = vpack.c.bf16 %v2485, %v2484
      %v2505 = vpack.c.bf16 %v2487, %v2486
      %v2506 = vpack.c.bf16 %v2489, %v2488
      %v2507 = vpack.c.bf16 %v2491, %v2490
      %v2508 = vpack.c.bf16 %v2493, %v2492
      %v2509 = vpack.c.bf16 %v2495, %v2494
      %v2510 = vpack.c.bf16 %v2497, %v2496
      %v2511 = vpack.c.bf16 %v2499, %v2498
      %s2512 = scalar_lea.vmem %s3, 16
      %v2513 = vld [vmem:[%s2512] sm:$0xf]
      %v2514 = vld [vmem:[%s2512 + $0x4] sm:$0xf]
      %v2515 = vld [vmem:[%s2512 + $0x8] sm:$0xf]
      %v2516 = vld [vmem:[%s2512 + $0xc] sm:$0xf]
      %v2521 = vunpack.c.l.b16 %v2513
      %v2522 = vunpack.c.l.b16 %v2514
      %v2523 = vunpack.c.l.b16 %v2515
      %v2524 = vunpack.c.l.b16 %v2516
      %v2525 = vpack.c.b16 %v2522, %v2521
      %v2526 = vpack.c.b16 %v2524, %v2523
      %v2530 = vsel %vm2260, %v2500, 0
      %v2533 = vsel %vm2260, %v2501, 0
      %v2536 = vsel %vm2260, %v2502, 0
      %v2539 = vsel %vm2260, %v2503, 0
      %v2542 = vsel %vm2260, %v2504, 0
      %v2545 = vsel %vm2260, %v2505, 0
      %v2548 = vsel %vm2260, %v2506, 0
      %v2551 = vsel %vm2260, %v2507, 0
      %v2554 = vsel %vm2260, %v2508, 0
      %v2557 = vsel %vm2260, %v2509, 0
      %v2560 = vsel %vm2260, %v2510, 0
      %v2563 = vsel %vm2260, %v2511, 0
      %2565 = vmatpush.bf16.msra.mxu0 0
      %2566 = vmatpush.bf16.msra.mxu0 0
      %2567 = vmatpush.bf16.msra.mxu0 0
      %2568 = vmatpush.bf16.msra.mxu0 0
      %2569 = vmatpush.bf16.msra.mxu0 0
      %2570 = vmatpush.bf16.msra.mxu0 0
      %2571 = vmatpush.bf16.msra.mxu0 %v2526
      %2572 = vmatpush.bf16.msra.mxu0 %v2525
      %2573 = vmatmul.bf16.gmra.mxu0 %v2530
      %v2574 = vpop.f32.mrf.mxu0
      %v2575 = vadd.f32 0.0, %v2574
      %v2576 = vpop.f32.mrf.mxu0
      %v2577 = vadd.f32 0.0, %v2576
      %2578 = vmatmul.bf16.gmra.mxu0 %v2533
      %v2579 = vpop.f32.mrf.mxu0
      %v2580 = vadd.f32 0.0, %v2579
      %v2581 = vpop.f32.mrf.mxu0
      %v2582 = vadd.f32 0.0, %v2581
      %2583 = vmatmul.bf16.gmra.mxu0 %v2536
      %v2584 = vpop.f32.mrf.mxu0
      %v2585 = vadd.f32 0.0, %v2584
      %v2586 = vpop.f32.mrf.mxu0
      %v2587 = vadd.f32 0.0, %v2586
      %2588 = vmatmul.bf16.gmra.mxu0 %v2539
      %v2589 = vpop.f32.mrf.mxu0
      %v2590 = vadd.f32 0.0, %v2589
      %v2591 = vpop.f32.mrf.mxu0
      %v2592 = vadd.f32 0.0, %v2591
      %2593 = vmatmul.bf16.gmra.mxu0 %v2542
      %v2594 = vpop.f32.mrf.mxu0
      %v2595 = vadd.f32 0.0, %v2594
      %v2596 = vpop.f32.mrf.mxu0
      %v2597 = vadd.f32 0.0, %v2596
      %2598 = vmatmul.bf16.gmra.mxu0 %v2545
      %v2599 = vpop.f32.mrf.mxu0
      %v2600 = vadd.f32 0.0, %v2599
      %v2601 = vpop.f32.mrf.mxu0
      %v2602 = vadd.f32 0.0, %v2601
      %2603 = vmatmul.bf16.gmra.mxu0 %v2548
      %v2604 = vpop.f32.mrf.mxu0
      %v2605 = vadd.f32 0.0, %v2604
      %v2606 = vpop.f32.mrf.mxu0
      %v2607 = vadd.f32 0.0, %v2606
      %2608 = vmatmul.bf16.gmra.mxu0 %v2551
      %v2609 = vpop.f32.mrf.mxu0
      %v2610 = vadd.f32 0.0, %v2609
      %v2611 = vpop.f32.mrf.mxu0
      %v2612 = vadd.f32 0.0, %v2611
      %2613 = vmatmul.bf16.gmra.mxu0 %v2554
      %v2614 = vpop.f32.mrf.mxu0
      %v2615 = vadd.f32 0.0, %v2614
      %v2616 = vpop.f32.mrf.mxu0
      %v2617 = vadd.f32 0.0, %v2616
      %2618 = vmatmul.bf16.gmra.mxu0 %v2557
      %v2619 = vpop.f32.mrf.mxu0
      %v2620 = vadd.f32 0.0, %v2619
      %v2621 = vpop.f32.mrf.mxu0
      %v2622 = vadd.f32 0.0, %v2621
      %2623 = vmatmul.bf16.gmra.mxu0 %v2560
      %v2624 = vpop.f32.mrf.mxu0
      %v2625 = vadd.f32 0.0, %v2624
      %v2626 = vpop.f32.mrf.mxu0
      %v2627 = vadd.f32 0.0, %v2626
      %2628 = vmatmul.bf16.gmra.mxu0 %v2563
      %v2629 = vpop.f32.mrf.mxu0
      %v2630 = vadd.f32 0.0, %v2629
      %v2631 = vpop.f32.mrf.mxu0
      %v2632 = vadd.f32 0.0, %v2631
      %2633 = vdwg.mxu0
      %v2638 = vunpack.c.l.b16 %v2472
      %v2639 = vunpack.c.l.b16 %v2473
      %v2640 = vunpack.c.l.b16 %v2474
      %v2641 = vunpack.c.l.b16 %v2475
      %v2642 = vpack.c.b16 %v2639, %v2638
      %v2643 = vpack.c.b16 %v2641, %v2640
      %v2647 = vsel %vm2260, %v2460, 0
      %v2650 = vsel %vm2260, %v2461, 0
      %v2653 = vsel %vm2260, %v2462, 0
      %v2656 = vsel %vm2260, %v2463, 0
      %v2659 = vsel %vm2260, %v2464, 0
      %v2662 = vsel %vm2260, %v2465, 0
      %v2665 = vsel %vm2260, %v2466, 0
      %v2668 = vsel %vm2260, %v2467, 0
      %v2671 = vsel %vm2260, %v2468, 0
      %v2674 = vsel %vm2260, %v2469, 0
      %v2677 = vsel %vm2260, %v2470, 0
      %v2680 = vsel %vm2260, %v2471, 0
      %2682 = vmatpush.bf16.msra.mxu0 0
      %2683 = vmatpush.bf16.msra.mxu0 0
      %2684 = vmatpush.bf16.msra.mxu0 0
      %2685 = vmatpush.bf16.msra.mxu0 0
      %2686 = vmatpush.bf16.msra.mxu0 0
      %2687 = vmatpush.bf16.msra.mxu0 0
      %2688 = vmatpush.bf16.msra.mxu0 %v2643
      %2689 = vmatpush.bf16.msra.mxu0 %v2642
      %2690 = vmatmul.bf16.gmra.mxu0 %v2647
      %v2691 = vpop.f32.mrf.mxu0
      %v2692 = vadd.f32 %v2575, %v2691
      %v2693 = vpop.f32.mrf.mxu0
      %v2694 = vadd.f32 %v2577, %v2693
      %2695 = vmatmul.bf16.gmra.mxu0 %v2650
      %v2696 = vpop.f32.mrf.mxu0
      %v2697 = vadd.f32 %v2580, %v2696
      %v2698 = vpop.f32.mrf.mxu0
      %v2699 = vadd.f32 %v2582, %v2698
      %2700 = vmatmul.bf16.gmra.mxu0 %v2653
      %v2701 = vpop.f32.mrf.mxu0
      %v2702 = vadd.f32 %v2585, %v2701
      %v2703 = vpop.f32.mrf.mxu0
      %v2704 = vadd.f32 %v2587, %v2703
      %2705 = vmatmul.bf16.gmra.mxu0 %v2656
      %v2706 = vpop.f32.mrf.mxu0
      %v2707 = vadd.f32 %v2590, %v2706
      %v2708 = vpop.f32.mrf.mxu0
      %v2709 = vadd.f32 %v2592, %v2708
      %2710 = vmatmul.bf16.gmra.mxu0 %v2659
      %v2711 = vpop.f32.mrf.mxu0
      %v2712 = vadd.f32 %v2595, %v2711
      %v2713 = vpop.f32.mrf.mxu0
      %v2714 = vadd.f32 %v2597, %v2713
      %2715 = vmatmul.bf16.gmra.mxu0 %v2662
      %v2716 = vpop.f32.mrf.mxu0
      %v2717 = vadd.f32 %v2600, %v2716
      %v2718 = vpop.f32.mrf.mxu0
      %v2719 = vadd.f32 %v2602, %v2718
      %2720 = vmatmul.bf16.gmra.mxu0 %v2665
      %v2721 = vpop.f32.mrf.mxu0
      %v2722 = vadd.f32 %v2605, %v2721
      %v2723 = vpop.f32.mrf.mxu0
      %v2724 = vadd.f32 %v2607, %v2723
      %2725 = vmatmul.bf16.gmra.mxu0 %v2668
      %v2726 = vpop.f32.mrf.mxu0
      %v2727 = vadd.f32 %v2610, %v2726
      %v2728 = vpop.f32.mrf.mxu0
      %v2729 = vadd.f32 %v2612, %v2728
      %2730 = vmatmul.bf16.gmra.mxu0 %v2671
      %v2731 = vpop.f32.mrf.mxu0
      %v2732 = vadd.f32 %v2615, %v2731
      %v2733 = vpop.f32.mrf.mxu0
      %v2734 = vadd.f32 %v2617, %v2733
      %2735 = vmatmul.bf16.gmra.mxu0 %v2674
      %v2736 = vpop.f32.mrf.mxu0
      %v2737 = vadd.f32 %v2620, %v2736
      %v2738 = vpop.f32.mrf.mxu0
      %v2739 = vadd.f32 %v2622, %v2738
      %2740 = vmatmul.bf16.gmra.mxu0 %v2677
      %v2741 = vpop.f32.mrf.mxu0
      %v2742 = vadd.f32 %v2625, %v2741
      %v2743 = vpop.f32.mrf.mxu0
      %v2744 = vadd.f32 %v2627, %v2743
      %2745 = vmatmul.bf16.gmra.mxu0 %v2680
      %v2746 = vpop.f32.mrf.mxu0
      %v2747 = vadd.f32 %v2630, %v2746
      %v2748 = vpop.f32.mrf.mxu0
      %v2749 = vadd.f32 %v2632, %v2748
      %2750 = vdwg.mxu0
      %s2751 = scalar_lea.vmem [#allocation3], 24
      %v2752 = vld [vmem:[%s2751] sm:$0xff]
      %v2753 = vld [vmem:[%s2751 + $0x8] sm:$0xff]
      %v2754 = vld [vmem:[%s2751 + $0x18] sm:$0xff]
      %v2755 = vld [vmem:[%s2751 + $0x20] sm:$0xff]
      %v2756 = vld [vmem:[%s2751 + $0x30] sm:$0xff]
      %v2757 = vld [vmem:[%s2751 + $0x38] sm:$0xff]
      %v2758 = vld [vmem:[%s2751 + $0x48] sm:$0xff]
      %v2759 = vld [vmem:[%s2751 + $0x50] sm:$0xff]
      %v2760 = vld [vmem:[%s2751 + $0x60] sm:$0xff]
      %v2761 = vld [vmem:[%s2751 + $0x68] sm:$0xff]
      %v2762 = vld [vmem:[%s2751 + $0x78] sm:$0xff]
      %v2763 = vld [vmem:[%s2751 + $0x80] sm:$0xff]
      %v2764 = vld [vmem:[%s2751 + $0x90] sm:$0xff]
      %v2765 = vld [vmem:[%s2751 + $0x98] sm:$0xff]
      %v2766 = vld [vmem:[%s2751 + $0xa8] sm:$0xff]
      %v2767 = vld [vmem:[%s2751 + $0xb0] sm:$0xff]
      %v2768 = vld [vmem:[%s2751 + $0xc0] sm:$0xff]
      %v2769 = vld [vmem:[%s2751 + $0xc8] sm:$0xff]
      %v2770 = vld [vmem:[%s2751 + $0xd8] sm:$0xff]
      %v2771 = vld [vmem:[%s2751 + $0xe0] sm:$0xff]
      %v2772 = vld [vmem:[%s2751 + $0xf0] sm:$0xff]
      %v2773 = vld [vmem:[%s2751 + $0xf8] sm:$0xff]
      %v2774 = vld [vmem:[%s2751 + $0x108] sm:$0xff]
      %v2775 = vld [vmem:[%s2751 + $0x110] sm:$0xff]
      %v2776 = vpack.c.bf16 %v2753, %v2752
      %v2777 = vpack.c.bf16 %v2755, %v2754
      %v2778 = vpack.c.bf16 %v2757, %v2756
      %v2779 = vpack.c.bf16 %v2759, %v2758
      %v2780 = vpack.c.bf16 %v2761, %v2760
      %v2781 = vpack.c.bf16 %v2763, %v2762
      %v2782 = vpack.c.bf16 %v2765, %v2764
      %v2783 = vpack.c.bf16 %v2767, %v2766
      %v2784 = vpack.c.bf16 %v2769, %v2768
      %v2785 = vpack.c.bf16 %v2771, %v2770
      %v2786 = vpack.c.bf16 %v2773, %v2772
      %v2787 = vpack.c.bf16 %v2775, %v2774
      %s2788 = scalar_lea.vmem %s3, 32
      %v2789 = vld [vmem:[%s2788] sm:$0xf]
      %v2790 = vld [vmem:[%s2788 + $0x4] sm:$0xf]
      %v2791 = vld [vmem:[%s2788 + $0x8] sm:$0xf]
      %v2792 = vld [vmem:[%s2788 + $0xc] sm:$0xf]
      %v2797 = vunpack.c.l.b16 %v2789
      %v2798 = vunpack.c.l.b16 %v2790
      %v2799 = vunpack.c.l.b16 %v2791
      %v2800 = vunpack.c.l.b16 %v2792
      %v2801 = vpack.c.b16 %v2798, %v2797
      %v2802 = vpack.c.b16 %v2800, %v2799
      %v2806 = vsel %vm2260, %v2776, 0
      %v2809 = vsel %vm2260, %v2777, 0
      %v2812 = vsel %vm2260, %v2778, 0
      %v2815 = vsel %vm2260, %v2779, 0
      %v2818 = vsel %vm2260, %v2780, 0
      %v2821 = vsel %vm2260, %v2781, 0
      %v2824 = vsel %vm2260, %v2782, 0
      %v2827 = vsel %vm2260, %v2783, 0
      %v2830 = vsel %vm2260, %v2784, 0
      %v2833 = vsel %vm2260, %v2785, 0
      %v2836 = vsel %vm2260, %v2786, 0
      %v2839 = vsel %vm2260, %v2787, 0
      %2841 = vmatpush.bf16.msra.mxu0 0
      %2842 = vmatpush.bf16.msra.mxu0 0
      %2843 = vmatpush.bf16.msra.mxu0 0
      %2844 = vmatpush.bf16.msra.mxu0 0
      %2845 = vmatpush.bf16.msra.mxu0 0
      %2846 = vmatpush.bf16.msra.mxu0 0
      %2847 = vmatpush.bf16.msra.mxu0 %v2802
      %2848 = vmatpush.bf16.msra.mxu0 %v2801
      %2849 = vmatmul.bf16.gmra.mxu0 %v2806
      %v2850 = vpop.f32.mrf.mxu0
      %v2851 = vadd.f32 0.0, %v2850
      %v2852 = vpop.f32.mrf.mxu0
      %v2853 = vadd.f32 0.0, %v2852
      %2854 = vmatmul.bf16.gmra.mxu0 %v2809
      %v2855 = vpop.f32.mrf.mxu0
      %v2856 = vadd.f32 0.0, %v2855
      %v2857 = vpop.f32.mrf.mxu0
      %v2858 = vadd.f32 0.0, %v2857
      %2859 = vmatmul.bf16.gmra.mxu0 %v2812
      %v2860 = vpop.f32.mrf.mxu0
      %v2861 = vadd.f32 0.0, %v2860
      %v2862 = vpop.f32.mrf.mxu0
      %v2863 = vadd.f32 0.0, %v2862
      %2864 = vmatmul.bf16.gmra.mxu0 %v2815
      %v2865 = vpop.f32.mrf.mxu0
      %v2866 = vadd.f32 0.0, %v2865
      %v2867 = vpop.f32.mrf.mxu0
      %v2868 = vadd.f32 0.0, %v2867
      %2869 = vmatmul.bf16.gmra.mxu0 %v2818
      %v2870 = vpop.f32.mrf.mxu0
      %v2871 = vadd.f32 0.0, %v2870
      %v2872 = vpop.f32.mrf.mxu0
      %v2873 = vadd.f32 0.0, %v2872
      %2874 = vmatmul.bf16.gmra.mxu0 %v2821
      %v2875 = vpop.f32.mrf.mxu0
      %v2876 = vadd.f32 0.0, %v2875
      %v2877 = vpop.f32.mrf.mxu0
      %v2878 = vadd.f32 0.0, %v2877
      %2879 = vmatmul.bf16.gmra.mxu0 %v2824
      %v2880 = vpop.f32.mrf.mxu0
      %v2881 = vadd.f32 0.0, %v2880
      %v2882 = vpop.f32.mrf.mxu0
      %v2883 = vadd.f32 0.0, %v2882
      %2884 = vmatmul.bf16.gmra.mxu0 %v2827
      %v2885 = vpop.f32.mrf.mxu0
      %v2886 = vadd.f32 0.0, %v2885
      %v2887 = vpop.f32.mrf.mxu0
      %v2888 = vadd.f32 0.0, %v2887
      %2889 = vmatmul.bf16.gmra.mxu0 %v2830
      %v2890 = vpop.f32.mrf.mxu0
      %v2891 = vadd.f32 0.0, %v2890
      %v2892 = vpop.f32.mrf.mxu0
      %v2893 = vadd.f32 0.0, %v2892
      %2894 = vmatmul.bf16.gmra.mxu0 %v2833
      %v2895 = vpop.f32.mrf.mxu0
      %v2896 = vadd.f32 0.0, %v2895
      %v2897 = vpop.f32.mrf.mxu0
      %v2898 = vadd.f32 0.0, %v2897
      %2899 = vmatmul.bf16.gmra.mxu0 %v2836
      %v2900 = vpop.f32.mrf.mxu0
      %v2901 = vadd.f32 0.0, %v2900
      %v2902 = vpop.f32.mrf.mxu0
      %v2903 = vadd.f32 0.0, %v2902
      %2904 = vmatmul.bf16.gmra.mxu0 %v2839
      %v2905 = vpop.f32.mrf.mxu0
      %v2906 = vadd.f32 0.0, %v2905
      %v2907 = vpop.f32.mrf.mxu0
      %v2908 = vadd.f32 0.0, %v2907
      %2909 = vdwg.mxu0
      %v2910 = vadd.f32 %v2692, %v2851
      %v2911 = vadd.f32 %v2694, %v2853
      %v2912 = vadd.f32 %v2697, %v2856
      %v2913 = vadd.f32 %v2699, %v2858
      %v2914 = vadd.f32 %v2702, %v2861
      %v2915 = vadd.f32 %v2704, %v2863
      %v2916 = vadd.f32 %v2707, %v2866
      %v2917 = vadd.f32 %v2709, %v2868
      %v2918 = vadd.f32 %v2712, %v2871
      %v2919 = vadd.f32 %v2714, %v2873
      %v2920 = vadd.f32 %v2717, %v2876
      %v2921 = vadd.f32 %v2719, %v2878
      %v2922 = vadd.f32 %v2722, %v2881
      %v2923 = vadd.f32 %v2724, %v2883
      %v2924 = vadd.f32 %v2727, %v2886
      %v2925 = vadd.f32 %v2729, %v2888
      %v2926 = vadd.f32 %v2732, %v2891
      %v2927 = vadd.f32 %v2734, %v2893
      %v2928 = vadd.f32 %v2737, %v2896
      %v2929 = vadd.f32 %v2739, %v2898
      %v2930 = vadd.f32 %v2742, %v2901
      %v2931 = vadd.f32 %v2744, %v2903
      %v2932 = vadd.f32 %v2747, %v2906
      %v2933 = vadd.f32 %v2749, %v2908
      %v2934 = vld [vmem:[%s2751 + $0x1] sm:$0xff]
      %v2935 = vld [vmem:[%s2751 + $0x9] sm:$0xff]
      %v2936 = vld [vmem:[%s2751 + $0x19] sm:$0xff]
      %v2937 = vld [vmem:[%s2751 + $0x21] sm:$0xff]
      %v2938 = vld [vmem:[%s2751 + $0x31] sm:$0xff]
      %v2939 = vld [vmem:[%s2751 + $0x39] sm:$0xff]
      %v2940 = vld [vmem:[%s2751 + $0x49] sm:$0xff]
      %v2941 = vld [vmem:[%s2751 + $0x51] sm:$0xff]
      %v2942 = vld [vmem:[%s2751 + $0x61] sm:$0xff]
      %v2943 = vld [vmem:[%s2751 + $0x69] sm:$0xff]
      %v2944 = vld [vmem:[%s2751 + $0x79] sm:$0xff]
      %v2945 = vld [vmem:[%s2751 + $0x81] sm:$0xff]
      %v2946 = vld [vmem:[%s2751 + $0x91] sm:$0xff]
      %v2947 = vld [vmem:[%s2751 + $0x99] sm:$0xff]
      %v2948 = vld [vmem:[%s2751 + $0xa9] sm:$0xff]
      %v2949 = vld [vmem:[%s2751 + $0xb1] sm:$0xff]
      %v2950 = vld [vmem:[%s2751 + $0xc1] sm:$0xff]
      %v2951 = vld [vmem:[%s2751 + $0xc9] sm:$0xff]
      %v2952 = vld [vmem:[%s2751 + $0xd9] sm:$0xff]
      %v2953 = vld [vmem:[%s2751 + $0xe1] sm:$0xff]
      %v2954 = vld [vmem:[%s2751 + $0xf1] sm:$0xff]
      %v2955 = vld [vmem:[%s2751 + $0xf9] sm:$0xff]
      %v2956 = vld [vmem:[%s2751 + $0x109] sm:$0xff]
      %v2957 = vld [vmem:[%s2751 + $0x111] sm:$0xff]
      %v2958 = vpack.c.bf16 %v2935, %v2934
      %v2959 = vpack.c.bf16 %v2937, %v2936
      %v2960 = vpack.c.bf16 %v2939, %v2938
      %v2961 = vpack.c.bf16 %v2941, %v2940
      %v2962 = vpack.c.bf16 %v2943, %v2942
      %v2963 = vpack.c.bf16 %v2945, %v2944
      %v2964 = vpack.c.bf16 %v2947, %v2946
      %v2965 = vpack.c.bf16 %v2949, %v2948
      %v2966 = vpack.c.bf16 %v2951, %v2950
      %v2967 = vpack.c.bf16 %v2953, %v2952
      %v2968 = vpack.c.bf16 %v2955, %v2954
      %v2969 = vpack.c.bf16 %v2957, %v2956
      %s2970 = scalar_lea.vmem %s3, 48
      %v2971 = vld [vmem:[%s2970] sm:$0xf]
      %v2972 = vld [vmem:[%s2970 + $0x4] sm:$0xf]
      %v2973 = vld [vmem:[%s2970 + $0x8] sm:$0xf]
      %v2974 = vld [vmem:[%s2970 + $0xc] sm:$0xf]
      %v2979 = vunpack.c.l.b16 %v2971
      %v2980 = vunpack.c.l.b16 %v2972
      %v2981 = vunpack.c.l.b16 %v2973
      %v2982 = vunpack.c.l.b16 %v2974
      %v2983 = vpack.c.b16 %v2980, %v2979
      %v2984 = vpack.c.b16 %v2982, %v2981
      %v2988 = vsel %vm2260, %v2958, 0
      %v2991 = vsel %vm2260, %v2959, 0
      %v2994 = vsel %vm2260, %v2960, 0
      %v2997 = vsel %vm2260, %v2961, 0
      %v3000 = vsel %vm2260, %v2962, 0
      %v3003 = vsel %vm2260, %v2963, 0
      %v3006 = vsel %vm2260, %v2964, 0
      %v3009 = vsel %vm2260, %v2965, 0
      %v3012 = vsel %vm2260, %v2966, 0
      %v3015 = vsel %vm2260, %v2967, 0
      %v3018 = vsel %vm2260, %v2968, 0
      %v3021 = vsel %vm2260, %v2969, 0
      %3023 = vmatpush.bf16.msra.mxu0 0
      %3024 = vmatpush.bf16.msra.mxu0 0
      %3025 = vmatpush.bf16.msra.mxu0 0
      %3026 = vmatpush.bf16.msra.mxu0 0
      %3027 = vmatpush.bf16.msra.mxu0 0
      %3028 = vmatpush.bf16.msra.mxu0 0
      %3029 = vmatpush.bf16.msra.mxu0 %v2984
      %3030 = vmatpush.bf16.msra.mxu0 %v2983
      %3031 = vmatmul.bf16.gmra.mxu0 %v2988
      %v3032 = vpop.f32.mrf.mxu0
      %v3033 = vadd.f32 0.0, %v3032
      %v3034 = vpop.f32.mrf.mxu0
      %v3035 = vadd.f32 0.0, %v3034
      %3036 = vmatmul.bf16.gmra.mxu0 %v2991
      %v3037 = vpop.f32.mrf.mxu0
      %v3038 = vadd.f32 0.0, %v3037
      %v3039 = vpop.f32.mrf.mxu0
      %v3040 = vadd.f32 0.0, %v3039
      %3041 = vmatmul.bf16.gmra.mxu0 %v2994
      %v3042 = vpop.f32.mrf.mxu0
      %v3043 = vadd.f32 0.0, %v3042
      %v3044 = vpop.f32.mrf.mxu0
      %v3045 = vadd.f32 0.0, %v3044
      %3046 = vmatmul.bf16.gmra.mxu0 %v2997
      %v3047 = vpop.f32.mrf.mxu0
      %v3048 = vadd.f32 0.0, %v3047
      %v3049 = vpop.f32.mrf.mxu0
      %v3050 = vadd.f32 0.0, %v3049
      %3051 = vmatmul.bf16.gmra.mxu0 %v3000
      %v3052 = vpop.f32.mrf.mxu0
      %v3053 = vadd.f32 0.0, %v3052
      %v3054 = vpop.f32.mrf.mxu0
      %v3055 = vadd.f32 0.0, %v3054
      %3056 = vmatmul.bf16.gmra.mxu0 %v3003
      %v3057 = vpop.f32.mrf.mxu0
      %v3058 = vadd.f32 0.0, %v3057
      %v3059 = vpop.f32.mrf.mxu0
      %v3060 = vadd.f32 0.0, %v3059
      %3061 = vmatmul.bf16.gmra.mxu0 %v3006
      %v3062 = vpop.f32.mrf.mxu0
      %v3063 = vadd.f32 0.0, %v3062
      %v3064 = vpop.f32.mrf.mxu0
      %v3065 = vadd.f32 0.0, %v3064
      %3066 = vmatmul.bf16.gmra.mxu0 %v3009
      %v3067 = vpop.f32.mrf.mxu0
      %v3068 = vadd.f32 0.0, %v3067
      %v3069 = vpop.f32.mrf.mxu0
      %v3070 = vadd.f32 0.0, %v3069
      %3071 = vmatmul.bf16.gmra.mxu0 %v3012
      %v3072 = vpop.f32.mrf.mxu0
      %v3073 = vadd.f32 0.0, %v3072
      %v3074 = vpop.f32.mrf.mxu0
      %v3075 = vadd.f32 0.0, %v3074
      %3076 = vmatmul.bf16.gmra.mxu0 %v3015
      %v3077 = vpop.f32.mrf.mxu0
      %v3078 = vadd.f32 0.0, %v3077
      %v3079 = vpop.f32.mrf.mxu0
      %v3080 = vadd.f32 0.0, %v3079
      %3081 = vmatmul.bf16.gmra.mxu0 %v3018
      %v3082 = vpop.f32.mrf.mxu0
      %v3083 = vadd.f32 0.0, %v3082
      %v3084 = vpop.f32.mrf.mxu0
      %v3085 = vadd.f32 0.0, %v3084
      %3086 = vmatmul.bf16.gmra.mxu0 %v3021
      %v3087 = vpop.f32.mrf.mxu0
      %v3088 = vadd.f32 0.0, %v3087
      %v3089 = vpop.f32.mrf.mxu0
      %v3090 = vadd.f32 0.0, %v3089
      %3091 = vdwg.mxu0
      %v3092 = vadd.f32 %v2910, %v3033
      %v3093 = vadd.f32 %v2911, %v3035
      %v3094 = vadd.f32 %v2912, %v3038
      %v3095 = vadd.f32 %v2913, %v3040
      %v3096 = vadd.f32 %v2914, %v3043
      %v3097 = vadd.f32 %v2915, %v3045
      %v3098 = vadd.f32 %v2916, %v3048
      %v3099 = vadd.f32 %v2917, %v3050
      %v3100 = vadd.f32 %v2918, %v3053
      %v3101 = vadd.f32 %v2919, %v3055
      %v3102 = vadd.f32 %v2920, %v3058
      %v3103 = vadd.f32 %v2921, %v3060
      %v3104 = vadd.f32 %v2922, %v3063
      %v3105 = vadd.f32 %v2923, %v3065
      %v3106 = vadd.f32 %v2924, %v3068
      %v3107 = vadd.f32 %v2925, %v3070
      %v3108 = vadd.f32 %v2926, %v3073
      %v3109 = vadd.f32 %v2927, %v3075
      %v3110 = vadd.f32 %v2928, %v3078
      %v3111 = vadd.f32 %v2929, %v3080
      %v3112 = vadd.f32 %v2930, %v3083
      %v3113 = vadd.f32 %v2931, %v3085
      %v3114 = vadd.f32 %v2932, %v3088
      %v3115 = vadd.f32 %v2933, %v3090
      %v3116 = vld [vmem:[%s4] sm:$0x1]
      %v3118 = vperm.slane %v3116, 0
      %v3120 = vadd.f32 %v3092, %v3118
      %v3121 = vadd.f32 %v3093, %v3118
      %v3122 = vadd.f32 %v3094, %v3118
      %v3123 = vadd.f32 %v3095, %v3118
      %v3124 = vadd.f32 %v3096, %v3118
      %v3125 = vadd.f32 %v3097, %v3118
      %v3126 = vadd.f32 %v3098, %v3118
      %v3127 = vadd.f32 %v3099, %v3118
      %v3128 = vadd.f32 %v3100, %v3118
      %v3129 = vadd.f32 %v3101, %v3118
      %v3130 = vadd.f32 %v3102, %v3118
      %v3131 = vadd.f32 %v3103, %v3118
      %v3132 = vadd.f32 %v3104, %v3118
      %v3133 = vadd.f32 %v3105, %v3118
      %v3134 = vadd.f32 %v3106, %v3118
      %v3135 = vadd.f32 %v3107, %v3118
      %v3136 = vadd.f32 %v3108, %v3118
      %v3137 = vadd.f32 %v3109, %v3118
      %v3138 = vadd.f32 %v3110, %v3118
      %v3139 = vadd.f32 %v3111, %v3118
      %v3140 = vadd.f32 %v3112, %v3118
      %v3141 = vadd.f32 %v3113, %v3118
      %v3142 = vadd.f32 %v3114, %v3118
      %v3143 = vadd.f32 %v3115, %v3118
      %v3144 = vmax.f32 %v3120, 0.0
      %v3145 = vmax.f32 %v3121, 0.0
      %v3146 = vmax.f32 %v3122, 0.0
      %v3147 = vmax.f32 %v3123, 0.0
      %v3148 = vmax.f32 %v3124, 0.0
      %v3149 = vmax.f32 %v3125, 0.0
      %v3150 = vmax.f32 %v3126, 0.0
      %v3151 = vmax.f32 %v3127, 0.0
      %v3152 = vmax.f32 %v3128, 0.0
      %v3153 = vmax.f32 %v3129, 0.0
      %v3154 = vmax.f32 %v3130, 0.0
      %v3155 = vmax.f32 %v3131, 0.0
      %v3156 = vmax.f32 %v3132, 0.0
      %v3157 = vmax.f32 %v3133, 0.0
      %v3158 = vmax.f32 %v3134, 0.0
      %v3159 = vmax.f32 %v3135, 0.0
      %v3160 = vmax.f32 %v3136, 0.0
      %v3161 = vmax.f32 %v3137, 0.0
      %v3162 = vmax.f32 %v3138, 0.0
      %v3163 = vmax.f32 %v3139, 0.0
      %v3164 = vmax.f32 %v3140, 0.0
      %v3165 = vmax.f32 %v3141, 0.0
      %v3166 = vmax.f32 %v3142, 0.0
      %v3167 = vmax.f32 %v3143, 0.0
      %v3168 = vmax.f32 %v3144, %v3146
      %v3169 = vmax.f32 %v3145, %v3147
      %v3170 = vmax.f32 %v3148, %v3150
      %v3171 = vmax.f32 %v3149, %v3151
      %v3172 = vmax.f32 %v3152, %v3154
      %v3173 = vmax.f32 %v3153, %v3155
      %v3174 = vmax.f32 %v3156, %v3158
      %v3175 = vmax.f32 %v3157, %v3159
      %v3176 = vmax.f32 %v3160, %v3162
      %v3177 = vmax.f32 %v3161, %v3163
      %v3178 = vmax.f32 %v3164, %v3166
      %v3179 = vmax.f32 %v3165, %v3167
      %vm3180 = vcmask 523264
      %3181 = vst.msk [vmem:[#allocation6] sm:$0xff] %vm3180, %v3168
      %3182 = vst.msk [vmem:[#allocation6 + $0x8] sm:$0xff] %vm3180, %v3169
      %3183 = vst.msk [vmem:[#allocation6 + $0x10] sm:$0xff] %vm3180, %v3170
      %3184 = vst.msk [vmem:[#allocation6 + $0x18] sm:$0xff] %vm3180, %v3171
      %3185 = vst.msk [vmem:[#allocation6 + $0x20] sm:$0xff] %vm3180, %v3172
      %3186 = vst.msk [vmem:[#allocation6 + $0x28] sm:$0xff] %vm3180, %v3173
      %3187 = vst.msk [vmem:[#allocation6 + $0x30] sm:$0xff] %vm3180, %v3174
      %3188 = vst.msk [vmem:[#allocation6 + $0x38] sm:$0xff] %vm3180, %v3175
      %3189 = vst.msk [vmem:[#allocation6 + $0x40] sm:$0xff] %vm3180, %v3176
      %3190 = vst.msk [vmem:[#allocation6 + $0x48] sm:$0xff] %vm3180, %v3177
      %3191 = vst.msk [vmem:[#allocation6 + $0x50] sm:$0xff] %vm3180, %v3178
      %3192 = vst.msk [vmem:[#allocation6 + $0x58] sm:$0xff] %vm3180, %v3179
      %v3193 = vld [vmem:[#allocation6] ss:$2 sm:$0x3f]
      %s3194 = scalar_lea.vmem [#allocation6], 16
      %v3195 = vld [vmem:[%s3194] ss:$2 sm:$0x3f]
      %s3196 = scalar_lea.vmem [#allocation6], 32
      %v3197 = vld [vmem:[%s3196] ss:$2 sm:$0x3f]
      %s3198 = scalar_lea.vmem [#allocation6], 48
      %v3199 = vld [vmem:[%s3198] ss:$2 sm:$0x3f]
      %s3200 = scalar_lea.vmem [#allocation6], 64
      %v3201 = vld [vmem:[%s3200] ss:$2 sm:$0x3f]
      %s3202 = scalar_lea.vmem [#allocation6], 80
      %v3203 = vld [vmem:[%s3202] ss:$2 sm:$0x3f]
      %s3204 = scalar_lea.vmem [#allocation6], 1
      %v3205 = vld [vmem:[%s3204] ss:$2 sm:$0x3f]
      %s3206 = scalar_lea.vmem [#allocation6], 17
      %v3207 = vld [vmem:[%s3206] ss:$2 sm:$0x3f]
      %s3208 = scalar_lea.vmem [#allocation6], 33
      %v3209 = vld [vmem:[%s3208] ss:$2 sm:$0x3f]
      %s3210 = scalar_lea.vmem [#allocation6], 49
      %v3211 = vld [vmem:[%s3210] ss:$2 sm:$0x3f]
      %s3212 = scalar_lea.vmem [#allocation6], 65
      %v3213 = vld [vmem:[%s3212] ss:$2 sm:$0x3f]
      %s3214 = scalar_lea.vmem [#allocation6], 81
      %v3215 = vld [vmem:[%s3214] ss:$2 sm:$0x3f]
      %v3216 = vmax.f32 %v3193, %v3205
      %v3217 = vmax.f32 %v3195, %v3207
      %v3218 = vmax.f32 %v3197, %v3209
      %v3219 = vmax.f32 %v3199, %v3211
      %v3220 = vmax.f32 %v3201, %v3213
      %v3221 = vmax.f32 %v3203, %v3215
      %3222 = vst.msk [vmem:[#allocation4] sm:$0xff] %vm3180, 0.0
      %vm3223 = vcmask 517120
      %3224 = vst.msk [vmem:[#allocation4 + $0x8] sm:$0x3] %vm3223, 0.0
      %3225 = vst.msk [vmem:[#allocation4 + $0x10] sm:$0xff] %vm3180, 0.0
      %3226 = vst.msk [vmem:[#allocation4 + $0x18] sm:$0x3] %vm3223, 0.0
      %3227 = vst.msk [vmem:[#allocation4 + $0x20] sm:$0xff] %vm3180, 0.0
      %3228 = vst.msk [vmem:[#allocation4 + $0x28] sm:$0x3] %vm3223, 0.0
      %3229 = vst.msk [vmem:[#allocation4 + $0x30] sm:$0xff] %vm3180, 0.0
      %3230 = vst.msk [vmem:[#allocation4 + $0x38] sm:$0x3] %vm3223, 0.0
      %3231 = vst.msk [vmem:[#allocation4 + $0x40] sm:$0xff] %vm3180, 0.0
      %3232 = vst.msk [vmem:[#allocation4 + $0x48] sm:$0x3] %vm3223, 0.0
      %3233 = vst.msk [vmem:[#allocation4 + $0x50] sm:$0xff] %vm3180, 0.0
      %3234 = vst.msk [vmem:[#allocation4 + $0x58] sm:$0x3] %vm3223, 0.0
      %3235 = vst.msk [vmem:[#allocation4 + $0x60] sm:$0xff] %vm3180, 0.0
      %3236 = vst.msk [vmem:[#allocation4 + $0x68] sm:$0x3] %vm3223, 0.0
      %3237 = vst.msk [vmem:[#allocation4 + $0x70] sm:$0xff] %vm3180, 0.0
      %3238 = vst.msk [vmem:[#allocation4 + $0x78] sm:$0x3] %vm3223, 0.0
      %3239 = vst.msk [vmem:[#allocation4 + $0x80] sm:$0xff] %vm3180, 0.0
      %3240 = vst.msk [vmem:[#allocation4 + $0x88] sm:$0x3] %vm3223, 0.0
      %3241 = vst.msk [vmem:[#allocation4 + $0x90] sm:$0xff] %vm3180, 0.0
      %3242 = vst.msk [vmem:[#allocation4 + $0x98] sm:$0x3] %vm3223, 0.0
      %s3243 = scalar_lea.vmem [#allocation4], 32
      %vm3244 = vcmask 521216
      %3245 = vst.msk [vmem:[%s3243 + $0x2] sm:$0x3f] %vm3244, %v3216
      %3246 = vst.msk [vmem:[%s3243 + $0x12] sm:$0x3f] %vm3244, %v3217
      %3247 = vst.msk [vmem:[%s3243 + $0x22] sm:$0x3f] %vm3244, %v3218
      %3248 = vst.msk [vmem:[%s3243 + $0x32] sm:$0x3f] %vm3244, %v3219
      %3249 = vst.msk [vmem:[%s3243 + $0x42] sm:$0x3f] %vm3244, %v3220
      %3250 = vst.msk [vmem:[%s3243 + $0x52] sm:$0x3f] %vm3244, %v3221
      %v3251 = vld [vmem:[#allocation4] sm:$0xff]
      %v3252 = vld [vmem:[#allocation4 + $0x10] sm:$0xff]
      %v3253 = vld [vmem:[#allocation4 + $0x20] sm:$0xff]
      %v3254 = vld [vmem:[#allocation4 + $0x30] sm:$0xff]
      %v3255 = vld [vmem:[#allocation4 + $0x40] sm:$0xff]
      %v3256 = vld [vmem:[#allocation4 + $0x50] sm:$0xff]
      %v3257 = vld [vmem:[#allocation4 + $0x60] sm:$0xff]
      %v3258 = vld [vmem:[#allocation4 + $0x70] sm:$0xff]
      %v3259 = vpack.c.bf16 %v3252, %v3251
      %v3260 = vpack.c.bf16 %v3254, %v3253
      %v3261 = vpack.c.bf16 %v3256, %v3255
      %v3262 = vpack.c.bf16 %v3258, %v3257
      %v3263 = vld [vmem:[%s5] sm:$0xf]
      %v3264 = vld [vmem:[%s5 + $0x4] sm:$0xf]
      %v3265 = vld [vmem:[%s5 + $0x8] sm:$0xf]
      %v3266 = vld [vmem:[%s5 + $0xc] sm:$0xf]
      %v3267 = vld [vmem:[%s5 + $0x10] sm:$0xf]
      %v3268 = vld [vmem:[%s5 + $0x14] sm:$0xf]
      %v3269 = vld [vmem:[%s5 + $0x18] sm:$0xf]
      %v3270 = vld [vmem:[%s5 + $0x1c] sm:$0xf]
      %v3271 = vld [vmem:[#allocation4 + $0x1] sm:$0xff]
      %v3272 = vld [vmem:[#allocation4 + $0x11] sm:$0xff]
      %v3273 = vld [vmem:[#allocation4 + $0x21] sm:$0xff]
      %v3274 = vld [vmem:[#allocation4 + $0x31] sm:$0xff]
      %v3275 = vld [vmem:[#allocation4 + $0x41] sm:$0xff]
      %v3276 = vld [vmem:[#allocation4 + $0x51] sm:$0xff]
      %v3277 = vld [vmem:[#allocation4 + $0x61] sm:$0xff]
      %v3278 = vld [vmem:[#allocation4 + $0x71] sm:$0xff]
      %v3279 = vpack.c.bf16 %v3272, %v3271
      %v3280 = vpack.c.bf16 %v3274, %v3273
      %v3281 = vpack.c.bf16 %v3276, %v3275
      %v3282 = vpack.c.bf16 %v3278, %v3277
      %s3283 = scalar_lea.vmem %s5, 32
      %v3284 = vld [vmem:[%s3283] sm:$0xf]
      %v3285 = vld [vmem:[%s3283 + $0x4] sm:$0xf]
      %v3286 = vld [vmem:[%s3283 + $0x8] sm:$0xf]
      %v3287 = vld [vmem:[%s3283 + $0xc] sm:$0xf]
      %v3288 = vld [vmem:[%s3283 + $0x10] sm:$0xf]
      %v3289 = vld [vmem:[%s3283 + $0x14] sm:$0xf]
      %v3290 = vld [vmem:[%s3283 + $0x18] sm:$0xf]
      %v3291 = vld [vmem:[%s3283 + $0x1c] sm:$0xf]
      %v3300 = vunpack.c.l.b16 %v3284
      %v3301 = vunpack.c.l.b16 %v3285
      %v3302 = vunpack.c.l.b16 %v3286
      %v3303 = vunpack.c.l.b16 %v3287
      %v3304 = vunpack.c.l.b16 %v3288
      %v3305 = vunpack.c.l.b16 %v3289
      %v3306 = vunpack.c.l.b16 %v3290
      %v3307 = vunpack.c.l.b16 %v3291
      %v3308 = vpack.c.b16 %v3301, %v3300
      %v3309 = vpack.c.b16 %v3303, %v3302
      %v3310 = vpack.c.b16 %v3305, %v3304
      %v3311 = vpack.c.b16 %v3307, %v3306
      %v3317 = vsel %vm3180, %v3279, 0
      %v3320 = vsel %vm3180, %v3280, 0
      %v3323 = vsel %vm3180, %v3281, 0
      %v3326 = vsel %vm3180, %v3282, 0
      %3328 = vmatpush.bf16.msra.mxu0 0
      %3329 = vmatpush.bf16.msra.mxu0 0
      %3330 = vmatpush.bf16.msra.mxu0 0
      %3331 = vmatpush.bf16.msra.mxu0 0
      %3332 = vmatpush.bf16.msra.mxu0 %v3311
      %3333 = vmatpush.bf16.msra.mxu0 %v3310
      %3334 = vmatpush.bf16.msra.mxu0 %v3309
      %3335 = vmatpush.bf16.msra.mxu0 %v3308
      %3336 = vmatmul.bf16.gmra.mxu0 %v3317
      %v3337 = vpop.f32.mrf.mxu0
      %v3338 = vadd.f32 0.0, %v3337
      %v3339 = vpop.f32.mrf.mxu0
      %v3340 = vadd.f32 0.0, %v3339
      %3341 = vmatmul.bf16.gmra.mxu0 %v3320
      %v3342 = vpop.f32.mrf.mxu0
      %v3343 = vadd.f32 0.0, %v3342
      %v3344 = vpop.f32.mrf.mxu0
      %v3345 = vadd.f32 0.0, %v3344
      %3346 = vmatmul.bf16.gmra.mxu0 %v3323
      %v3347 = vpop.f32.mrf.mxu0
      %v3348 = vadd.f32 0.0, %v3347
      %v3349 = vpop.f32.mrf.mxu0
      %v3350 = vadd.f32 0.0, %v3349
      %3351 = vmatmul.bf16.gmra.mxu0 %v3326
      %v3352 = vpop.f32.mrf.mxu0
      %v3353 = vadd.f32 0.0, %v3352
      %v3354 = vpop.f32.mrf.mxu0
      %v3355 = vadd.f32 0.0, %v3354
      %3356 = vdwg.mxu0
      %v3365 = vunpack.c.l.b16 %v3263
      %v3366 = vunpack.c.l.b16 %v3264
      %v3367 = vunpack.c.l.b16 %v3265
      %v3368 = vunpack.c.l.b16 %v3266
      %v3369 = vunpack.c.l.b16 %v3267
      %v3370 = vunpack.c.l.b16 %v3268
      %v3371 = vunpack.c.l.b16 %v3269
      %v3372 = vunpack.c.l.b16 %v3270
      %v3373 = vpack.c.b16 %v3366, %v3365
      %v3374 = vpack.c.b16 %v3368, %v3367
      %v3375 = vpack.c.b16 %v3370, %v3369
      %v3376 = vpack.c.b16 %v3372, %v3371
      %v3382 = vsel %vm3180, %v3259, 0
      %v3385 = vsel %vm3180, %v3260, 0
      %v3388 = vsel %vm3180, %v3261, 0
      %v3391 = vsel %vm3180, %v3262, 0
      %3393 = vmatpush.bf16.msra.mxu0 0
      %3394 = vmatpush.bf16.msra.mxu0 0
      %3395 = vmatpush.bf16.msra.mxu0 0
      %3396 = vmatpush.bf16.msra.mxu0 0
      %3397 = vmatpush.bf16.msra.mxu0 %v3376
      %3398 = vmatpush.bf16.msra.mxu0 %v3375
      %3399 = vmatpush.bf16.msra.mxu0 %v3374
      %3400 = vmatpush.bf16.msra.mxu0 %v3373
      %3401 = vmatmul.bf16.gmra.mxu0 %v3382
      %v3402 = vpop.f32.mrf.mxu0
      %v3403 = vadd.f32 %v3338, %v3402
      %v3404 = vpop.f32.mrf.mxu0
      %v3405 = vadd.f32 %v3340, %v3404
      %3406 = vmatmul.bf16.gmra.mxu0 %v3385
      %v3407 = vpop.f32.mrf.mxu0
      %v3408 = vadd.f32 %v3343, %v3407
      %v3409 = vpop.f32.mrf.mxu0
      %v3410 = vadd.f32 %v3345, %v3409
      %3411 = vmatmul.bf16.gmra.mxu0 %v3388
      %v3412 = vpop.f32.mrf.mxu0
      %v3413 = vadd.f32 %v3348, %v3412
      %v3414 = vpop.f32.mrf.mxu0
      %v3415 = vadd.f32 %v3350, %v3414
      %3416 = vmatmul.bf16.gmra.mxu0 %v3391
      %v3417 = vpop.f32.mrf.mxu0
      %v3418 = vadd.f32 %v3353, %v3417
      %v3419 = vpop.f32.mrf.mxu0
      %v3420 = vadd.f32 %v3355, %v3419
      %3421 = vdwg.mxu0
      %s3422 = scalar_lea.vmem [#allocation4], 16
      %v3423 = vld [vmem:[%s3422] sm:$0xff]
      %v3424 = vld [vmem:[%s3422 + $0x10] sm:$0xff]
      %v3425 = vld [vmem:[%s3422 + $0x20] sm:$0xff]
      %v3426 = vld [vmem:[%s3422 + $0x30] sm:$0xff]
      %v3427 = vld [vmem:[%s3422 + $0x40] sm:$0xff]
      %v3428 = vld [vmem:[%s3422 + $0x50] sm:$0xff]
      %v3429 = vld [vmem:[%s3422 + $0x60] sm:$0xff]
      %v3430 = vld [vmem:[%s3422 + $0x70] sm:$0xff]
      %v3431 = vpack.c.bf16 %v3424, %v3423
      %v3432 = vpack.c.bf16 %v3426, %v3425
      %v3433 = vpack.c.bf16 %v3428, %v3427
      %v3434 = vpack.c.bf16 %v3430, %v3429
      %s3435 = scalar_lea.vmem %s5, 64
      %v3436 = vld [vmem:[%s3435] sm:$0xf]
      %v3437 = vld [vmem:[%s3435 + $0x4] sm:$0xf]
      %v3438 = vld [vmem:[%s3435 + $0x8] sm:$0xf]
      %v3439 = vld [vmem:[%s3435 + $0xc] sm:$0xf]
      %v3440 = vld [vmem:[%s3435 + $0x10] sm:$0xf]
      %v3441 = vld [vmem:[%s3435 + $0x14] sm:$0xf]
      %v3442 = vld [vmem:[%s3435 + $0x18] sm:$0xf]
      %v3443 = vld [vmem:[%s3435 + $0x1c] sm:$0xf]
      %v3452 = vunpack.c.l.b16 %v3436
      %v3453 = vunpack.c.l.b16 %v3437
      %v3454 = vunpack.c.l.b16 %v3438
      %v3455 = vunpack.c.l.b16 %v3439
      %v3456 = vunpack.c.l.b16 %v3440
      %v3457 = vunpack.c.l.b16 %v3441
      %v3458 = vunpack.c.l.b16 %v3442
      %v3459 = vunpack.c.l.b16 %v3443
      %v3460 = vpack.c.b16 %v3453, %v3452
      %v3461 = vpack.c.b16 %v3455, %v3454
      %v3462 = vpack.c.b16 %v3457, %v3456
      %v3463 = vpack.c.b16 %v3459, %v3458
      %v3469 = vsel %vm3180, %v3431, 0
      %v3472 = vsel %vm3180, %v3432, 0
      %v3475 = vsel %vm3180, %v3433, 0
      %v3478 = vsel %vm3180, %v3434, 0
      %3480 = vmatpush.bf16.msra.mxu0 0
      %3481 = vmatpush.bf16.msra.mxu0 0
      %3482 = vmatpush.bf16.msra.mxu0 0
      %3483 = vmatpush.bf16.msra.mxu0 0
      %3484 = vmatpush.bf16.msra.mxu0 %v3463
      %3485 = vmatpush.bf16.msra.mxu0 %v3462
      %3486 = vmatpush.bf16.msra.mxu0 %v3461
      %3487 = vmatpush.bf16.msra.mxu0 %v3460
      %3488 = vmatmul.bf16.gmra.mxu0 %v3469
      %v3489 = vpop.f32.mrf.mxu0
      %v3490 = vadd.f32 0.0, %v3489
      %v3491 = vpop.f32.mrf.mxu0
      %v3492 = vadd.f32 0.0, %v3491
      %3493 = vmatmul.bf16.gmra.mxu0 %v3472
      %v3494 = vpop.f32.mrf.mxu0
      %v3495 = vadd.f32 0.0, %v3494
      %v3496 = vpop.f32.mrf.mxu0
      %v3497 = vadd.f32 0.0, %v3496
      %3498 = vmatmul.bf16.gmra.mxu0 %v3475
      %v3499 = vpop.f32.mrf.mxu0
      %v3500 = vadd.f32 0.0, %v3499
      %v3501 = vpop.f32.mrf.mxu0
      %v3502 = vadd.f32 0.0, %v3501
      %3503 = vmatmul.bf16.gmra.mxu0 %v3478
      %v3504 = vpop.f32.mrf.mxu0
      %v3505 = vadd.f32 0.0, %v3504
      %v3506 = vpop.f32.mrf.mxu0
      %v3507 = vadd.f32 0.0, %v3506
      %3508 = vdwg.mxu0
      %v3509 = vadd.f32 %v3403, %v3490
      %v3510 = vadd.f32 %v3405, %v3492
      %v3511 = vadd.f32 %v3408, %v3495
      %v3512 = vadd.f32 %v3410, %v3497
      %v3513 = vadd.f32 %v3413, %v3500
      %v3514 = vadd.f32 %v3415, %v3502
      %v3515 = vadd.f32 %v3418, %v3505
      %v3516 = vadd.f32 %v3420, %v3507
      %v3517 = vld [vmem:[%s3422 + $0x1] sm:$0xff]
      %v3518 = vld [vmem:[%s3422 + $0x11] sm:$0xff]
      %v3519 = vld [vmem:[%s3422 + $0x21] sm:$0xff]
      %v3520 = vld [vmem:[%s3422 + $0x31] sm:$0xff]
      %v3521 = vld [vmem:[%s3422 + $0x41] sm:$0xff]
      %v3522 = vld [vmem:[%s3422 + $0x51] sm:$0xff]
      %v3523 = vld [vmem:[%s3422 + $0x61] sm:$0xff]
      %v3524 = vld [vmem:[%s3422 + $0x71] sm:$0xff]
      %v3525 = vpack.c.bf16 %v3518, %v3517
      %v3526 = vpack.c.bf16 %v3520, %v3519
      %v3527 = vpack.c.bf16 %v3522, %v3521
      %v3528 = vpack.c.bf16 %v3524, %v3523
      %s3529 = scalar_lea.vmem %s5, 96
      %v3530 = vld [vmem:[%s3529] sm:$0xf]
      %v3531 = vld [vmem:[%s3529 + $0x4] sm:$0xf]
      %v3532 = vld [vmem:[%s3529 + $0x8] sm:$0xf]
      %v3533 = vld [vmem:[%s3529 + $0xc] sm:$0xf]
      %v3534 = vld [vmem:[%s3529 + $0x10] sm:$0xf]
      %v3535 = vld [vmem:[%s3529 + $0x14] sm:$0xf]
      %v3536 = vld [vmem:[%s3529 + $0x18] sm:$0xf]
      %v3537 = vld [vmem:[%s3529 + $0x1c] sm:$0xf]
      %v3546 = vunpack.c.l.b16 %v3530
      %v3547 = vunpack.c.l.b16 %v3531
      %v3548 = vunpack.c.l.b16 %v3532
      %v3549 = vunpack.c.l.b16 %v3533
      %v3550 = vunpack.c.l.b16 %v3534
      %v3551 = vunpack.c.l.b16 %v3535
      %v3552 = vunpack.c.l.b16 %v3536
      %v3553 = vunpack.c.l.b16 %v3537
      %v3554 = vpack.c.b16 %v3547, %v3546
      %v3555 = vpack.c.b16 %v3549, %v3548
      %v3556 = vpack.c.b16 %v3551, %v3550
      %v3557 = vpack.c.b16 %v3553, %v3552
      %v3563 = vsel %vm3180, %v3525, 0
      %v3566 = vsel %vm3180, %v3526, 0
      %v3569 = vsel %vm3180, %v3527, 0
      %v3572 = vsel %vm3180, %v3528, 0
      %3574 = vmatpush.bf16.msra.mxu0 0
      %3575 = vmatpush.bf16.msra.mxu0 0
      %3576 = vmatpush.bf16.msra.mxu0 0
      %3577 = vmatpush.bf16.msra.mxu0 0
      %3578 = vmatpush.bf16.msra.mxu0 %v3557
      %3579 = vmatpush.bf16.msra.mxu0 %v3556
      %3580 = vmatpush.bf16.msra.mxu0 %v3555
      %3581 = vmatpush.bf16.msra.mxu0 %v3554
      %3582 = vmatmul.bf16.gmra.mxu0 %v3563
      %v3583 = vpop.f32.mrf.mxu0
      %v3584 = vadd.f32 0.0, %v3583
      %v3585 = vpop.f32.mrf.mxu0
      %v3586 = vadd.f32 0.0, %v3585
      %3587 = vmatmul.bf16.gmra.mxu0 %v3566
      %v3588 = vpop.f32.mrf.mxu0
      %v3589 = vadd.f32 0.0, %v3588
      %v3590 = vpop.f32.mrf.mxu0
      %v3591 = vadd.f32 0.0, %v3590
      %3592 = vmatmul.bf16.gmra.mxu0 %v3569
      %v3593 = vpop.f32.mrf.mxu0
      %v3594 = vadd.f32 0.0, %v3593
      %v3595 = vpop.f32.mrf.mxu0
      %v3596 = vadd.f32 0.0, %v3595
      %3597 = vmatmul.bf16.gmra.mxu0 %v3572
      %v3598 = vpop.f32.mrf.mxu0
      %v3599 = vadd.f32 0.0, %v3598
      %v3600 = vpop.f32.mrf.mxu0
      %v3601 = vadd.f32 0.0, %v3600
      %3602 = vdwg.mxu0
      %v3603 = vadd.f32 %v3509, %v3584
      %v3604 = vadd.f32 %v3510, %v3586
      %v3605 = vadd.f32 %v3511, %v3589
      %v3606 = vadd.f32 %v3512, %v3591
      %v3607 = vadd.f32 %v3513, %v3594
      %v3608 = vadd.f32 %v3514, %v3596
      %v3609 = vadd.f32 %v3515, %v3599
      %v3610 = vadd.f32 %v3516, %v3601
      %v3611 = vld [vmem:[%s6] sm:$0x1]
      %v3613 = vperm.slane %v3611, 0
      %v3615 = vadd.f32 %v3603, %v3613
      %v3616 = vadd.f32 %v3604, %v3613
      %v3617 = vadd.f32 %v3605, %v3613
      %v3618 = vadd.f32 %v3606, %v3613
      %v3619 = vadd.f32 %v3607, %v3613
      %v3620 = vadd.f32 %v3608, %v3613
      %v3621 = vadd.f32 %v3609, %v3613
      %v3622 = vadd.f32 %v3610, %v3613
      %v3623 = vmax.f32 %v3615, 0.0
      %v3624 = vmax.f32 %v3616, 0.0
      %v3625 = vmax.f32 %v3617, 0.0
      %v3626 = vmax.f32 %v3618, 0.0
      %v3627 = vmax.f32 %v3619, 0.0
      %v3628 = vmax.f32 %v3620, 0.0
      %v3629 = vmax.f32 %v3621, 0.0
      %v3630 = vmax.f32 %v3622, 0.0
      %v3631 = vmax.f32 %v3623, %v3624
      %v3632 = vmax.f32 %v3625, %v3626
      %v3633 = vmax.f32 %v3627, %v3628
      %v3634 = vmax.f32 %v3629, %v3630
      %vm3635 = vcmask 15360
      %3636 = vst.msk [vmem:[#allocation7] sm:$0xff] %vm3635, %v3631
      %3637 = vst.msk [vmem:[#allocation7 + $0x8] sm:$0xff] %vm3635, %v3632
      %3638 = vst.msk [vmem:[#allocation7 + $0x10] sm:$0xff] %vm3635, %v3633
      %3639 = vst.msk [vmem:[#allocation7 + $0x18] sm:$0xff] %vm3635, %v3634
      %v3640 = vld [vmem:[#allocation7] ss:$2 sm:$0xf]
      %s3641 = scalar_lea.vmem [#allocation7], 8
      %v3642 = vld [vmem:[%s3641] ss:$2 sm:$0xf]
      %s3643 = scalar_lea.vmem [#allocation7], 16
      %v3644 = vld [vmem:[%s3643] ss:$2 sm:$0xf]
      %s3645 = scalar_lea.vmem [#allocation7], 24
      %v3646 = vld [vmem:[%s3645] ss:$2 sm:$0xf]
      %s3647 = scalar_lea.vmem [#allocation7], 1
      %v3648 = vld [vmem:[%s3647] ss:$2 sm:$0xf]
      %s3649 = scalar_lea.vmem [#allocation7], 9
      %v3650 = vld [vmem:[%s3649] ss:$2 sm:$0xf]
      %s3651 = scalar_lea.vmem [#allocation7], 17
      %v3652 = vld [vmem:[%s3651] ss:$2 sm:$0xf]
      %s3653 = scalar_lea.vmem [#allocation7], 25
      %v3654 = vld [vmem:[%s3653] ss:$2 sm:$0xf]
      %v3655 = vmax.f32 %v3640, %v3648
      %v3656 = vmax.f32 %v3642, %v3650
      %v3657 = vmax.f32 %v3644, %v3652
      %v3658 = vmax.f32 %v3646, %v3654
      %vm3659 = vcmask 11264
      %3660 = vst.msk [vmem:[%s278] sm:$0xf] %vm3659, %v3655
      %3661 = vst.msk [vmem:[%s278 + $0x4] sm:$0xf] %vm3659, %v3656
      %3662 = vst.msk [vmem:[%s278 + $0x8] sm:$0xf] %vm3659, %v3657
      %3663 = vst.msk [vmem:[%s278 + $0xc] sm:$0xf] %vm3659, %v3658
      %p3664 = scmp.lt.s32.totalorder %s18, 1
      %s3665 = scalar_select %p3664, %s18, 1
      %s3666 = smul.addr %s3665, 4
      %s3667 = smul.addr %s3666, 4
      %s3668 = scalar_lea.vmem %s7, %s3667
      // Predicated region
      $region49: #{tpu_custom_call.1} parent=47 // pred_check
        %p3669 = pneg %p188
      $region50: #{tpu_custom_call.1} parent=47 // pred_check_branch
        %3671 = sbr.rel (%p3669) target = $region52
      $region51: #{tpu_custom_call.1} parent=47 // pred_region
        _
      $region52: #{tpu_custom_call.1} parent=47 // pred_fallthru
        _
    $region48: #{tpu_custom_call.1} parent=5 // pred_fallthru
      _
    %p3672 = scmp.le.s32.totalorder 2, %s13
    // Predicated region
    $region53: #{tpu_custom_call.1} parent=5 // pred_check
      %p3673 = pneg %p3672
    $region54: #{tpu_custom_call.1} parent=5 // pred_check_branch
      %3675 = sbr.rel (%p3673) target = $region56
    $region55: #{tpu_custom_call.1} parent=5 // pred_region
      %s3676 = ssub.s32 %s13, 2
      // Predicated region
      $region57: #{tpu_custom_call.1} parent=55 // pred_check
        %p3677 = pneg %p194
      $region58: #{tpu_custom_call.1} parent=55 // pred_check_branch
        %3679 = sbr.rel (%p3677) target = $region60
      $region59: #{tpu_custom_call.1} parent=55 // pred_region
        %p3680 = scmp.lt.s32.totalorder %s19, 1
        %s3681 = scalar_select %p3680, %s19, 1
        %s3682 = smul.addr %s3681, 4
        %s3683 = smul.addr %s3682, 4
        %s3684 = scalar_lea.vmem %s7, %s3683
      $region60: #{tpu_custom_call.1} parent=55 // pred_fallthru
        _
    $region56: #{tpu_custom_call.1} parent=5 // pred_fallthru
      _
  $region6: #{tpu_custom_call.1} parent=0 // loop_footer
    %s17 = sadd.s32 1, %s13
  $region7: #{tpu_custom_call.1} parent=0 // loop_footer_branch
    %12 = sbr.rel target = $region3
  $region8: #{tpu_custom_call.1} parent=0 // loop_exit
    _

</llo_original>
